<compile_context>
chip_gen: v7x
topology: tpu7x:2x2x1
jax: 0.10.0
libtpu: 0.0.40
codegen_flags: <defaults>
</compile_context>

<pallas_src>
import functools

import jax
import jax.numpy as jnp
from jax.experimental import pallas as pl
from jax.experimental.pallas import tpu as pltpu


def _round_up(x, m):
    return ((x + m - 1) // m) * m


def _choose_tile(N, num_tokens, vocab, E, w_itemsize):
    """Pick TILE_N: multiple of 8, bounded by a conservative per-step VMEM budget,
    chosen from a candidate set that minimizes N-padding waste (padded rows are
    real wasted compute since the kernel is compute-bound)."""
    n8 = _round_up(max(N, 1), 8)
    # Per-row VMEM cost (bytes): double-buffered idx tile + double-buffered output slab
    # + in-kernel one-hot temp + one live (row, E) matmul result.
    per_row = (2 * num_tokens * 4
               + 2 * num_tokens * E * 4
               + vocab * w_itemsize
               + E * 4)
    budget = 24 * 1024 * 1024  # leaves headroom for the resident weights on v5e / v7x
    cap = min(512, max(8, (budget // per_row) // 8 * 8))
    if n8 <= cap:
        return n8
    candidates = [c for c in (512, 384, 256, 192, 128, 96, 64, 32, 16, 8) if c <= cap] or [8]
    # Minimize padded waste; on ties prefer the larger tile (better pipelining).
    return min(candidates, key=lambda c: (_round_up(N, c) - N, -c))


def _multi_embed_kernel(idx_ref, w_ref, o_ref, *, precision):
    # idx_ref: (TILE_N, num_tokens) int32       ids for this tile, one column per table
    # w_ref  : (num_tokens, vocab, E)           all embedding tables, VMEM-resident
    # o_ref  : (TILE_N, num_tokens*E)           concatenated output slab for this tile
    num_tokens, vocab, E = w_ref.shape

    idx_all = idx_ref[...]                                       # (TILE_N, num_tokens)
    # (1, vocab) iota; the compare broadcasts it over sublanes -> no (TILE_N, vocab) temp.
    iota = jax.lax.broadcasted_iota(jnp.int32, (1, vocab), 1)

    for t in range(num_tokens):                                  # num_tokens is small: static unroll
        ids = idx_all[:, t:t + 1]                                # (TILE_N, 1)
        onehot = (ids == iota).astype(w_ref.dtype)               # (TILE_N, vocab), exact 0/1
        # Exact gather as a one-hot matmul on the MXU.  Write straight into the output
        # column block so only one (TILE_N, E) result is live at a time (no concatenate,
        # no extra VMEM copy of the slab); the store stays within one lane-dense row block.
        o_ref[:, t * E:(t + 1) * E] = jnp.dot(
            onehot, w_ref[t],
            preferred_element_type=jnp.float32,
            precision=precision,
        ).astype(o_ref.dtype)


def multi_embedding(x, weights, *, compute_dtype=None):
    """x: (B, T, num_tokens) integer ids; weights: (num_tokens, vocab, E).

    Returns (B, T, num_tokens * E) in weights.dtype, matching the PyTorch module
    (float32 by default).  Pass compute_dtype=jnp.bfloat16 for the cheaper bf16 path.
    """
    B, T, num_tokens = x.shape
    nt_w, vocab, E = weights.shape
    assert nt_w == num_tokens, (nt_w, num_tokens)
    N = B * T

    if compute_dtype is not None and weights.dtype != compute_dtype:
        weights = weights.astype(compute_dtype)
    out_dtype = weights.dtype
    w_itemsize = jnp.dtype(weights.dtype).itemsize

    # Natural layout: (N, num_tokens) int32 -- pure reshape, no transpose pass.
    idx = x.reshape(N, num_tokens).astype(jnp.int32)

    tile = _choose_tile(N, num_tokens, vocab, E, w_itemsize)
    n_pad = _round_up(N, tile)
    if n_pad != N:
        idx = jnp.pad(idx, ((0, n_pad - N), (0, 0)))  # id 0 is a valid row; sliced off below

    # Explicit VMEM budget: resident weights (x2 covers the blocked fallback spec),
    # double-buffered idx/output tiles, plus in-kernel temps.  Clamped below v7x physical.
    w_bytes = num_tokens * vocab * E * w_itemsize
    est = (2 * w_bytes
           + 2 * tile * num_tokens * 4
           + 2 * tile * num_tokens * E * jnp.dtype(out_dtype).itemsize
           + tile * vocab * w_itemsize
           + tile * E * 4)
    vmem_limit = int(min(60 * 1024 * 1024, max(32 * 1024 * 1024, 1.5 * est)))

    def build(weight_spec, precision):
        kernel = functools.partial(_multi_embed_kernel, precision=precision)
        return pl.pallas_call(
            kernel,
            out_shape=jax.ShapeDtypeStruct((n_pad, num_tokens * E), out_dtype),
            grid_spec=pltpu.PrefetchScalarGridSpec(
                num_scalar_prefetch=0,
                grid=(n_pad // tile,),
                in_specs=[
                    # ids for the current N tile
                    pl.BlockSpec((tile, num_tokens), lambda i: (i, 0)),
                    # all embedding tables
                    weight_spec,
                ],
                # one lane-dense (TILE_N, num_tokens*E) slab per grid step (cat layout)
                out_specs=pl.BlockSpec((tile, num_tokens * E), lambda i: (i, 0)),
            ),
            compiler_params=pltpu.CompilerParams(
                dimension_semantics=("parallel",),
                vmem_limit_bytes=vmem_limit,
            ),
        )

    # Preferred: whole stacked weight tensor resident in VMEM, single-buffered.
    wspec_vmem = pl.BlockSpec(memory_space=pltpu.MemorySpace.VMEM)
    # Fallback (previously validated): constant block index -> fetched once, double-buffered.
    wspec_blocked = pl.BlockSpec((num_tokens, vocab, E), lambda i: (0, 0, 0))

    # Pin matmul precision for f32 weights (exact gather); bf16 one-hot x bf16 weights is
    # already exact in a single MXU pass, so no pinning needed there.
    want_precision = jax.lax.Precision.HIGHEST if weights.dtype == jnp.float32 else None
    precisions = (want_precision, None) if want_precision is not None else (None,)

    # Robustness ladder: prefer single-buffered weights + pinned precision; degrade gracefully
    # (the last combination is exactly the previously validated configuration).
    out, err = None, None
    for prec in precisions:
        for wspec in (wspec_vmem, wspec_blocked):
            try:
                out = jax.block_until_ready(build(wspec, prec)(idx, weights))
                break
            except Exception as e:  # noqa: BLE001 - fall back to the next configuration
                err = e
        if out is not None:
            break
    if out is None:
        raise err

    if n_pad != N:
        out = out[:N]
    return out.reshape(B, T, num_tokens * E)


def _reference(x, weights):
    # Pure-JAX reference mirroring the PyTorch forward (true gather + concat).
    num_tokens = weights.shape[0]
    embs = [weights[i][x[:, :, i]] for i in range(num_tokens)]
    return jnp.concatenate(embs, axis=-1)


if __name__ == "__main__":
    # Small, deterministic example shapes.
    B, T = 2, 8
    num_tokens = 4
    vocab_size = 32
    per_token_embed_size = 32

    key = jax.random.PRNGKey(0)
    k_idx, k_w = jax.random.split(key)

    # Deterministic parameter init (nn.Embedding default is N(0, 1)).
    weights = jax.random.normal(
        k_w, (num_tokens, vocab_size, per_token_embed_size), dtype=jnp.float32
    )
    x = jax.random.randint(k_idx, (B, T, num_tokens), 0, vocab_size, dtype=jnp.int32)

    out = multi_embedding(x, weights)
    out = jax.block_until_ready(out)

    ref = _reference(x, weights)
    assert out.shape == (B, T, num_tokens * per_token_embed_size), out.shape
    assert out.dtype == jnp.float32
    assert jnp.allclose(out, ref, atol=1e-5, rtol=1e-5), "mismatch vs reference"

    print("KERNEL_OK")
</pallas_src>

<mosaic_0001>
module attributes {stable_mosaic.version = 11 : i64} {
  func.func @_multi_embed_kernel(%arg0: i32, %arg1: memref<16x4xi32, #tpu.memory_space<vmem>>, %arg2: memref<4x32x32xf32, #tpu.memory_space<vmem>>, %arg3: memref<16x128xf32, #tpu.memory_space<vmem>>) attributes {dimension_semantics = [#tpu.dimension_semantics<parallel>], iteration_bounds = array<i64: 1>, scalar_prefetch = 0 : i64, scratch_operands = 0 : i64, tpu.core_type = #tpu.core_type<tc>, window_params = [{transform_indices = @transform_0, window_bounds = array<i64: 16, 4>}, {pipeline_mode = #tpu.pipeline_mode<synchronous>, transform_indices = @transform_1, window_bounds = array<i64: 4, 32, 32>}, {transform_indices = @transform_2, window_bounds = array<i64: 16, 128>}]} {
    %c0 = arith.constant 0 : index
    %c0_0 = arith.constant 0 : index
    %0 = vector.load %arg1[%c0, %c0_0] : memref<16x4xi32, #tpu.memory_space<vmem>>, vector<16x4xi32>
    %1 = tpu.iota {dimensions = array<i32: 1>} : vector<1x32xi32>
    %2 = vector.extract_strided_slice %0 {offsets = [0, 0], sizes = [16, 1], strides = [1, 1]} : vector<16x4xi32> to vector<16x1xi32>
    %3 = vector.broadcast %2 : vector<16x1xi32> to vector<16x32xi32>
    %4 = vector.broadcast %1 : vector<1x32xi32> to vector<16x32xi32>
    %5 = arith.cmpi eq, %3, %4 : vector<16x32xi32>
    %6 = arith.extui %5 : vector<16x32xi1> to vector<16x32xi32>
    %7 = arith.sitofp %6 : vector<16x32xi32> to vector<16x32xf32>
    %c0_1 = arith.constant 0 : index
    %c0_2 = arith.constant 0 : index
    %c0_3 = arith.constant 0 : index
    %8 = vector.load %arg2[%c0_1, %c0_2, %c0_3] : memref<4x32x32xf32, #tpu.memory_space<vmem>>, vector<1x32x32xf32>
    %9 = vector.shape_cast %8 : vector<1x32x32xf32> to vector<32x32xf32>
    %cst = arith.constant dense<0.000000e+00> : vector<16x32xf32>
    %10 = tpu.matmul %7, %9, %cst {dimension_numbers = #tpu.dot_dimension_numbers<[1], [0], [0], [1], [0, 0, 1, 1], [], []>, precision = #tpu.contract_precision<fp32>} : vector<16x32xf32>, vector<32x32xf32>, vector<16x32xf32> -> vector<16x32xf32>
    %c0_4 = arith.constant 0 : index
    %c0_5 = arith.constant 0 : index
    %11 = vector.load %arg3[%c0_4, %c0_5] : memref<16x128xf32, #tpu.memory_space<vmem>>, vector<16x32xf32>
    tpu.vector_store %arg3[%c0_4, %c0_5], %10 {strides = array<i32>} : memref<16x128xf32, #tpu.memory_space<vmem>>, vector<16x32xf32>,
    %12 = vector.extract_strided_slice %0 {offsets = [0, 1], sizes = [16, 1], strides = [1, 1]} : vector<16x4xi32> to vector<16x1xi32>
    %13 = vector.broadcast %12 : vector<16x1xi32> to vector<16x32xi32>
    %14 = vector.broadcast %1 : vector<1x32xi32> to vector<16x32xi32>
    %15 = arith.cmpi eq, %13, %14 : vector<16x32xi32>
    %16 = arith.extui %15 : vector<16x32xi1> to vector<16x32xi32>
    %17 = arith.sitofp %16 : vector<16x32xi32> to vector<16x32xf32>
    %c1 = arith.constant 1 : index
    %c0_6 = arith.constant 0 : index
    %c0_7 = arith.constant 0 : index
    %18 = vector.load %arg2[%c1, %c0_6, %c0_7] : memref<4x32x32xf32, #tpu.memory_space<vmem>>, vector<1x32x32xf32>
    %19 = vector.shape_cast %18 : vector<1x32x32xf32> to vector<32x32xf32>
    %cst_8 = arith.constant dense<0.000000e+00> : vector<16x32xf32>
    %20 = tpu.matmul %17, %19, %cst_8 {dimension_numbers = #tpu.dot_dimension_numbers<[1], [0], [0], [1], [0, 0, 1, 1], [], []>, precision = #tpu.contract_precision<fp32>} : vector<16x32xf32>, vector<32x32xf32>, vector<16x32xf32> -> vector<16x32xf32>
    %c0_9 = arith.constant 0 : index
    %c32 = arith.constant 32 : index
    %21 = vector.load %arg3[%c0_9, %c32] : memref<16x128xf32, #tpu.memory_space<vmem>>, vector<16x32xf32>
    tpu.vector_store %arg3[%c0_9, %c32], %20 {strides = array<i32>} : memref<16x128xf32, #tpu.memory_space<vmem>>, vector<16x32xf32>,
    %22 = vector.extract_strided_slice %0 {offsets = [0, 2], sizes = [16, 1], strides = [1, 1]} : vector<16x4xi32> to vector<16x1xi32>
    %23 = vector.broadcast %22 : vector<16x1xi32> to vector<16x32xi32>
    %24 = vector.broadcast %1 : vector<1x32xi32> to vector<16x32xi32>
    %25 = arith.cmpi eq, %23, %24 : vector<16x32xi32>
    %26 = arith.extui %25 : vector<16x32xi1> to vector<16x32xi32>
    %27 = arith.sitofp %26 : vector<16x32xi32> to vector<16x32xf32>
    %c2 = arith.constant 2 : index
    %c0_10 = arith.constant 0 : index
    %c0_11 = arith.constant 0 : index
    %28 = vector.load %arg2[%c2, %c0_10, %c0_11] : memref<4x32x32xf32, #tpu.memory_space<vmem>>, vector<1x32x32xf32>
    %29 = vector.shape_cast %28 : vector<1x32x32xf32> to vector<32x32xf32>
    %cst_12 = arith.constant dense<0.000000e+00> : vector<16x32xf32>
    %30 = tpu.matmul %27, %29, %cst_12 {dimension_numbers = #tpu.dot_dimension_numbers<[1], [0], [0], [1], [0, 0, 1, 1], [], []>, precision = #tpu.contract_precision<fp32>} : vector<16x32xf32>, vector<32x32xf32>, vector<16x32xf32> -> vector<16x32xf32>
    %c0_13 = arith.constant 0 : index
    %c64 = arith.constant 64 : index
    %31 = vector.load %arg3[%c0_13, %c64] : memref<16x128xf32, #tpu.memory_space<vmem>>, vector<16x32xf32>
    tpu.vector_store %arg3[%c0_13, %c64], %30 {strides = array<i32>} : memref<16x128xf32, #tpu.memory_space<vmem>>, vector<16x32xf32>,
    %32 = vector.extract_strided_slice %0 {offsets = [0, 3], sizes = [16, 1], strides = [1, 1]} : vector<16x4xi32> to vector<16x1xi32>
    %33 = vector.broadcast %32 : vector<16x1xi32> to vector<16x32xi32>
    %34 = vector.broadcast %1 : vector<1x32xi32> to vector<16x32xi32>
    %35 = arith.cmpi eq, %33, %34 : vector<16x32xi32>
    %36 = arith.extui %35 : vector<16x32xi1> to vector<16x32xi32>
    %37 = arith.sitofp %36 : vector<16x32xi32> to vector<16x32xf32>
    %c3 = arith.constant 3 : index
    %c0_14 = arith.constant 0 : index
    %c0_15 = arith.constant 0 : index
    %38 = vector.load %arg2[%c3, %c0_14, %c0_15] : memref<4x32x32xf32, #tpu.memory_space<vmem>>, vector<1x32x32xf32>
    %39 = vector.shape_cast %38 : vector<1x32x32xf32> to vector<32x32xf32>
    %cst_16 = arith.constant dense<0.000000e+00> : vector<16x32xf32>
    %40 = tpu.matmul %37, %39, %cst_16 {dimension_numbers = #tpu.dot_dimension_numbers<[1], [0], [0], [1], [0, 0, 1, 1], [], []>, precision = #tpu.contract_precision<fp32>} : vector<16x32xf32>, vector<32x32xf32>, vector<16x32xf32> -> vector<16x32xf32>
    %c0_17 = arith.constant 0 : index
    %c96 = arith.constant 96 : index
    %41 = vector.load %arg3[%c0_17, %c96] : memref<16x128xf32, #tpu.memory_space<vmem>>, vector<16x32xf32>
    tpu.vector_store %arg3[%c0_17, %c96], %40 {strides = array<i32>} : memref<16x128xf32, #tpu.memory_space<vmem>>, vector<16x32xf32>,
    return
  }
  func.func @transform_0(%arg0: i32) -> (i32, i32) {
    %c0_i32 = arith.constant 0 : i32
    %c0_i32_0 = arith.constant 0 : i32
    return %arg0, %c0_i32 : i32, i32
  }
  func.func @transform_1(%arg0: i32) -> (i32, i32, i32) {
    %c0_i32 = arith.constant 0 : i32
    %c0_i32_0 = arith.constant 0 : i32
    %c0_i32_1 = arith.constant 0 : i32
    %c0_i32_2 = arith.constant 0 : i32
    return %c0_i32, %c0_i32_0, %c0_i32_1 : i32, i32, i32
  }
  func.func @transform_2(%arg0: i32) -> (i32, i32) {
    %c0_i32 = arith.constant 0 : i32
    %c0_i32_0 = arith.constant 0 : i32
    return %arg0, %c0_i32 : i32, i32
  }
}

module attributes {stable_mosaic.version = 11 : i64} {
  func.func @_multi_embed_kernel(%arg0: i32, %arg1: memref<16x4xi32, #tpu.memory_space<vmem>>, %arg2: memref<4x32x32xf32, #tpu.memory_space<vmem>>, %arg3: memref<16x128xf32, #tpu.memory_space<vmem>>) attributes {dimension_semantics = [#tpu.dimension_semantics<parallel>], iteration_bounds = array<i64: 1>, scalar_prefetch = 0 : i64, scratch_operands = 0 : i64, tpu.core_type = #tpu.core_type<tc>, window_params = [{transform_indices = @transform_0, window_bounds = array<i64: 16, 4>}, {pipeline_mode = #tpu.pipeline_mode<synchronous>, transform_indices = @transform_1, window_bounds = array<i64: 4, 32, 32>}, {transform_indices = @transform_2, window_bounds = array<i64: 16, 128>}]} {
    %c0 = arith.constant 0 : index
    %c0_0 = arith.constant 0 : index
    %0 = vector.load %arg1[%c0, %c0_0] : memref<16x4xi32, #tpu.memory_space<vmem>>, vector<16x4xi32>
    %1 = tpu.iota {dimensions = array<i32: 1>} : vector<1x32xi32>
    %2 = vector.extract_strided_slice %0 {offsets = [0, 0], sizes = [16, 1], strides = [1, 1]} : vector<16x4xi32> to vector<16x1xi32>
    %3 = vector.broadcast %2 : vector<16x1xi32> to vector<16x32xi32>
    %4 = vector.broadcast %1 : vector<1x32xi32> to vector<16x32xi32>
    %5 = arith.cmpi eq, %3, %4 : vector<16x32xi32>
    %6 = arith.extui %5 : vector<16x32xi1> to vector<16x32xi32>
    %7 = arith.sitofp %6 : vector<16x32xi32> to vector<16x32xf32>
    %c0_1 = arith.constant 0 : index
    %c0_2 = arith.constant 0 : index
    %c0_3 = arith.constant 0 : index
    %8 = vector.load %arg2[%c0_1, %c0_2, %c0_3] : memref<4x32x32xf32, #tpu.memory_space<vmem>>, vector<1x32x32xf32>
    %9 = vector.shape_cast %8 : vector<1x32x32xf32> to vector<32x32xf32>
    %cst = arith.constant dense<0.000000e+00> : vector<16x32xf32>
    %10 = tpu.matmul %7, %9, %cst {dimension_numbers = #tpu.dot_dimension_numbers<[1], [0], [0], [1], [0, 0, 1, 1], [], []>, precision = #tpu.contract_precision<fp32>} : vector<16x32xf32>, vector<32x32xf32>, vector<16x32xf32> -> vector<16x32xf32>
    %c0_4 = arith.constant 0 : index
    %c0_5 = arith.constant 0 : index
    %11 = vector.load %arg3[%c0_4, %c0_5] : memref<16x128xf32, #tpu.memory_space<vmem>>, vector<16x32xf32>
    tpu.vector_store %arg3[%c0_4, %c0_5], %10 {strides = array<i32>} : memref<16x128xf32, #tpu.memory_space<vmem>>, vector<16x32xf32>,
    %12 = vector.extract_strided_slice %0 {offsets = [0, 1], sizes = [16, 1], strides = [1, 1]} : vector<16x4xi32> to vector<16x1xi32>
    %13 = vector.broadcast %12 : vector<16x1xi32> to vector<16x32xi32>
    %14 = vector.broadcast %1 : vector<1x32xi32> to vector<16x32xi32>
    %15 = arith.cmpi eq, %13, %14 : vector<16x32xi32>
    %16 = arith.extui %15 : vector<16x32xi1> to vector<16x32xi32>
    %17 = arith.sitofp %16 : vector<16x32xi32> to vector<16x32xf32>
    %c1 = arith.constant 1 : index
    %c0_6 = arith.constant 0 : index
    %c0_7 = arith.constant 0 : index
    %18 = vector.load %arg2[%c1, %c0_6, %c0_7] : memref<4x32x32xf32, #tpu.memory_space<vmem>>, vector<1x32x32xf32>
    %19 = vector.shape_cast %18 : vector<1x32x32xf32> to vector<32x32xf32>
    %cst_8 = arith.constant dense<0.000000e+00> : vector<16x32xf32>
    %20 = tpu.matmul %17, %19, %cst_8 {dimension_numbers = #tpu.dot_dimension_numbers<[1], [0], [0], [1], [0, 0, 1, 1], [], []>, precision = #tpu.contract_precision<fp32>} : vector<16x32xf32>, vector<32x32xf32>, vector<16x32xf32> -> vector<16x32xf32>
    %c0_9 = arith.constant 0 : index
    %c32 = arith.constant 32 : index
    %21 = vector.load %arg3[%c0_9, %c32] : memref<16x128xf32, #tpu.memory_space<vmem>>, vector<16x32xf32>
    tpu.vector_store %arg3[%c0_9, %c32], %20 {strides = array<i32>} : memref<16x128xf32, #tpu.memory_space<vmem>>, vector<16x32xf32>,
    %22 = vector.extract_strided_slice %0 {offsets = [0, 2], sizes = [16, 1], strides = [1, 1]} : vector<16x4xi32> to vector<16x1xi32>
    %23 = vector.broadcast %22 : vector<16x1xi32> to vector<16x32xi32>
    %24 = vector.broadcast %1 : vector<1x32xi32> to vector<16x32xi32>
    %25 = arith.cmpi eq, %23, %24 : vector<16x32xi32>
    %26 = arith.extui %25 : vector<16x32xi1> to vector<16x32xi32>
    %27 = arith.sitofp %26 : vector<16x32xi32> to vector<16x32xf32>
    %c2 = arith.constant 2 : index
    %c0_10 = arith.constant 0 : index
    %c0_11 = arith.constant 0 : index
    %28 = vector.load %arg2[%c2, %c0_10, %c0_11] : memref<4x32x32xf32, #tpu.memory_space<vmem>>, vector<1x32x32xf32>
    %29 = vector.shape_cast %28 : vector<1x32x32xf32> to vector<32x32xf32>
    %cst_12 = arith.constant dense<0.000000e+00> : vector<16x32xf32>
    %30 = tpu.matmul %27, %29, %cst_12 {dimension_numbers = #tpu.dot_dimension_numbers<[1], [0], [0], [1], [0, 0, 1, 1], [], []>, precision = #tpu.contract_precision<fp32>} : vector<16x32xf32>, vector<32x32xf32>, vector<16x32xf32> -> vector<16x32xf32>
    %c0_13 = arith.constant 0 : index
    %c64 = arith.constant 64 : index
    %31 = vector.load %arg3[%c0_13, %c64] : memref<16x128xf32, #tpu.memory_space<vmem>>, vector<16x32xf32>
    tpu.vector_store %arg3[%c0_13, %c64], %30 {strides = array<i32>} : memref<16x128xf32, #tpu.memory_space<vmem>>, vector<16x32xf32>,
    %32 = vector.extract_strided_slice %0 {offsets = [0, 3], sizes = [16, 1], strides = [1, 1]} : vector<16x4xi32> to vector<16x1xi32>
    %33 = vector.broadcast %32 : vector<16x1xi32> to vector<16x32xi32>
    %34 = vector.broadcast %1 : vector<1x32xi32> to vector<16x32xi32>
    %35 = arith.cmpi eq, %33, %34 : vector<16x32xi32>
    %36 = arith.extui %35 : vector<16x32xi1> to vector<16x32xi32>
    %37 = arith.sitofp %36 : vector<16x32xi32> to vector<16x32xf32>
    %c3 = arith.constant 3 : index
    %c0_14 = arith.constant 0 : index
    %c0_15 = arith.constant 0 : index
    %38 = vector.load %arg2[%c3, %c0_14, %c0_15] : memref<4x32x32xf32, #tpu.memory_space<vmem>>, vector<1x32x32xf32>
    %39 = vector.shape_cast %38 : vector<1x32x32xf32> to vector<32x32xf32>
    %cst_16 = arith.constant dense<0.000000e+00> : vector<16x32xf32>
    %40 = tpu.matmul %37, %39, %cst_16 {dimension_numbers = #tpu.dot_dimension_numbers<[1], [0], [0], [1], [0, 0, 1, 1], [], []>, precision = #tpu.contract_precision<fp32>} : vector<16x32xf32>, vector<32x32xf32>, vector<16x32xf32> -> vector<16x32xf32>
    %c0_17 = arith.constant 0 : index
    %c96 = arith.constant 96 : index
    %41 = vector.load %arg3[%c0_17, %c96] : memref<16x128xf32, #tpu.memory_space<vmem>>, vector<16x32xf32>
    tpu.vector_store %arg3[%c0_17, %c96], %40 {strides = array<i32>} : memref<16x128xf32, #tpu.memory_space<vmem>>, vector<16x32xf32>,
    return
  }
  func.func @transform_0(%arg0: i32) -> (i32, i32) {
    %c0_i32 = arith.constant 0 : i32
    %c0_i32_0 = arith.constant 0 : i32
    return %arg0, %c0_i32 : i32, i32
  }
  func.func @transform_1(%arg0: i32) -> (i32, i32, i32) {
    %c0_i32 = arith.constant 0 : i32
    %c0_i32_0 = arith.constant 0 : i32
    %c0_i32_1 = arith.constant 0 : i32
    %c0_i32_2 = arith.constant 0 : i32
    return %c0_i32, %c0_i32_0, %c0_i32_1 : i32, i32, i32
  }
  func.func @transform_2(%arg0: i32) -> (i32, i32) {
    %c0_i32 = arith.constant 0 : i32
    %c0_i32_0 = arith.constant 0 : i32
    return %arg0, %c0_i32 : i32, i32
  }
}

module attributes {stable_mosaic.version = 11 : i64} {
  func.func @_multi_embed_kernel(%arg0: i32, %arg1: memref<16x4xi32, #tpu.memory_space<vmem>>, %arg2: memref<4x32x32xf32, #tpu.memory_space<vmem>>, %arg3: memref<16x128xf32, #tpu.memory_space<vmem>>) attributes {dimension_semantics = [#tpu.dimension_semantics<parallel>], iteration_bounds = array<i64: 1>, scalar_prefetch = 0 : i64, scratch_operands = 0 : i64, tpu.core_type = #tpu.core_type<tc>, window_params = [{transform_indices = @transform_0, window_bounds = array<i64: 16, 4>}, {pipeline_mode = #tpu.pipeline_mode<synchronous>, transform_indices = @transform_1, window_bounds = array<i64: 4, 32, 32>}, {transform_indices = @transform_2, window_bounds = array<i64: 16, 128>}]} {
    %c0 = arith.constant 0 : index
    %c0_0 = arith.constant 0 : index
    %0 = vector.load %arg1[%c0, %c0_0] : memref<16x4xi32, #tpu.memory_space<vmem>>, vector<16x4xi32>
    %1 = tpu.iota {dimensions = array<i32: 1>} : vector<1x32xi32>
    %2 = vector.extract_strided_slice %0 {offsets = [0, 0], sizes = [16, 1], strides = [1, 1]} : vector<16x4xi32> to vector<16x1xi32>
    %3 = vector.broadcast %2 : vector<16x1xi32> to vector<16x32xi32>
    %4 = vector.broadcast %1 : vector<1x32xi32> to vector<16x32xi32>
    %5 = arith.cmpi eq, %3, %4 : vector<16x32xi32>
    %6 = arith.extui %5 : vector<16x32xi1> to vector<16x32xi32>
    %7 = arith.sitofp %6 : vector<16x32xi32> to vector<16x32xf32>
    %c0_1 = arith.constant 0 : index
    %c0_2 = arith.constant 0 : index
    %c0_3 = arith.constant 0 : index
    %8 = vector.load %arg2[%c0_1, %c0_2, %c0_3] : memref<4x32x32xf32, #tpu.memory_space<vmem>>, vector<1x32x32xf32>
    %9 = vector.shape_cast %8 : vector<1x32x32xf32> to vector<32x32xf32>
    %cst = arith.constant dense<0.000000e+00> : vector<16x32xf32>
    %10 = tpu.matmul %7, %9, %cst {dimension_numbers = #tpu.dot_dimension_numbers<[1], [0], [0], [1], [0, 0, 1, 1], [], []>} : vector<16x32xf32>, vector<32x32xf32>, vector<16x32xf32> -> vector<16x32xf32>
    %c0_4 = arith.constant 0 : index
    %c0_5 = arith.constant 0 : index
    %11 = vector.load %arg3[%c0_4, %c0_5] : memref<16x128xf32, #tpu.memory_space<vmem>>, vector<16x32xf32>
    tpu.vector_store %arg3[%c0_4, %c0_5], %10 {strides = array<i32>} : memref<16x128xf32, #tpu.memory_space<vmem>>, vector<16x32xf32>,
    %12 = vector.extract_strided_slice %0 {offsets = [0, 1], sizes = [16, 1], strides = [1, 1]} : vector<16x4xi32> to vector<16x1xi32>
    %13 = vector.broadcast %12 : vector<16x1xi32> to vector<16x32xi32>
    %14 = vector.broadcast %1 : vector<1x32xi32> to vector<16x32xi32>
    %15 = arith.cmpi eq, %13, %14 : vector<16x32xi32>
    %16 = arith.extui %15 : vector<16x32xi1> to vector<16x32xi32>
    %17 = arith.sitofp %16 : vector<16x32xi32> to vector<16x32xf32>
    %c1 = arith.constant 1 : index
    %c0_6 = arith.constant 0 : index
    %c0_7 = arith.constant 0 : index
    %18 = vector.load %arg2[%c1, %c0_6, %c0_7] : memref<4x32x32xf32, #tpu.memory_space<vmem>>, vector<1x32x32xf32>
    %19 = vector.shape_cast %18 : vector<1x32x32xf32> to vector<32x32xf32>
    %cst_8 = arith.constant dense<0.000000e+00> : vector<16x32xf32>
    %20 = tpu.matmul %17, %19, %cst_8 {dimension_numbers = #tpu.dot_dimension_numbers<[1], [0], [0], [1], [0, 0, 1, 1], [], []>} : vector<16x32xf32>, vector<32x32xf32>, vector<16x32xf32> -> vector<16x32xf32>
    %c0_9 = arith.constant 0 : index
    %c32 = arith.constant 32 : index
    %21 = vector.load %arg3[%c0_9, %c32] : memref<16x128xf32, #tpu.memory_space<vmem>>, vector<16x32xf32>
    tpu.vector_store %arg3[%c0_9, %c32], %20 {strides = array<i32>} : memref<16x128xf32, #tpu.memory_space<vmem>>, vector<16x32xf32>,
    %22 = vector.extract_strided_slice %0 {offsets = [0, 2], sizes = [16, 1], strides = [1, 1]} : vector<16x4xi32> to vector<16x1xi32>
    %23 = vector.broadcast %22 : vector<16x1xi32> to vector<16x32xi32>
    %24 = vector.broadcast %1 : vector<1x32xi32> to vector<16x32xi32>
    %25 = arith.cmpi eq, %23, %24 : vector<16x32xi32>
    %26 = arith.extui %25 : vector<16x32xi1> to vector<16x32xi32>
    %27 = arith.sitofp %26 : vector<16x32xi32> to vector<16x32xf32>
    %c2 = arith.constant 2 : index
    %c0_10 = arith.constant 0 : index
    %c0_11 = arith.constant 0 : index
    %28 = vector.load %arg2[%c2, %c0_10, %c0_11] : memref<4x32x32xf32, #tpu.memory_space<vmem>>, vector<1x32x32xf32>
    %29 = vector.shape_cast %28 : vector<1x32x32xf32> to vector<32x32xf32>
    %cst_12 = arith.constant dense<0.000000e+00> : vector<16x32xf32>
    %30 = tpu.matmul %27, %29, %cst_12 {dimension_numbers = #tpu.dot_dimension_numbers<[1], [0], [0], [1], [0, 0, 1, 1], [], []>} : vector<16x32xf32>, vector<32x32xf32>, vector<16x32xf32> -> vector<16x32xf32>
    %c0_13 = arith.constant 0 : index
    %c64 = arith.constant 64 : index
    %31 = vector.load %arg3[%c0_13, %c64] : memref<16x128xf32, #tpu.memory_space<vmem>>, vector<16x32xf32>
    tpu.vector_store %arg3[%c0_13, %c64], %30 {strides = array<i32>} : memref<16x128xf32, #tpu.memory_space<vmem>>, vector<16x32xf32>,
    %32 = vector.extract_strided_slice %0 {offsets = [0, 3], sizes = [16, 1], strides = [1, 1]} : vector<16x4xi32> to vector<16x1xi32>
    %33 = vector.broadcast %32 : vector<16x1xi32> to vector<16x32xi32>
    %34 = vector.broadcast %1 : vector<1x32xi32> to vector<16x32xi32>
    %35 = arith.cmpi eq, %33, %34 : vector<16x32xi32>
    %36 = arith.extui %35 : vector<16x32xi1> to vector<16x32xi32>
    %37 = arith.sitofp %36 : vector<16x32xi32> to vector<16x32xf32>
    %c3 = arith.constant 3 : index
    %c0_14 = arith.constant 0 : index
    %c0_15 = arith.constant 0 : index
    %38 = vector.load %arg2[%c3, %c0_14, %c0_15] : memref<4x32x32xf32, #tpu.memory_space<vmem>>, vector<1x32x32xf32>
    %39 = vector.shape_cast %38 : vector<1x32x32xf32> to vector<32x32xf32>
    %cst_16 = arith.constant dense<0.000000e+00> : vector<16x32xf32>
    %40 = tpu.matmul %37, %39, %cst_16 {dimension_numbers = #tpu.dot_dimension_numbers<[1], [0], [0], [1], [0, 0, 1, 1], [], []>} : vector<16x32xf32>, vector<32x32xf32>, vector<16x32xf32> -> vector<16x32xf32>
    %c0_17 = arith.constant 0 : index
    %c96 = arith.constant 96 : index
    %41 = vector.load %arg3[%c0_17, %c96] : memref<16x128xf32, #tpu.memory_space<vmem>>, vector<16x32xf32>
    tpu.vector_store %arg3[%c0_17, %c96], %40 {strides = array<i32>} : memref<16x128xf32, #tpu.memory_space<vmem>>, vector<16x32xf32>,
    return
  }
  func.func @transform_0(%arg0: i32) -> (i32, i32) {
    %c0_i32 = arith.constant 0 : i32
    %c0_i32_0 = arith.constant 0 : i32
    return %arg0, %c0_i32 : i32, i32
  }
  func.func @transform_1(%arg0: i32) -> (i32, i32, i32) {
    %c0_i32 = arith.constant 0 : i32
    %c0_i32_0 = arith.constant 0 : i32
    %c0_i32_1 = arith.constant 0 : i32
    %c0_i32_2 = arith.constant 0 : i32
    return %c0_i32, %c0_i32_0, %c0_i32_1 : i32, i32, i32
  }
  func.func @transform_2(%arg0: i32) -> (i32, i32) {
    %c0_i32 = arith.constant 0 : i32
    %c0_i32_0 = arith.constant 0 : i32
    return %arg0, %c0_i32 : i32, i32
  }
}

module attributes {stable_mosaic.version = 11 : i64} {
  func.func @_multi_embed_kernel(%arg0: i32, %arg1: memref<16x4xi32, #tpu.memory_space<vmem>>, %arg2: memref<4x32x32xf32, #tpu.memory_space<vmem>>, %arg3: memref<16x128xf32, #tpu.memory_space<vmem>>) attributes {dimension_semantics = [#tpu.dimension_semantics<parallel>], iteration_bounds = array<i64: 1>, scalar_prefetch = 0 : i64, scratch_operands = 0 : i64, tpu.core_type = #tpu.core_type<tc>, window_params = [{transform_indices = @transform_0, window_bounds = array<i64: 16, 4>}, {pipeline_mode = #tpu.pipeline_mode<synchronous>, transform_indices = @transform_1, window_bounds = array<i64: 4, 32, 32>}, {transform_indices = @transform_2, window_bounds = array<i64: 16, 128>}]} {
    %c0 = arith.constant 0 : index
    %c0_0 = arith.constant 0 : index
    %0 = vector.load %arg1[%c0, %c0_0] : memref<16x4xi32, #tpu.memory_space<vmem>>, vector<16x4xi32>
    %1 = tpu.iota {dimensions = array<i32: 1>} : vector<1x32xi32>
    %2 = vector.extract_strided_slice %0 {offsets = [0, 0], sizes = [16, 1], strides = [1, 1]} : vector<16x4xi32> to vector<16x1xi32>
    %3 = vector.broadcast %2 : vector<16x1xi32> to vector<16x32xi32>
    %4 = vector.broadcast %1 : vector<1x32xi32> to vector<16x32xi32>
    %5 = arith.cmpi eq, %3, %4 : vector<16x32xi32>
    %6 = arith.extui %5 : vector<16x32xi1> to vector<16x32xi32>
    %7 = arith.sitofp %6 : vector<16x32xi32> to vector<16x32xf32>
    %c0_1 = arith.constant 0 : index
    %c0_2 = arith.constant 0 : index
    %c0_3 = arith.constant 0 : index
    %8 = vector.load %arg2[%c0_1, %c0_2, %c0_3] : memref<4x32x32xf32, #tpu.memory_space<vmem>>, vector<1x32x32xf32>
    %9 = vector.shape_cast %8 : vector<1x32x32xf32> to vector<32x32xf32>
    %cst = arith.constant dense<0.000000e+00> : vector<16x32xf32>
    %10 = tpu.matmul %7, %9, %cst {dimension_numbers = #tpu.dot_dimension_numbers<[1], [0], [0], [1], [0, 0, 1, 1], [], []>} : vector<16x32xf32>, vector<32x32xf32>, vector<16x32xf32> -> vector<16x32xf32>
    %c0_4 = arith.constant 0 : index
    %c0_5 = arith.constant 0 : index
    %11 = vector.load %arg3[%c0_4, %c0_5] : memref<16x128xf32, #tpu.memory_space<vmem>>, vector<16x32xf32>
    tpu.vector_store %arg3[%c0_4, %c0_5], %10 {strides = array<i32>} : memref<16x128xf32, #tpu.memory_space<vmem>>, vector<16x32xf32>,
    %12 = vector.extract_strided_slice %0 {offsets = [0, 1], sizes = [16, 1], strides = [1, 1]} : vector<16x4xi32> to vector<16x1xi32>
    %13 = vector.broadcast %12 : vector<16x1xi32> to vector<16x32xi32>
    %14 = vector.broadcast %1 : vector<1x32xi32> to vector<16x32xi32>
    %15 = arith.cmpi eq, %13, %14 : vector<16x32xi32>
    %16 = arith.extui %15 : vector<16x32xi1> to vector<16x32xi32>
    %17 = arith.sitofp %16 : vector<16x32xi32> to vector<16x32xf32>
    %c1 = arith.constant 1 : index
    %c0_6 = arith.constant 0 : index
    %c0_7 = arith.constant 0 : index
    %18 = vector.load %arg2[%c1, %c0_6, %c0_7] : memref<4x32x32xf32, #tpu.memory_space<vmem>>, vector<1x32x32xf32>
    %19 = vector.shape_cast %18 : vector<1x32x32xf32> to vector<32x32xf32>
    %cst_8 = arith.constant dense<0.000000e+00> : vector<16x32xf32>
    %20 = tpu.matmul %17, %19, %cst_8 {dimension_numbers = #tpu.dot_dimension_numbers<[1], [0], [0], [1], [0, 0, 1, 1], [], []>} : vector<16x32xf32>, vector<32x32xf32>, vector<16x32xf32> -> vector<16x32xf32>
    %c0_9 = arith.constant 0 : index
    %c32 = arith.constant 32 : index
    %21 = vector.load %arg3[%c0_9, %c32] : memref<16x128xf32, #tpu.memory_space<vmem>>, vector<16x32xf32>
    tpu.vector_store %arg3[%c0_9, %c32], %20 {strides = array<i32>} : memref<16x128xf32, #tpu.memory_space<vmem>>, vector<16x32xf32>,
    %22 = vector.extract_strided_slice %0 {offsets = [0, 2], sizes = [16, 1], strides = [1, 1]} : vector<16x4xi32> to vector<16x1xi32>
    %23 = vector.broadcast %22 : vector<16x1xi32> to vector<16x32xi32>
    %24 = vector.broadcast %1 : vector<1x32xi32> to vector<16x32xi32>
    %25 = arith.cmpi eq, %23, %24 : vector<16x32xi32>
    %26 = arith.extui %25 : vector<16x32xi1> to vector<16x32xi32>
    %27 = arith.sitofp %26 : vector<16x32xi32> to vector<16x32xf32>
    %c2 = arith.constant 2 : index
    %c0_10 = arith.constant 0 : index
    %c0_11 = arith.constant 0 : index
    %28 = vector.load %arg2[%c2, %c0_10, %c0_11] : memref<4x32x32xf32, #tpu.memory_space<vmem>>, vector<1x32x32xf32>
    %29 = vector.shape_cast %28 : vector<1x32x32xf32> to vector<32x32xf32>
    %cst_12 = arith.constant dense<0.000000e+00> : vector<16x32xf32>
    %30 = tpu.matmul %27, %29, %cst_12 {dimension_numbers = #tpu.dot_dimension_numbers<[1], [0], [0], [1], [0, 0, 1, 1], [], []>} : vector<16x32xf32>, vector<32x32xf32>, vector<16x32xf32> -> vector<16x32xf32>
    %c0_13 = arith.constant 0 : index
    %c64 = arith.constant 64 : index
    %31 = vector.load %arg3[%c0_13, %c64] : memref<16x128xf32, #tpu.memory_space<vmem>>, vector<16x32xf32>
    tpu.vector_store %arg3[%c0_13, %c64], %30 {strides = array<i32>} : memref<16x128xf32, #tpu.memory_space<vmem>>, vector<16x32xf32>,
    %32 = vector.extract_strided_slice %0 {offsets = [0, 3], sizes = [16, 1], strides = [1, 1]} : vector<16x4xi32> to vector<16x1xi32>
    %33 = vector.broadcast %32 : vector<16x1xi32> to vector<16x32xi32>
    %34 = vector.broadcast %1 : vector<1x32xi32> to vector<16x32xi32>
    %35 = arith.cmpi eq, %33, %34 : vector<16x32xi32>
    %36 = arith.extui %35 : vector<16x32xi1> to vector<16x32xi32>
    %37 = arith.sitofp %36 : vector<16x32xi32> to vector<16x32xf32>
    %c3 = arith.constant 3 : index
    %c0_14 = arith.constant 0 : index
    %c0_15 = arith.constant 0 : index
    %38 = vector.load %arg2[%c3, %c0_14, %c0_15] : memref<4x32x32xf32, #tpu.memory_space<vmem>>, vector<1x32x32xf32>
    %39 = vector.shape_cast %38 : vector<1x32x32xf32> to vector<32x32xf32>
    %cst_16 = arith.constant dense<0.000000e+00> : vector<16x32xf32>
    %40 = tpu.matmul %37, %39, %cst_16 {dimension_numbers = #tpu.dot_dimension_numbers<[1], [0], [0], [1], [0, 0, 1, 1], [], []>} : vector<16x32xf32>, vector<32x32xf32>, vector<16x32xf32> -> vector<16x32xf32>
    %c0_17 = arith.constant 0 : index
    %c96 = arith.constant 96 : index
    %41 = vector.load %arg3[%c0_17, %c96] : memref<16x128xf32, #tpu.memory_space<vmem>>, vector<16x32xf32>
    tpu.vector_store %arg3[%c0_17, %c96], %40 {strides = array<i32>} : memref<16x128xf32, #tpu.memory_space<vmem>>, vector<16x32xf32>,
    return
  }
  func.func @transform_0(%arg0: i32) -> (i32, i32) {
    %c0_i32 = arith.constant 0 : i32
    %c0_i32_0 = arith.constant 0 : i32
    return %arg0, %c0_i32 : i32, i32
  }
  func.func @transform_1(%arg0: i32) -> (i32, i32, i32) {
    %c0_i32 = arith.constant 0 : i32
    %c0_i32_0 = arith.constant 0 : i32
    %c0_i32_1 = arith.constant 0 : i32
    %c0_i32_2 = arith.constant 0 : i32
    return %c0_i32, %c0_i32_0, %c0_i32_1 : i32, i32, i32
  }
  func.func @transform_2(%arg0: i32) -> (i32, i32) {
    %c0_i32 = arith.constant 0 : i32
    %c0_i32_0 = arith.constant 0 : i32
    return %arg0, %c0_i32 : i32, i32
  }
}

</mosaic_0001>

<llo_original>
// kernel: tpu_custom_call.1
$region0: #{tpu_custom_call.1}
  #allocation0 [shape = 'u32[]', space=smem, size = 0x4, offset = 0x4, fixed_abs, tag = 'smem constant byte address 0x4 - core index']
  #allocation1 [shape = 'u32[144,128]{1,0:T(1,128)}', space=vmem, size = 0x12000, scoped, tag = 'internal scratch']
  %s0 = inlined_call_operand.vmem [shape: s32[16,4], index: 0, kind: input, shape index: {}]
  %s1 = inlined_call_operand.hbm [shape: f32[4,32,32], index: 1, kind: input, shape index: {}]
  %s2 = inlined_call_operand.hbm [shape: f32[16,128], index: 2, kind: output, shape index: {}]
  %s3 = sld [smem:[#allocation0]]
  $region22: #{tpu_custom_call.1} parent=0
    _
  %s5 = ssub.s32 1, %s3
  %s6 = scalar_select 0, %s5, %s3
  $region1: #{tpu_custom_call.1} parent=0
    #allocation2 [shape = 'u8[65536]{0}', space=vmem, size = 0x10000, scoped, tag = 'input window, operand 1, single buffered']
    #allocation3 [shape = 's32[1]{0}', space=sflag, size = 0x4, scoped, tag = 'scoped memory for tpu_custom_call.1']
    #allocation4 [shape = 's32[1]{0}', space=sflag, size = 0x4, scoped, tag = 'scoped memory for tpu_custom_call.1']
    #allocation5 [shape = 'u8[8192]{0}', space=vmem, size = 0x2000, scoped, tag = 'output window, operand 0, single buffered']
    %7 = vsyncpa [#allocation3], 0
    %8 = vsyncpa [#allocation4], 0
    // Predicated region
    $region2: #{tpu_custom_call.1} parent=1 // pred_check
      _
    $region3: #{tpu_custom_call.1} parent=1 // pred_check_branch
      %10 = sbr.rel (0) target = $region5
    $region4: #{tpu_custom_call.1} parent=1 // pred_region
      _
    $region5: #{tpu_custom_call.1} parent=1 // pred_fallthru
      _
    // Predicated region
    $region6: #{tpu_custom_call.1} parent=1 // pred_check
      _
    $region7: #{tpu_custom_call.1} parent=1 // pred_check_branch
      %12 = sbr.rel (0) target = $region9
    $region8: #{tpu_custom_call.1} parent=1 // pred_region
      %s14 = ssub.s32 2048, 2048
      %15 = vsyncadd [#allocation3], %s14
      %s16 = sshll.u32 [#allocation2], 4
      %s17 = int_to_ptr.vmem [resolvable:$true] %s16
      %22 = dma.hbm_to_vmem [thread:$0]  %s1, 2048, %s17, [#allocation3], 128, 128, 8
    $region9: #{tpu_custom_call.1} parent=1 // pred_fallthru
      _
    // Predicated region
    $region10: #{tpu_custom_call.1} parent=1 // pred_check
      _
    $region11: #{tpu_custom_call.1} parent=1 // pred_check_branch
      %24 = sbr.rel (0) target = $region13
    $region12: #{tpu_custom_call.1} parent=1 // pred_region
      %25 = dma.done [#allocation3], 2048
    $region13: #{tpu_custom_call.1} parent=1 // pred_fallthru
      _
    %v26 = vld [vmem:[%s0] sm:$0xff]
    %v27 = vld [vmem:[%s0 + $0x8] sm:$0xff]
    %v28 = vlaneseq
    %v29 = vand.u32 %v28, 127
    %30 = vset.pattern.permute.xlu0 0
    %31 = vperm.xlu0 %30, %v26
    %v32 = vpop.permute.xlu0 %31
    %33 = vset.pattern.permute.xlu0 0
    %34 = vperm.xlu0 %33, %v27
    %v35 = vpop.permute.xlu0 %34
    %vm36 = vcmp.eq.s32.totalorder %v32, %v29
    %vm37 = vcmp.eq.s32.totalorder %v35, %v29
    %v38 = vsel %vm36, 1, 0
    %v39 = vsel %vm37, 1, 0
    %v40 = vcvt.s32.f32 %v38
    %v41 = vcvt.s32.f32 %v39
    %v42 = vld [vmem:[#allocation2] sm:$0xff]
    %v43 = vld [vmem:[#allocation2 + $0x8] sm:$0xff]
    %v44 = vld [vmem:[#allocation2 + $0x10] sm:$0xff]
    %v45 = vld [vmem:[#allocation2 + $0x18] sm:$0xff]
    %vm46 = vcmask 261120
    %v48 = vsel %vm46, %v40, 0
    %v51 = vsel %vm46, %v41, 0
    %53 = vmatprep.subr.mxu0 0.0
    %v54 = vand.u32 %v42, 4294901760
    %55 = vmatpush1.msra.mxu0 %v54
    %56 = vmatprep.subr.mxu0 0.0
    %v57 = vand.u32 %v43, 4294901760
    %58 = vmatpush1.msra.mxu0 %v57
    %59 = vmatprep.subr.mxu0 0.0
    %v60 = vand.u32 %v44, 4294901760
    %61 = vmatpush1.msra.mxu0 %v60
    %62 = vmatprep.subr.mxu0 0.0
    %v63 = vand.u32 %v45, 4294901760
    %64 = vmatpush1.msra.mxu0 %v63
    %65 = vmatprep.subr.mxu0 0.0
    %66 = vmatpush1.msra.mxu0 0.0
    %67 = vmatprep.subr.mxu0 0.0
    %68 = vmatpush1.msra.mxu0 0.0
    %69 = vmatprep.subr.mxu0 0.0
    %70 = vmatpush1.msra.mxu0 0.0
    %71 = vmatprep.subr.mxu0 0.0
    %72 = vmatpush1.msra.mxu0 0.0
    %73 = vmatprep.subr.mxu0 0.0
    %74 = vmatpush1.msra.mxu0 0.0
    %75 = vmatprep.subr.mxu0 0.0
    %76 = vmatpush1.msra.mxu0 0.0
    %77 = vmatprep.subr.mxu0 0.0
    %78 = vmatpush1.msra.mxu0 0.0
    %79 = vmatprep.subr.mxu0 0.0
    %80 = vmatpush1.msra.mxu0 0.0
    %81 = vmatprep.subr.mxu0 0.0
    %82 = vmatpush1.msra.mxu0 0.0
    %83 = vmatprep.subr.mxu0 0.0
    %84 = vmatpush1.msra.mxu0 0.0
    %85 = vmatprep.subr.mxu0 0.0
    %86 = vmatpush1.msra.mxu0 0.0
    %87 = vmatprep.subr.mxu0 0.0
    %88 = vmatpush1.msra.mxu0 0.0
    %89 = vmatprep.subr.mxu0 0.0
    %90 = vmatpush1.msra.mxu0 0.0
    %91 = vmatprep.subr.mxu0 0.0
    %92 = vmatpush1.msra.mxu0 0.0
    %93 = vmatprep.subr.mxu0 0.0
    %94 = vmatpush1.msra.mxu0 0.0
    %95 = vmatprep.subr.mxu0 0.0
    %96 = vmatpush1.msra.mxu0 0.0
    %97 = vmatprep.subr.mxu0 0.0
    %98 = vmatpush1.msra.mxu0 0.0
    %99 = vmatprep.subr.mxu0 0.0
    %100 = vmatpush1.msra.mxu0 0.0
    %101 = vmatprep.subr.mxu0 0.0
    %102 = vmatpush1.msra.mxu0 0.0
    %103 = vmatprep.subr.mxu0 0.0
    %104 = vmatpush1.msra.mxu0 0.0
    %105 = vmatprep.subr.mxu0 0.0
    %106 = vmatpush1.msra.mxu0 0.0
    %107 = vmatprep.subr.mxu0 0.0
    %108 = vmatpush1.msra.mxu0 0.0
    %109 = vmatprep.subr.mxu0 0.0
    %110 = vmatpush1.msra.mxu0 0.0
    %111 = vmatprep.subr.mxu0 0.0
    %112 = vmatpush1.msra.mxu0 0.0
    %113 = vmatprep.subr.mxu0 0.0
    %114 = vmatpush1.msra.mxu0 0.0
    %115 = vmatprep.subr.mxu0 0.0
    %116 = vmatpush1.msra.mxu0 0.0
    %117 = vmatprep.subr.mxu0 0.0
    %118 = vmatpush1.msra.mxu0 0.0
    %119 = vmatprep.subr.mxu0 0.0
    %120 = vmatpush1.msra.mxu0 0.0
    %121 = vmatprep.mubr.f32.mxu0 0.0
    %v122 = vand.u32 %v48, 4294901760
    %v123 = vsub.f32 %v48, %v122
    %v124 = vand.u32 %v123, 4294901760
    %v125 = vsub.f32 %v123, %v124
    %v126 = vand.u32 %v125, 4294901760
    %127 = vmatmul.mubr.f32.gmra.mrb[0].mxu0 %v126
    %v128 = vpop.f32.mrb[0].mxu0
    %v129 = vadd.f32 0.0, %v128
    %v130 = vpop.f32.mrb[0].mxu0
    %131 = vmatprep.mubr.f32.mxu0 0.0
    %v132 = vand.u32 %v51, 4294901760
    %v133 = vsub.f32 %v51, %v132
    %v134 = vand.u32 %v133, 4294901760
    %v135 = vsub.f32 %v133, %v134
    %v136 = vand.u32 %v135, 4294901760
    %137 = vmatmul.mubr.f32.gmra.mrb[0].mxu0 %v136
    %v138 = vpop.f32.mrb[0].mxu0
    %v139 = vadd.f32 0.0, %v138
    %v140 = vpop.f32.mrb[0].mxu0
    %141 = vdwg.mxu0
    %142 = vmatprep.subr.mxu0 0.0
    %v143 = vand.u32 %v42, 4294901760
    %v144 = vsub.f32 %v42, %v143
    %v145 = vand.u32 %v144, 4294901760
    %v146 = vsub.f32 %v144, %v145
    %v147 = vand.u32 %v146, 4294901760
    %148 = vmatpush1.msra.mxu0 %v147
    %149 = vmatprep.subr.mxu0 0.0
    %v150 = vand.u32 %v43, 4294901760
    %v151 = vsub.f32 %v43, %v150
    %v152 = vand.u32 %v151, 4294901760
    %v153 = vsub.f32 %v151, %v152
    %v154 = vand.u32 %v153, 4294901760
    %155 = vmatpush1.msra.mxu0 %v154
    %156 = vmatprep.subr.mxu0 0.0
    %v157 = vand.u32 %v44, 4294901760
    %v158 = vsub.f32 %v44, %v157
    %v159 = vand.u32 %v158, 4294901760
    %v160 = vsub.f32 %v158, %v159
    %v161 = vand.u32 %v160, 4294901760
    %162 = vmatpush1.msra.mxu0 %v161
    %163 = vmatprep.subr.mxu0 0.0
    %v164 = vand.u32 %v45, 4294901760
    %v165 = vsub.f32 %v45, %v164
    %v166 = vand.u32 %v165, 4294901760
    %v167 = vsub.f32 %v165, %v166
    %v168 = vand.u32 %v167, 4294901760
    %169 = vmatpush1.msra.mxu0 %v168
    %170 = vmatprep.subr.mxu0 0.0
    %171 = vmatpush1.msra.mxu0 0.0
    %172 = vmatprep.subr.mxu0 0.0
    %173 = vmatpush1.msra.mxu0 0.0
    %174 = vmatprep.subr.mxu0 0.0
    %175 = vmatpush1.msra.mxu0 0.0
    %176 = vmatprep.subr.mxu0 0.0
    %177 = vmatpush1.msra.mxu0 0.0
    %178 = vmatprep.subr.mxu0 0.0
    %179 = vmatpush1.msra.mxu0 0.0
    %180 = vmatprep.subr.mxu0 0.0
    %181 = vmatpush1.msra.mxu0 0.0
    %182 = vmatprep.subr.mxu0 0.0
    %183 = vmatpush1.msra.mxu0 0.0
    %184 = vmatprep.subr.mxu0 0.0
    %185 = vmatpush1.msra.mxu0 0.0
    %186 = vmatprep.subr.mxu0 0.0
    %187 = vmatpush1.msra.mxu0 0.0
    %188 = vmatprep.subr.mxu0 0.0
    %189 = vmatpush1.msra.mxu0 0.0
    %190 = vmatprep.subr.mxu0 0.0
    %191 = vmatpush1.msra.mxu0 0.0
    %192 = vmatprep.subr.mxu0 0.0
    %193 = vmatpush1.msra.mxu0 0.0
    %194 = vmatprep.subr.mxu0 0.0
    %195 = vmatpush1.msra.mxu0 0.0
    %196 = vmatprep.subr.mxu0 0.0
    %197 = vmatpush1.msra.mxu0 0.0
    %198 = vmatprep.subr.mxu0 0.0
    %199 = vmatpush1.msra.mxu0 0.0
    %200 = vmatprep.subr.mxu0 0.0
    %201 = vmatpush1.msra.mxu0 0.0
    %202 = vmatprep.subr.mxu0 0.0
    %203 = vmatpush1.msra.mxu0 0.0
    %204 = vmatprep.subr.mxu0 0.0
    %205 = vmatpush1.msra.mxu0 0.0
    %206 = vmatprep.subr.mxu0 0.0
    %207 = vmatpush1.msra.mxu0 0.0
    %208 = vmatprep.subr.mxu0 0.0
    %209 = vmatpush1.msra.mxu0 0.0
    %210 = vmatprep.subr.mxu0 0.0
    %211 = vmatpush1.msra.mxu0 0.0
    %212 = vmatprep.subr.mxu0 0.0
    %213 = vmatpush1.msra.mxu0 0.0
    %214 = vmatprep.subr.mxu0 0.0
    %215 = vmatpush1.msra.mxu0 0.0
    %216 = vmatprep.subr.mxu0 0.0
    %217 = vmatpush1.msra.mxu0 0.0
    %218 = vmatprep.subr.mxu0 0.0
    %219 = vmatpush1.msra.mxu0 0.0
    %220 = vmatprep.subr.mxu0 0.0
    %221 = vmatpush1.msra.mxu0 0.0
    %222 = vmatprep.subr.mxu0 0.0
    %223 = vmatpush1.msra.mxu0 0.0
    %224 = vmatprep.subr.mxu0 0.0
    %225 = vmatpush1.msra.mxu0 0.0
    %226 = vmatprep.mubr.f32.mxu0 0.0
    %v227 = vand.u32 %v48, 4294901760
    %228 = vmatmul.mubr.f32.gmra.mrb[0].mxu0 %v227
    %v229 = vpop.f32.mrb[0].mxu0
    %v230 = vadd.f32 %v129, %v229
    %v231 = vpop.f32.mrb[0].mxu0
    %232 = vmatprep.mubr.f32.mxu0 0.0
    %v233 = vand.u32 %v51, 4294901760
    %234 = vmatmul.mubr.f32.gmra.mrb[0].mxu0 %v233
    %v235 = vpop.f32.mrb[0].mxu0
    %v236 = vadd.f32 %v139, %v235
    %v237 = vpop.f32.mrb[0].mxu0
    %238 = vdwg.mxu0
    %239 = vmatprep.subr.mxu0 0.0
    %v240 = vand.u32 %v42, 4294901760
    %v241 = vsub.f32 %v42, %v240
    %242 = vmatpush1.msra.mxu0 %v241
    %243 = vmatprep.subr.mxu0 0.0
    %v244 = vand.u32 %v43, 4294901760
    %v245 = vsub.f32 %v43, %v244
    %246 = vmatpush1.msra.mxu0 %v245
    %247 = vmatprep.subr.mxu0 0.0
    %v248 = vand.u32 %v44, 4294901760
    %v249 = vsub.f32 %v44, %v248
    %250 = vmatpush1.msra.mxu0 %v249
    %251 = vmatprep.subr.mxu0 0.0
    %v252 = vand.u32 %v45, 4294901760
    %v253 = vsub.f32 %v45, %v252
    %254 = vmatpush1.msra.mxu0 %v253
    %255 = vmatprep.subr.mxu0 0.0
    %256 = vmatpush1.msra.mxu0 0.0
    %257 = vmatprep.subr.mxu0 0.0
    %258 = vmatpush1.msra.mxu0 0.0
    %259 = vmatprep.subr.mxu0 0.0
    %260 = vmatpush1.msra.mxu0 0.0
    %261 = vmatprep.subr.mxu0 0.0
    %262 = vmatpush1.msra.mxu0 0.0
    %263 = vmatprep.subr.mxu0 0.0
    %264 = vmatpush1.msra.mxu0 0.0
    %265 = vmatprep.subr.mxu0 0.0
    %266 = vmatpush1.msra.mxu0 0.0
    %267 = vmatprep.subr.mxu0 0.0
    %268 = vmatpush1.msra.mxu0 0.0
    %269 = vmatprep.subr.mxu0 0.0
    %270 = vmatpush1.msra.mxu0 0.0
    %271 = vmatprep.subr.mxu0 0.0
    %272 = vmatpush1.msra.mxu0 0.0
    %273 = vmatprep.subr.mxu0 0.0
    %274 = vmatpush1.msra.mxu0 0.0
    %275 = vmatprep.subr.mxu0 0.0
    %276 = vmatpush1.msra.mxu0 0.0
    %277 = vmatprep.subr.mxu0 0.0
    %278 = vmatpush1.msra.mxu0 0.0
    %279 = vmatprep.subr.mxu0 0.0
    %280 = vmatpush1.msra.mxu0 0.0
    %281 = vmatprep.subr.mxu0 0.0
    %282 = vmatpush1.msra.mxu0 0.0
    %283 = vmatprep.subr.mxu0 0.0
    %284 = vmatpush1.msra.mxu0 0.0
    %285 = vmatprep.subr.mxu0 0.0
    %286 = vmatpush1.msra.mxu0 0.0
    %287 = vmatprep.subr.mxu0 0.0
    %288 = vmatpush1.msra.mxu0 0.0
    %289 = vmatprep.subr.mxu0 0.0
    %290 = vmatpush1.msra.mxu0 0.0
    %291 = vmatprep.subr.mxu0 0.0
    %292 = vmatpush1.msra.mxu0 0.0
    %293 = vmatprep.subr.mxu0 0.0
    %294 = vmatpush1.msra.mxu0 0.0
    %295 = vmatprep.subr.mxu0 0.0
    %296 = vmatpush1.msra.mxu0 0.0
    %297 = vmatprep.subr.mxu0 0.0
    %298 = vmatpush1.msra.mxu0 0.0
    %299 = vmatprep.subr.mxu0 0.0
    %300 = vmatpush1.msra.mxu0 0.0
    %301 = vmatprep.subr.mxu0 0.0
    %302 = vmatpush1.msra.mxu0 0.0
    %303 = vmatprep.subr.mxu0 0.0
    %304 = vmatpush1.msra.mxu0 0.0
    %305 = vmatprep.subr.mxu0 0.0
    %306 = vmatpush1.msra.mxu0 0.0
    %307 = vmatprep.subr.mxu0 0.0
    %308 = vmatpush1.msra.mxu0 0.0
    %309 = vmatprep.subr.mxu0 0.0
    %310 = vmatpush1.msra.mxu0 0.0
    %311 = vmatprep.mubr.f32.mxu0 0.0
    %v312 = vand.u32 %v48, 4294901760
    %v313 = vsub.f32 %v48, %v312
    %314 = vmatmul.mubr.f32.gmra.mrb[0].mxu0 %v313
    %v315 = vpop.f32.mrb[0].mxu0
    %v316 = vadd.f32 %v230, %v315
    %v317 = vpop.f32.mrb[0].mxu0
    %318 = vmatprep.mubr.f32.mxu0 0.0
    %v319 = vand.u32 %v51, 4294901760
    %v320 = vsub.f32 %v51, %v319
    %321 = vmatmul.mubr.f32.gmra.mrb[0].mxu0 %v320
    %v322 = vpop.f32.mrb[0].mxu0
    %v323 = vadd.f32 %v236, %v322
    %v324 = vpop.f32.mrb[0].mxu0
    %325 = vdwg.mxu0
    %326 = vmatprep.subr.mxu0 0.0
    %v327 = vand.u32 %v42, 4294901760
    %328 = vmatpush1.msra.mxu0 %v327
    %329 = vmatprep.subr.mxu0 0.0
    %v330 = vand.u32 %v43, 4294901760
    %331 = vmatpush1.msra.mxu0 %v330
    %332 = vmatprep.subr.mxu0 0.0
    %v333 = vand.u32 %v44, 4294901760
    %334 = vmatpush1.msra.mxu0 %v333
    %335 = vmatprep.subr.mxu0 0.0
    %v336 = vand.u32 %v45, 4294901760
    %337 = vmatpush1.msra.mxu0 %v336
    %338 = vmatprep.subr.mxu0 0.0
    %339 = vmatpush1.msra.mxu0 0.0
    %340 = vmatprep.subr.mxu0 0.0
    %341 = vmatpush1.msra.mxu0 0.0
    %342 = vmatprep.subr.mxu0 0.0
    %343 = vmatpush1.msra.mxu0 0.0
    %344 = vmatprep.subr.mxu0 0.0
    %345 = vmatpush1.msra.mxu0 0.0
    %346 = vmatprep.subr.mxu0 0.0
    %347 = vmatpush1.msra.mxu0 0.0
    %348 = vmatprep.subr.mxu0 0.0
    %349 = vmatpush1.msra.mxu0 0.0
    %350 = vmatprep.subr.mxu0 0.0
    %351 = vmatpush1.msra.mxu0 0.0
    %352 = vmatprep.subr.mxu0 0.0
    %353 = vmatpush1.msra.mxu0 0.0
    %354 = vmatprep.subr.mxu0 0.0
    %355 = vmatpush1.msra.mxu0 0.0
    %356 = vmatprep.subr.mxu0 0.0
    %357 = vmatpush1.msra.mxu0 0.0
    %358 = vmatprep.subr.mxu0 0.0
    %359 = vmatpush1.msra.mxu0 0.0
    %360 = vmatprep.subr.mxu0 0.0
    %361 = vmatpush1.msra.mxu0 0.0
    %362 = vmatprep.subr.mxu0 0.0
    %363 = vmatpush1.msra.mxu0 0.0
    %364 = vmatprep.subr.mxu0 0.0
    %365 = vmatpush1.msra.mxu0 0.0
    %366 = vmatprep.subr.mxu0 0.0
    %367 = vmatpush1.msra.mxu0 0.0
    %368 = vmatprep.subr.mxu0 0.0
    %369 = vmatpush1.msra.mxu0 0.0
    %370 = vmatprep.subr.mxu0 0.0
    %371 = vmatpush1.msra.mxu0 0.0
    %372 = vmatprep.subr.mxu0 0.0
    %373 = vmatpush1.msra.mxu0 0.0
    %374 = vmatprep.subr.mxu0 0.0
    %375 = vmatpush1.msra.mxu0 0.0
    %376 = vmatprep.subr.mxu0 0.0
    %377 = vmatpush1.msra.mxu0 0.0
    %378 = vmatprep.subr.mxu0 0.0
    %379 = vmatpush1.msra.mxu0 0.0
    %380 = vmatprep.subr.mxu0 0.0
    %381 = vmatpush1.msra.mxu0 0.0
    %382 = vmatprep.subr.mxu0 0.0
    %383 = vmatpush1.msra.mxu0 0.0
    %384 = vmatprep.subr.mxu0 0.0
    %385 = vmatpush1.msra.mxu0 0.0
    %386 = vmatprep.subr.mxu0 0.0
    %387 = vmatpush1.msra.mxu0 0.0
    %388 = vmatprep.subr.mxu0 0.0
    %389 = vmatpush1.msra.mxu0 0.0
    %390 = vmatprep.subr.mxu0 0.0
    %391 = vmatpush1.msra.mxu0 0.0
    %392 = vmatprep.subr.mxu0 0.0
    %393 = vmatpush1.msra.mxu0 0.0
    %394 = vmatprep.mubr.f32.mxu0 0.0
    %v395 = vand.u32 %v48, 4294901760
    %v396 = vsub.f32 %v48, %v395
    %v397 = vand.u32 %v396, 4294901760
    %398 = vmatmul.mubr.f32.gmra.mrb[0].mxu0 %v397
    %v399 = vpop.f32.mrb[0].mxu0
    %v400 = vadd.f32 %v316, %v399
    %v401 = vpop.f32.mrb[0].mxu0
    %402 = vmatprep.mubr.f32.mxu0 0.0
    %v403 = vand.u32 %v51, 4294901760
    %v404 = vsub.f32 %v51, %v403
    %v405 = vand.u32 %v404, 4294901760
    %406 = vmatmul.mubr.f32.gmra.mrb[0].mxu0 %v405
    %v407 = vpop.f32.mrb[0].mxu0
    %v408 = vadd.f32 %v323, %v407
    %v409 = vpop.f32.mrb[0].mxu0
    %410 = vdwg.mxu0
    %411 = vmatprep.subr.mxu0 0.0
    %v412 = vand.u32 %v42, 4294901760
    %v413 = vsub.f32 %v42, %v412
    %v414 = vand.u32 %v413, 4294901760
    %415 = vmatpush1.msra.mxu0 %v414
    %416 = vmatprep.subr.mxu0 0.0
    %v417 = vand.u32 %v43, 4294901760
    %v418 = vsub.f32 %v43, %v417
    %v419 = vand.u32 %v418, 4294901760
    %420 = vmatpush1.msra.mxu0 %v419
    %421 = vmatprep.subr.mxu0 0.0
    %v422 = vand.u32 %v44, 4294901760
    %v423 = vsub.f32 %v44, %v422
    %v424 = vand.u32 %v423, 4294901760
    %425 = vmatpush1.msra.mxu0 %v424
    %426 = vmatprep.subr.mxu0 0.0
    %v427 = vand.u32 %v45, 4294901760
    %v428 = vsub.f32 %v45, %v427
    %v429 = vand.u32 %v428, 4294901760
    %430 = vmatpush1.msra.mxu0 %v429
    %431 = vmatprep.subr.mxu0 0.0
    %432 = vmatpush1.msra.mxu0 0.0
    %433 = vmatprep.subr.mxu0 0.0
    %434 = vmatpush1.msra.mxu0 0.0
    %435 = vmatprep.subr.mxu0 0.0
    %436 = vmatpush1.msra.mxu0 0.0
    %437 = vmatprep.subr.mxu0 0.0
    %438 = vmatpush1.msra.mxu0 0.0
    %439 = vmatprep.subr.mxu0 0.0
    %440 = vmatpush1.msra.mxu0 0.0
    %441 = vmatprep.subr.mxu0 0.0
    %442 = vmatpush1.msra.mxu0 0.0
    %443 = vmatprep.subr.mxu0 0.0
    %444 = vmatpush1.msra.mxu0 0.0
    %445 = vmatprep.subr.mxu0 0.0
    %446 = vmatpush1.msra.mxu0 0.0
    %447 = vmatprep.subr.mxu0 0.0
    %448 = vmatpush1.msra.mxu0 0.0
    %449 = vmatprep.subr.mxu0 0.0
    %450 = vmatpush1.msra.mxu0 0.0
    %451 = vmatprep.subr.mxu0 0.0
    %452 = vmatpush1.msra.mxu0 0.0
    %453 = vmatprep.subr.mxu0 0.0
    %454 = vmatpush1.msra.mxu0 0.0
    %455 = vmatprep.subr.mxu0 0.0
    %456 = vmatpush1.msra.mxu0 0.0
    %457 = vmatprep.subr.mxu0 0.0
    %458 = vmatpush1.msra.mxu0 0.0
    %459 = vmatprep.subr.mxu0 0.0
    %460 = vmatpush1.msra.mxu0 0.0
    %461 = vmatprep.subr.mxu0 0.0
    %462 = vmatpush1.msra.mxu0 0.0
    %463 = vmatprep.subr.mxu0 0.0
    %464 = vmatpush1.msra.mxu0 0.0
    %465 = vmatprep.subr.mxu0 0.0
    %466 = vmatpush1.msra.mxu0 0.0
    %467 = vmatprep.subr.mxu0 0.0
    %468 = vmatpush1.msra.mxu0 0.0
    %469 = vmatprep.subr.mxu0 0.0
    %470 = vmatpush1.msra.mxu0 0.0
    %471 = vmatprep.subr.mxu0 0.0
    %472 = vmatpush1.msra.mxu0 0.0
    %473 = vmatprep.subr.mxu0 0.0
    %474 = vmatpush1.msra.mxu0 0.0
    %475 = vmatprep.subr.mxu0 0.0
    %476 = vmatpush1.msra.mxu0 0.0
    %477 = vmatprep.subr.mxu0 0.0
    %478 = vmatpush1.msra.mxu0 0.0
    %479 = vmatprep.subr.mxu0 0.0
    %480 = vmatpush1.msra.mxu0 0.0
    %481 = vmatprep.subr.mxu0 0.0
    %482 = vmatpush1.msra.mxu0 0.0
    %483 = vmatprep.subr.mxu0 0.0
    %484 = vmatpush1.msra.mxu0 0.0
    %485 = vmatprep.subr.mxu0 0.0
    %486 = vmatpush1.msra.mxu0 0.0
    %487 = vmatprep.mubr.f32.mxu0 0.0
    %v488 = vand.u32 %v48, 4294901760
    %489 = vmatmul.mubr.f32.gmra.mrb[0].mxu0 %v488
    %v490 = vpop.f32.mrb[0].mxu0
    %v491 = vadd.f32 %v400, %v490
    %v492 = vpop.f32.mrb[0].mxu0
    %493 = vmatprep.mubr.f32.mxu0 0.0
    %v494 = vand.u32 %v51, 4294901760
    %495 = vmatmul.mubr.f32.gmra.mrb[0].mxu0 %v494
    %v496 = vpop.f32.mrb[0].mxu0
    %v497 = vadd.f32 %v408, %v496
    %v498 = vpop.f32.mrb[0].mxu0
    %499 = vdwg.mxu0
    %500 = vmatprep.subr.mxu0 0.0
    %v501 = vand.u32 %v42, 4294901760
    %502 = vmatpush1.msra.mxu0 %v501
    %503 = vmatprep.subr.mxu0 0.0
    %v504 = vand.u32 %v43, 4294901760
    %505 = vmatpush1.msra.mxu0 %v504
    %506 = vmatprep.subr.mxu0 0.0
    %v507 = vand.u32 %v44, 4294901760
    %508 = vmatpush1.msra.mxu0 %v507
    %509 = vmatprep.subr.mxu0 0.0
    %v510 = vand.u32 %v45, 4294901760
    %511 = vmatpush1.msra.mxu0 %v510
    %512 = vmatprep.subr.mxu0 0.0
    %513 = vmatpush1.msra.mxu0 0.0
    %514 = vmatprep.subr.mxu0 0.0
    %515 = vmatpush1.msra.mxu0 0.0
    %516 = vmatprep.subr.mxu0 0.0
    %517 = vmatpush1.msra.mxu0 0.0
    %518 = vmatprep.subr.mxu0 0.0
    %519 = vmatpush1.msra.mxu0 0.0
    %520 = vmatprep.subr.mxu0 0.0
    %521 = vmatpush1.msra.mxu0 0.0
    %522 = vmatprep.subr.mxu0 0.0
    %523 = vmatpush1.msra.mxu0 0.0
    %524 = vmatprep.subr.mxu0 0.0
    %525 = vmatpush1.msra.mxu0 0.0
    %526 = vmatprep.subr.mxu0 0.0
    %527 = vmatpush1.msra.mxu0 0.0
    %528 = vmatprep.subr.mxu0 0.0
    %529 = vmatpush1.msra.mxu0 0.0
    %530 = vmatprep.subr.mxu0 0.0
    %531 = vmatpush1.msra.mxu0 0.0
    %532 = vmatprep.subr.mxu0 0.0
    %533 = vmatpush1.msra.mxu0 0.0
    %534 = vmatprep.subr.mxu0 0.0
    %535 = vmatpush1.msra.mxu0 0.0
    %536 = vmatprep.subr.mxu0 0.0
    %537 = vmatpush1.msra.mxu0 0.0
    %538 = vmatprep.subr.mxu0 0.0
    %539 = vmatpush1.msra.mxu0 0.0
    %540 = vmatprep.subr.mxu0 0.0
    %541 = vmatpush1.msra.mxu0 0.0
    %542 = vmatprep.subr.mxu0 0.0
    %543 = vmatpush1.msra.mxu0 0.0
    %544 = vmatprep.subr.mxu0 0.0
    %545 = vmatpush1.msra.mxu0 0.0
    %546 = vmatprep.subr.mxu0 0.0
    %547 = vmatpush1.msra.mxu0 0.0
    %548 = vmatprep.subr.mxu0 0.0
    %549 = vmatpush1.msra.mxu0 0.0
    %550 = vmatprep.subr.mxu0 0.0
    %551 = vmatpush1.msra.mxu0 0.0
    %552 = vmatprep.subr.mxu0 0.0
    %553 = vmatpush1.msra.mxu0 0.0
    %554 = vmatprep.subr.mxu0 0.0
    %555 = vmatpush1.msra.mxu0 0.0
    %556 = vmatprep.subr.mxu0 0.0
    %557 = vmatpush1.msra.mxu0 0.0
    %558 = vmatprep.subr.mxu0 0.0
    %559 = vmatpush1.msra.mxu0 0.0
    %560 = vmatprep.subr.mxu0 0.0
    %561 = vmatpush1.msra.mxu0 0.0
    %562 = vmatprep.subr.mxu0 0.0
    %563 = vmatpush1.msra.mxu0 0.0
    %564 = vmatprep.subr.mxu0 0.0
    %565 = vmatpush1.msra.mxu0 0.0
    %566 = vmatprep.subr.mxu0 0.0
    %567 = vmatpush1.msra.mxu0 0.0
    %568 = vmatprep.mubr.f32.mxu0 0.0
    %v569 = vand.u32 %v48, 4294901760
    %570 = vmatmul.mubr.f32.gmra.mrb[0].mxu0 %v569
    %v571 = vpop.f32.mrb[0].mxu0
    %v572 = vadd.f32 %v491, %v571
    %v573 = vpop.f32.mrb[0].mxu0
    %574 = vmatprep.mubr.f32.mxu0 0.0
    %v575 = vand.u32 %v51, 4294901760
    %576 = vmatmul.mubr.f32.gmra.mrb[0].mxu0 %v575
    %v577 = vpop.f32.mrb[0].mxu0
    %v578 = vadd.f32 %v497, %v577
    %v579 = vpop.f32.mrb[0].mxu0
    %580 = vdwg.mxu0
    %581 = vst.msk [vmem:[#allocation5] sm:$0xff] %vm46, %v572
    %582 = vst.msk [vmem:[#allocation5 + $0x8] sm:$0xff] %vm46, %v578
    %583 = vset.pattern.permute.xlu0 1
    %584 = vperm.xlu0 %583, %v26
    %v585 = vpop.permute.xlu0 %584
    %586 = vset.pattern.permute.xlu0 1
    %587 = vperm.xlu0 %586, %v27
    %v588 = vpop.permute.xlu0 %587
    %vm589 = vcmp.eq.s32.totalorder %v585, %v29
    %vm590 = vcmp.eq.s32.totalorder %v588, %v29
    %v591 = vsel %vm589, 1, 0
    %v592 = vsel %vm590, 1, 0
    %v593 = vcvt.s32.f32 %v591
    %v594 = vcvt.s32.f32 %v592
    %s595 = scalar_lea.vmem [#allocation2], 32
    %v596 = vld [vmem:[%s595] sm:$0xff]
    %v597 = vld [vmem:[%s595 + $0x8] sm:$0xff]
    %v598 = vld [vmem:[%s595 + $0x10] sm:$0xff]
    %v599 = vld [vmem:[%s595 + $0x18] sm:$0xff]
    %v601 = vsel %vm46, %v593, 0
    %v604 = vsel %vm46, %v594, 0
    %606 = vmatprep.subr.mxu0 0.0
    %v607 = vand.u32 %v596, 4294901760
    %608 = vmatpush1.msra.mxu0 %v607
    %609 = vmatprep.subr.mxu0 0.0
    %v610 = vand.u32 %v597, 4294901760
    %611 = vmatpush1.msra.mxu0 %v610
    %612 = vmatprep.subr.mxu0 0.0
    %v613 = vand.u32 %v598, 4294901760
    %614 = vmatpush1.msra.mxu0 %v613
    %615 = vmatprep.subr.mxu0 0.0
    %v616 = vand.u32 %v599, 4294901760
    %617 = vmatpush1.msra.mxu0 %v616
    %618 = vmatprep.subr.mxu0 0.0
    %619 = vmatpush1.msra.mxu0 0.0
    %620 = vmatprep.subr.mxu0 0.0
    %621 = vmatpush1.msra.mxu0 0.0
    %622 = vmatprep.subr.mxu0 0.0
    %623 = vmatpush1.msra.mxu0 0.0
    %624 = vmatprep.subr.mxu0 0.0
    %625 = vmatpush1.msra.mxu0 0.0
    %626 = vmatprep.subr.mxu0 0.0
    %627 = vmatpush1.msra.mxu0 0.0
    %628 = vmatprep.subr.mxu0 0.0
    %629 = vmatpush1.msra.mxu0 0.0
    %630 = vmatprep.subr.mxu0 0.0
    %631 = vmatpush1.msra.mxu0 0.0
    %632 = vmatprep.subr.mxu0 0.0
    %633 = vmatpush1.msra.mxu0 0.0
    %634 = vmatprep.subr.mxu0 0.0
    %635 = vmatpush1.msra.mxu0 0.0
    %636 = vmatprep.subr.mxu0 0.0
    %637 = vmatpush1.msra.mxu0 0.0
    %638 = vmatprep.subr.mxu0 0.0
    %639 = vmatpush1.msra.mxu0 0.0
    %640 = vmatprep.subr.mxu0 0.0
    %641 = vmatpush1.msra.mxu0 0.0
    %642 = vmatprep.subr.mxu0 0.0
    %643 = vmatpush1.msra.mxu0 0.0
    %644 = vmatprep.subr.mxu0 0.0
    %645 = vmatpush1.msra.mxu0 0.0
    %646 = vmatprep.subr.mxu0 0.0
    %647 = vmatpush1.msra.mxu0 0.0
    %648 = vmatprep.subr.mxu0 0.0
    %649 = vmatpush1.msra.mxu0 0.0
    %650 = vmatprep.subr.mxu0 0.0
    %651 = vmatpush1.msra.mxu0 0.0
    %652 = vmatprep.subr.mxu0 0.0
    %653 = vmatpush1.msra.mxu0 0.0
    %654 = vmatprep.subr.mxu0 0.0
    %655 = vmatpush1.msra.mxu0 0.0
    %656 = vmatprep.subr.mxu0 0.0
    %657 = vmatpush1.msra.mxu0 0.0
    %658 = vmatprep.subr.mxu0 0.0
    %659 = vmatpush1.msra.mxu0 0.0
    %660 = vmatprep.subr.mxu0 0.0
    %661 = vmatpush1.msra.mxu0 0.0
    %662 = vmatprep.subr.mxu0 0.0
    %663 = vmatpush1.msra.mxu0 0.0
    %664 = vmatprep.subr.mxu0 0.0
    %665 = vmatpush1.msra.mxu0 0.0
    %666 = vmatprep.subr.mxu0 0.0
    %667 = vmatpush1.msra.mxu0 0.0
    %668 = vmatprep.subr.mxu0 0.0
    %669 = vmatpush1.msra.mxu0 0.0
    %670 = vmatprep.subr.mxu0 0.0
    %671 = vmatpush1.msra.mxu0 0.0
    %672 = vmatprep.subr.mxu0 0.0
    %673 = vmatpush1.msra.mxu0 0.0
    %674 = vmatprep.mubr.f32.mxu0 0.0
    %v675 = vand.u32 %v601, 4294901760
    %v676 = vsub.f32 %v601, %v675
    %v677 = vand.u32 %v676, 4294901760
    %v678 = vsub.f32 %v676, %v677
    %v679 = vand.u32 %v678, 4294901760
    %680 = vmatmul.mubr.f32.gmra.mrb[0].mxu0 %v679
    %v681 = vpop.f32.mrb[0].mxu0
    %v682 = vadd.f32 0.0, %v681
    %v683 = vpop.f32.mrb[0].mxu0
    %684 = vmatprep.mubr.f32.mxu0 0.0
    %v685 = vand.u32 %v604, 4294901760
    %v686 = vsub.f32 %v604, %v685
    %v687 = vand.u32 %v686, 4294901760
    %v688 = vsub.f32 %v686, %v687
    %v689 = vand.u32 %v688, 4294901760
    %690 = vmatmul.mubr.f32.gmra.mrb[0].mxu0 %v689
    %v691 = vpop.f32.mrb[0].mxu0
    %v692 = vadd.f32 0.0, %v691
    %v693 = vpop.f32.mrb[0].mxu0
    %694 = vdwg.mxu0
    %695 = vmatprep.subr.mxu0 0.0
    %v696 = vand.u32 %v596, 4294901760
    %v697 = vsub.f32 %v596, %v696
    %v698 = vand.u32 %v697, 4294901760
    %v699 = vsub.f32 %v697, %v698
    %v700 = vand.u32 %v699, 4294901760
    %701 = vmatpush1.msra.mxu0 %v700
    %702 = vmatprep.subr.mxu0 0.0
    %v703 = vand.u32 %v597, 4294901760
    %v704 = vsub.f32 %v597, %v703
    %v705 = vand.u32 %v704, 4294901760
    %v706 = vsub.f32 %v704, %v705
    %v707 = vand.u32 %v706, 4294901760
    %708 = vmatpush1.msra.mxu0 %v707
    %709 = vmatprep.subr.mxu0 0.0
    %v710 = vand.u32 %v598, 4294901760
    %v711 = vsub.f32 %v598, %v710
    %v712 = vand.u32 %v711, 4294901760
    %v713 = vsub.f32 %v711, %v712
    %v714 = vand.u32 %v713, 4294901760
    %715 = vmatpush1.msra.mxu0 %v714
    %716 = vmatprep.subr.mxu0 0.0
    %v717 = vand.u32 %v599, 4294901760
    %v718 = vsub.f32 %v599, %v717
    %v719 = vand.u32 %v718, 4294901760
    %v720 = vsub.f32 %v718, %v719
    %v721 = vand.u32 %v720, 4294901760
    %722 = vmatpush1.msra.mxu0 %v721
    %723 = vmatprep.subr.mxu0 0.0
    %724 = vmatpush1.msra.mxu0 0.0
    %725 = vmatprep.subr.mxu0 0.0
    %726 = vmatpush1.msra.mxu0 0.0
    %727 = vmatprep.subr.mxu0 0.0
    %728 = vmatpush1.msra.mxu0 0.0
    %729 = vmatprep.subr.mxu0 0.0
    %730 = vmatpush1.msra.mxu0 0.0
    %731 = vmatprep.subr.mxu0 0.0
    %732 = vmatpush1.msra.mxu0 0.0
    %733 = vmatprep.subr.mxu0 0.0
    %734 = vmatpush1.msra.mxu0 0.0
    %735 = vmatprep.subr.mxu0 0.0
    %736 = vmatpush1.msra.mxu0 0.0
    %737 = vmatprep.subr.mxu0 0.0
    %738 = vmatpush1.msra.mxu0 0.0
    %739 = vmatprep.subr.mxu0 0.0
    %740 = vmatpush1.msra.mxu0 0.0
    %741 = vmatprep.subr.mxu0 0.0
    %742 = vmatpush1.msra.mxu0 0.0
    %743 = vmatprep.subr.mxu0 0.0
    %744 = vmatpush1.msra.mxu0 0.0
    %745 = vmatprep.subr.mxu0 0.0
    %746 = vmatpush1.msra.mxu0 0.0
    %747 = vmatprep.subr.mxu0 0.0
    %748 = vmatpush1.msra.mxu0 0.0
    %749 = vmatprep.subr.mxu0 0.0
    %750 = vmatpush1.msra.mxu0 0.0
    %751 = vmatprep.subr.mxu0 0.0
    %752 = vmatpush1.msra.mxu0 0.0
    %753 = vmatprep.subr.mxu0 0.0
    %754 = vmatpush1.msra.mxu0 0.0
    %755 = vmatprep.subr.mxu0 0.0
    %756 = vmatpush1.msra.mxu0 0.0
    %757 = vmatprep.subr.mxu0 0.0
    %758 = vmatpush1.msra.mxu0 0.0
    %759 = vmatprep.subr.mxu0 0.0
    %760 = vmatpush1.msra.mxu0 0.0
    %761 = vmatprep.subr.mxu0 0.0
    %762 = vmatpush1.msra.mxu0 0.0
    %763 = vmatprep.subr.mxu0 0.0
    %764 = vmatpush1.msra.mxu0 0.0
    %765 = vmatprep.subr.mxu0 0.0
    %766 = vmatpush1.msra.mxu0 0.0
    %767 = vmatprep.subr.mxu0 0.0
    %768 = vmatpush1.msra.mxu0 0.0
    %769 = vmatprep.subr.mxu0 0.0
    %770 = vmatpush1.msra.mxu0 0.0
    %771 = vmatprep.subr.mxu0 0.0
    %772 = vmatpush1.msra.mxu0 0.0
    %773 = vmatprep.subr.mxu0 0.0
    %774 = vmatpush1.msra.mxu0 0.0
    %775 = vmatprep.subr.mxu0 0.0
    %776 = vmatpush1.msra.mxu0 0.0
    %777 = vmatprep.subr.mxu0 0.0
    %778 = vmatpush1.msra.mxu0 0.0
    %779 = vmatprep.mubr.f32.mxu0 0.0
    %v780 = vand.u32 %v601, 4294901760
    %781 = vmatmul.mubr.f32.gmra.mrb[0].mxu0 %v780
    %v782 = vpop.f32.mrb[0].mxu0
    %v783 = vadd.f32 %v682, %v782
    %v784 = vpop.f32.mrb[0].mxu0
    %785 = vmatprep.mubr.f32.mxu0 0.0
    %v786 = vand.u32 %v604, 4294901760
    %787 = vmatmul.mubr.f32.gmra.mrb[0].mxu0 %v786
    %v788 = vpop.f32.mrb[0].mxu0
    %v789 = vadd.f32 %v692, %v788
    %v790 = vpop.f32.mrb[0].mxu0
    %791 = vdwg.mxu0
    %792 = vmatprep.subr.mxu0 0.0
    %v793 = vand.u32 %v596, 4294901760
    %v794 = vsub.f32 %v596, %v793
    %795 = vmatpush1.msra.mxu0 %v794
    %796 = vmatprep.subr.mxu0 0.0
    %v797 = vand.u32 %v597, 4294901760
    %v798 = vsub.f32 %v597, %v797
    %799 = vmatpush1.msra.mxu0 %v798
    %800 = vmatprep.subr.mxu0 0.0
    %v801 = vand.u32 %v598, 4294901760
    %v802 = vsub.f32 %v598, %v801
    %803 = vmatpush1.msra.mxu0 %v802
    %804 = vmatprep.subr.mxu0 0.0
    %v805 = vand.u32 %v599, 4294901760
    %v806 = vsub.f32 %v599, %v805
    %807 = vmatpush1.msra.mxu0 %v806
    %808 = vmatprep.subr.mxu0 0.0
    %809 = vmatpush1.msra.mxu0 0.0
    %810 = vmatprep.subr.mxu0 0.0
    %811 = vmatpush1.msra.mxu0 0.0
    %812 = vmatprep.subr.mxu0 0.0
    %813 = vmatpush1.msra.mxu0 0.0
    %814 = vmatprep.subr.mxu0 0.0
    %815 = vmatpush1.msra.mxu0 0.0
    %816 = vmatprep.subr.mxu0 0.0
    %817 = vmatpush1.msra.mxu0 0.0
    %818 = vmatprep.subr.mxu0 0.0
    %819 = vmatpush1.msra.mxu0 0.0
    %820 = vmatprep.subr.mxu0 0.0
    %821 = vmatpush1.msra.mxu0 0.0
    %822 = vmatprep.subr.mxu0 0.0
    %823 = vmatpush1.msra.mxu0 0.0
    %824 = vmatprep.subr.mxu0 0.0
    %825 = vmatpush1.msra.mxu0 0.0
    %826 = vmatprep.subr.mxu0 0.0
    %827 = vmatpush1.msra.mxu0 0.0
    %828 = vmatprep.subr.mxu0 0.0
    %829 = vmatpush1.msra.mxu0 0.0
    %830 = vmatprep.subr.mxu0 0.0
    %831 = vmatpush1.msra.mxu0 0.0
    %832 = vmatprep.subr.mxu0 0.0
    %833 = vmatpush1.msra.mxu0 0.0
    %834 = vmatprep.subr.mxu0 0.0
    %835 = vmatpush1.msra.mxu0 0.0
    %836 = vmatprep.subr.mxu0 0.0
    %837 = vmatpush1.msra.mxu0 0.0
    %838 = vmatprep.subr.mxu0 0.0
    %839 = vmatpush1.msra.mxu0 0.0
    %840 = vmatprep.subr.mxu0 0.0
    %841 = vmatpush1.msra.mxu0 0.0
    %842 = vmatprep.subr.mxu0 0.0
    %843 = vmatpush1.msra.mxu0 0.0
    %844 = vmatprep.subr.mxu0 0.0
    %845 = vmatpush1.msra.mxu0 0.0
    %846 = vmatprep.subr.mxu0 0.0
    %847 = vmatpush1.msra.mxu0 0.0
    %848 = vmatprep.subr.mxu0 0.0
    %849 = vmatpush1.msra.mxu0 0.0
    %850 = vmatprep.subr.mxu0 0.0
    %851 = vmatpush1.msra.mxu0 0.0
    %852 = vmatprep.subr.mxu0 0.0
    %853 = vmatpush1.msra.mxu0 0.0
    %854 = vmatprep.subr.mxu0 0.0
    %855 = vmatpush1.msra.mxu0 0.0
    %856 = vmatprep.subr.mxu0 0.0
    %857 = vmatpush1.msra.mxu0 0.0
    %858 = vmatprep.subr.mxu0 0.0
    %859 = vmatpush1.msra.mxu0 0.0
    %860 = vmatprep.subr.mxu0 0.0
    %861 = vmatpush1.msra.mxu0 0.0
    %862 = vmatprep.subr.mxu0 0.0
    %863 = vmatpush1.msra.mxu0 0.0
    %864 = vmatprep.mubr.f32.mxu0 0.0
    %v865 = vand.u32 %v601, 4294901760
    %v866 = vsub.f32 %v601, %v865
    %867 = vmatmul.mubr.f32.gmra.mrb[0].mxu0 %v866
    %v868 = vpop.f32.mrb[0].mxu0
    %v869 = vadd.f32 %v783, %v868
    %v870 = vpop.f32.mrb[0].mxu0
    %871 = vmatprep.mubr.f32.mxu0 0.0
    %v872 = vand.u32 %v604, 4294901760
    %v873 = vsub.f32 %v604, %v872
    %874 = vmatmul.mubr.f32.gmra.mrb[0].mxu0 %v873
    %v875 = vpop.f32.mrb[0].mxu0
    %v876 = vadd.f32 %v789, %v875
    %v877 = vpop.f32.mrb[0].mxu0
    %878 = vdwg.mxu0
    %879 = vmatprep.subr.mxu0 0.0
    %v880 = vand.u32 %v596, 4294901760
    %881 = vmatpush1.msra.mxu0 %v880
    %882 = vmatprep.subr.mxu0 0.0
    %v883 = vand.u32 %v597, 4294901760
    %884 = vmatpush1.msra.mxu0 %v883
    %885 = vmatprep.subr.mxu0 0.0
    %v886 = vand.u32 %v598, 4294901760
    %887 = vmatpush1.msra.mxu0 %v886
    %888 = vmatprep.subr.mxu0 0.0
    %v889 = vand.u32 %v599, 4294901760
    %890 = vmatpush1.msra.mxu0 %v889
    %891 = vmatprep.subr.mxu0 0.0
    %892 = vmatpush1.msra.mxu0 0.0
    %893 = vmatprep.subr.mxu0 0.0
    %894 = vmatpush1.msra.mxu0 0.0
    %895 = vmatprep.subr.mxu0 0.0
    %896 = vmatpush1.msra.mxu0 0.0
    %897 = vmatprep.subr.mxu0 0.0
    %898 = vmatpush1.msra.mxu0 0.0
    %899 = vmatprep.subr.mxu0 0.0
    %900 = vmatpush1.msra.mxu0 0.0
    %901 = vmatprep.subr.mxu0 0.0
    %902 = vmatpush1.msra.mxu0 0.0
    %903 = vmatprep.subr.mxu0 0.0
    %904 = vmatpush1.msra.mxu0 0.0
    %905 = vmatprep.subr.mxu0 0.0
    %906 = vmatpush1.msra.mxu0 0.0
    %907 = vmatprep.subr.mxu0 0.0
    %908 = vmatpush1.msra.mxu0 0.0
    %909 = vmatprep.subr.mxu0 0.0
    %910 = vmatpush1.msra.mxu0 0.0
    %911 = vmatprep.subr.mxu0 0.0
    %912 = vmatpush1.msra.mxu0 0.0
    %913 = vmatprep.subr.mxu0 0.0
    %914 = vmatpush1.msra.mxu0 0.0
    %915 = vmatprep.subr.mxu0 0.0
    %916 = vmatpush1.msra.mxu0 0.0
    %917 = vmatprep.subr.mxu0 0.0
    %918 = vmatpush1.msra.mxu0 0.0
    %919 = vmatprep.subr.mxu0 0.0
    %920 = vmatpush1.msra.mxu0 0.0
    %921 = vmatprep.subr.mxu0 0.0
    %922 = vmatpush1.msra.mxu0 0.0
    %923 = vmatprep.subr.mxu0 0.0
    %924 = vmatpush1.msra.mxu0 0.0
    %925 = vmatprep.subr.mxu0 0.0
    %926 = vmatpush1.msra.mxu0 0.0
    %927 = vmatprep.subr.mxu0 0.0
    %928 = vmatpush1.msra.mxu0 0.0
    %929 = vmatprep.subr.mxu0 0.0
    %930 = vmatpush1.msra.mxu0 0.0
    %931 = vmatprep.subr.mxu0 0.0
    %932 = vmatpush1.msra.mxu0 0.0
    %933 = vmatprep.subr.mxu0 0.0
    %934 = vmatpush1.msra.mxu0 0.0
    %935 = vmatprep.subr.mxu0 0.0
    %936 = vmatpush1.msra.mxu0 0.0
    %937 = vmatprep.subr.mxu0 0.0
    %938 = vmatpush1.msra.mxu0 0.0
    %939 = vmatprep.subr.mxu0 0.0
    %940 = vmatpush1.msra.mxu0 0.0
    %941 = vmatprep.subr.mxu0 0.0
    %942 = vmatpush1.msra.mxu0 0.0
    %943 = vmatprep.subr.mxu0 0.0
    %944 = vmatpush1.msra.mxu0 0.0
    %945 = vmatprep.subr.mxu0 0.0
    %946 = vmatpush1.msra.mxu0 0.0
    %947 = vmatprep.mubr.f32.mxu0 0.0
    %v948 = vand.u32 %v601, 4294901760
    %v949 = vsub.f32 %v601, %v948
    %v950 = vand.u32 %v949, 4294901760
    %951 = vmatmul.mubr.f32.gmra.mrb[0].mxu0 %v950
    %v952 = vpop.f32.mrb[0].mxu0
    %v953 = vadd.f32 %v869, %v952
    %v954 = vpop.f32.mrb[0].mxu0
    %955 = vmatprep.mubr.f32.mxu0 0.0
    %v956 = vand.u32 %v604, 4294901760
    %v957 = vsub.f32 %v604, %v956
    %v958 = vand.u32 %v957, 4294901760
    %959 = vmatmul.mubr.f32.gmra.mrb[0].mxu0 %v958
    %v960 = vpop.f32.mrb[0].mxu0
    %v961 = vadd.f32 %v876, %v960
    %v962 = vpop.f32.mrb[0].mxu0
    %963 = vdwg.mxu0
    %964 = vmatprep.subr.mxu0 0.0
    %v965 = vand.u32 %v596, 4294901760
    %v966 = vsub.f32 %v596, %v965
    %v967 = vand.u32 %v966, 4294901760
    %968 = vmatpush1.msra.mxu0 %v967
    %969 = vmatprep.subr.mxu0 0.0
    %v970 = vand.u32 %v597, 4294901760
    %v971 = vsub.f32 %v597, %v970
    %v972 = vand.u32 %v971, 4294901760
    %973 = vmatpush1.msra.mxu0 %v972
    %974 = vmatprep.subr.mxu0 0.0
    %v975 = vand.u32 %v598, 4294901760
    %v976 = vsub.f32 %v598, %v975
    %v977 = vand.u32 %v976, 4294901760
    %978 = vmatpush1.msra.mxu0 %v977
    %979 = vmatprep.subr.mxu0 0.0
    %v980 = vand.u32 %v599, 4294901760
    %v981 = vsub.f32 %v599, %v980
    %v982 = vand.u32 %v981, 4294901760
    %983 = vmatpush1.msra.mxu0 %v982
    %984 = vmatprep.subr.mxu0 0.0
    %985 = vmatpush1.msra.mxu0 0.0
    %986 = vmatprep.subr.mxu0 0.0
    %987 = vmatpush1.msra.mxu0 0.0
    %988 = vmatprep.subr.mxu0 0.0
    %989 = vmatpush1.msra.mxu0 0.0
    %990 = vmatprep.subr.mxu0 0.0
    %991 = vmatpush1.msra.mxu0 0.0
    %992 = vmatprep.subr.mxu0 0.0
    %993 = vmatpush1.msra.mxu0 0.0
    %994 = vmatprep.subr.mxu0 0.0
    %995 = vmatpush1.msra.mxu0 0.0
    %996 = vmatprep.subr.mxu0 0.0
    %997 = vmatpush1.msra.mxu0 0.0
    %998 = vmatprep.subr.mxu0 0.0
    %999 = vmatpush1.msra.mxu0 0.0
    %1000 = vmatprep.subr.mxu0 0.0
    %1001 = vmatpush1.msra.mxu0 0.0
    %1002 = vmatprep.subr.mxu0 0.0
    %1003 = vmatpush1.msra.mxu0 0.0
    %1004 = vmatprep.subr.mxu0 0.0
    %1005 = vmatpush1.msra.mxu0 0.0
    %1006 = vmatprep.subr.mxu0 0.0
    %1007 = vmatpush1.msra.mxu0 0.0
    %1008 = vmatprep.subr.mxu0 0.0
    %1009 = vmatpush1.msra.mxu0 0.0
    %1010 = vmatprep.subr.mxu0 0.0
    %1011 = vmatpush1.msra.mxu0 0.0
    %1012 = vmatprep.subr.mxu0 0.0
    %1013 = vmatpush1.msra.mxu0 0.0
    %1014 = vmatprep.subr.mxu0 0.0
    %1015 = vmatpush1.msra.mxu0 0.0
    %1016 = vmatprep.subr.mxu0 0.0
    %1017 = vmatpush1.msra.mxu0 0.0
    %1018 = vmatprep.subr.mxu0 0.0
    %1019 = vmatpush1.msra.mxu0 0.0
    %1020 = vmatprep.subr.mxu0 0.0
    %1021 = vmatpush1.msra.mxu0 0.0
    %1022 = vmatprep.subr.mxu0 0.0
    %1023 = vmatpush1.msra.mxu0 0.0
    %1024 = vmatprep.subr.mxu0 0.0
    %1025 = vmatpush1.msra.mxu0 0.0
    %1026 = vmatprep.subr.mxu0 0.0
    %1027 = vmatpush1.msra.mxu0 0.0
    %1028 = vmatprep.subr.mxu0 0.0
    %1029 = vmatpush1.msra.mxu0 0.0
    %1030 = vmatprep.subr.mxu0 0.0
    %1031 = vmatpush1.msra.mxu0 0.0
    %1032 = vmatprep.subr.mxu0 0.0
    %1033 = vmatpush1.msra.mxu0 0.0
    %1034 = vmatprep.subr.mxu0 0.0
    %1035 = vmatpush1.msra.mxu0 0.0
    %1036 = vmatprep.subr.mxu0 0.0
    %1037 = vmatpush1.msra.mxu0 0.0
    %1038 = vmatprep.subr.mxu0 0.0
    %1039 = vmatpush1.msra.mxu0 0.0
    %1040 = vmatprep.mubr.f32.mxu0 0.0
    %v1041 = vand.u32 %v601, 4294901760
    %1042 = vmatmul.mubr.f32.gmra.mrb[0].mxu0 %v1041
    %v1043 = vpop.f32.mrb[0].mxu0
    %v1044 = vadd.f32 %v953, %v1043
    %v1045 = vpop.f32.mrb[0].mxu0
    %1046 = vmatprep.mubr.f32.mxu0 0.0
    %v1047 = vand.u32 %v604, 4294901760
    %1048 = vmatmul.mubr.f32.gmra.mrb[0].mxu0 %v1047
    %v1049 = vpop.f32.mrb[0].mxu0
    %v1050 = vadd.f32 %v961, %v1049
    %v1051 = vpop.f32.mrb[0].mxu0
    %1052 = vdwg.mxu0
    %1053 = vmatprep.subr.mxu0 0.0
    %v1054 = vand.u32 %v596, 4294901760
    %1055 = vmatpush1.msra.mxu0 %v1054
    %1056 = vmatprep.subr.mxu0 0.0
    %v1057 = vand.u32 %v597, 4294901760
    %1058 = vmatpush1.msra.mxu0 %v1057
    %1059 = vmatprep.subr.mxu0 0.0
    %v1060 = vand.u32 %v598, 4294901760
    %1061 = vmatpush1.msra.mxu0 %v1060
    %1062 = vmatprep.subr.mxu0 0.0
    %v1063 = vand.u32 %v599, 4294901760
    %1064 = vmatpush1.msra.mxu0 %v1063
    %1065 = vmatprep.subr.mxu0 0.0
    %1066 = vmatpush1.msra.mxu0 0.0
    %1067 = vmatprep.subr.mxu0 0.0
    %1068 = vmatpush1.msra.mxu0 0.0
    %1069 = vmatprep.subr.mxu0 0.0
    %1070 = vmatpush1.msra.mxu0 0.0
    %1071 = vmatprep.subr.mxu0 0.0
    %1072 = vmatpush1.msra.mxu0 0.0
    %1073 = vmatprep.subr.mxu0 0.0
    %1074 = vmatpush1.msra.mxu0 0.0
    %1075 = vmatprep.subr.mxu0 0.0
    %1076 = vmatpush1.msra.mxu0 0.0
    %1077 = vmatprep.subr.mxu0 0.0
    %1078 = vmatpush1.msra.mxu0 0.0
    %1079 = vmatprep.subr.mxu0 0.0
    %1080 = vmatpush1.msra.mxu0 0.0
    %1081 = vmatprep.subr.mxu0 0.0
    %1082 = vmatpush1.msra.mxu0 0.0
    %1083 = vmatprep.subr.mxu0 0.0
    %1084 = vmatpush1.msra.mxu0 0.0
    %1085 = vmatprep.subr.mxu0 0.0
    %1086 = vmatpush1.msra.mxu0 0.0
    %1087 = vmatprep.subr.mxu0 0.0
    %1088 = vmatpush1.msra.mxu0 0.0
    %1089 = vmatprep.subr.mxu0 0.0
    %1090 = vmatpush1.msra.mxu0 0.0
    %1091 = vmatprep.subr.mxu0 0.0
    %1092 = vmatpush1.msra.mxu0 0.0
    %1093 = vmatprep.subr.mxu0 0.0
    %1094 = vmatpush1.msra.mxu0 0.0
    %1095 = vmatprep.subr.mxu0 0.0
    %1096 = vmatpush1.msra.mxu0 0.0
    %1097 = vmatprep.subr.mxu0 0.0
    %1098 = vmatpush1.msra.mxu0 0.0
    %1099 = vmatprep.subr.mxu0 0.0
    %1100 = vmatpush1.msra.mxu0 0.0
    %1101 = vmatprep.subr.mxu0 0.0
    %1102 = vmatpush1.msra.mxu0 0.0
    %1103 = vmatprep.subr.mxu0 0.0
    %1104 = vmatpush1.msra.mxu0 0.0
    %1105 = vmatprep.subr.mxu0 0.0
    %1106 = vmatpush1.msra.mxu0 0.0
    %1107 = vmatprep.subr.mxu0 0.0
    %1108 = vmatpush1.msra.mxu0 0.0
    %1109 = vmatprep.subr.mxu0 0.0
    %1110 = vmatpush1.msra.mxu0 0.0
    %1111 = vmatprep.subr.mxu0 0.0
    %1112 = vmatpush1.msra.mxu0 0.0
    %1113 = vmatprep.subr.mxu0 0.0
    %1114 = vmatpush1.msra.mxu0 0.0
    %1115 = vmatprep.subr.mxu0 0.0
    %1116 = vmatpush1.msra.mxu0 0.0
    %1117 = vmatprep.subr.mxu0 0.0
    %1118 = vmatpush1.msra.mxu0 0.0
    %1119 = vmatprep.subr.mxu0 0.0
    %1120 = vmatpush1.msra.mxu0 0.0
    %1121 = vmatprep.mubr.f32.mxu0 0.0
    %v1122 = vand.u32 %v601, 4294901760
    %1123 = vmatmul.mubr.f32.gmra.mrb[0].mxu0 %v1122
    %v1124 = vpop.f32.mrb[0].mxu0
    %v1125 = vadd.f32 %v1044, %v1124
    %v1126 = vpop.f32.mrb[0].mxu0
    %1127 = vmatprep.mubr.f32.mxu0 0.0
    %v1128 = vand.u32 %v604, 4294901760
    %1129 = vmatmul.mubr.f32.gmra.mrb[0].mxu0 %v1128
    %v1130 = vpop.f32.mrb[0].mxu0
    %v1131 = vadd.f32 %v1050, %v1130
    %v1132 = vpop.f32.mrb[0].mxu0
    %1133 = vdwg.mxu0
    %1136 = vrot.lane.b32.xlu0 %v1125, 32
    %v1137 = vpop.permute.xlu0 %1136
    %1138 = vrot.lane.b32.xlu0 %v1131, 32
    %v1139 = vpop.permute.xlu0 %1138
    %vm1142 = vcmask 523520
    %1143 = vst.msk [vmem:[#allocation5] sm:$0xff] %vm1142, %v1137
    %1144 = vst.msk [vmem:[#allocation5 + $0x8] sm:$0xff] %vm1142, %v1139
    %1145 = vset.pattern.permute.xlu0 2
    %1146 = vperm.xlu0 %1145, %v26
    %v1147 = vpop.permute.xlu0 %1146
    %1148 = vset.pattern.permute.xlu0 2
    %1149 = vperm.xlu0 %1148, %v27
    %v1150 = vpop.permute.xlu0 %1149
    %vm1151 = vcmp.eq.s32.totalorder %v1147, %v29
    %vm1152 = vcmp.eq.s32.totalorder %v1150, %v29
    %v1153 = vsel %vm1151, 1, 0
    %v1154 = vsel %vm1152, 1, 0
    %v1155 = vcvt.s32.f32 %v1153
    %v1156 = vcvt.s32.f32 %v1154
    %s1157 = scalar_lea.vmem [#allocation2], 64
    %v1158 = vld [vmem:[%s1157] sm:$0xff]
    %v1159 = vld [vmem:[%s1157 + $0x8] sm:$0xff]
    %v1160 = vld [vmem:[%s1157 + $0x10] sm:$0xff]
    %v1161 = vld [vmem:[%s1157 + $0x18] sm:$0xff]
    %v1163 = vsel %vm46, %v1155, 0
    %v1166 = vsel %vm46, %v1156, 0
    %1168 = vmatprep.subr.mxu0 0.0
    %v1169 = vand.u32 %v1158, 4294901760
    %1170 = vmatpush1.msra.mxu0 %v1169
    %1171 = vmatprep.subr.mxu0 0.0
    %v1172 = vand.u32 %v1159, 4294901760
    %1173 = vmatpush1.msra.mxu0 %v1172
    %1174 = vmatprep.subr.mxu0 0.0
    %v1175 = vand.u32 %v1160, 4294901760
    %1176 = vmatpush1.msra.mxu0 %v1175
    %1177 = vmatprep.subr.mxu0 0.0
    %v1178 = vand.u32 %v1161, 4294901760
    %1179 = vmatpush1.msra.mxu0 %v1178
    %1180 = vmatprep.subr.mxu0 0.0
    %1181 = vmatpush1.msra.mxu0 0.0
    %1182 = vmatprep.subr.mxu0 0.0
    %1183 = vmatpush1.msra.mxu0 0.0
    %1184 = vmatprep.subr.mxu0 0.0
    %1185 = vmatpush1.msra.mxu0 0.0
    %1186 = vmatprep.subr.mxu0 0.0
    %1187 = vmatpush1.msra.mxu0 0.0
    %1188 = vmatprep.subr.mxu0 0.0
    %1189 = vmatpush1.msra.mxu0 0.0
    %1190 = vmatprep.subr.mxu0 0.0
    %1191 = vmatpush1.msra.mxu0 0.0
    %1192 = vmatprep.subr.mxu0 0.0
    %1193 = vmatpush1.msra.mxu0 0.0
    %1194 = vmatprep.subr.mxu0 0.0
    %1195 = vmatpush1.msra.mxu0 0.0
    %1196 = vmatprep.subr.mxu0 0.0
    %1197 = vmatpush1.msra.mxu0 0.0
    %1198 = vmatprep.subr.mxu0 0.0
    %1199 = vmatpush1.msra.mxu0 0.0
    %1200 = vmatprep.subr.mxu0 0.0
    %1201 = vmatpush1.msra.mxu0 0.0
    %1202 = vmatprep.subr.mxu0 0.0
    %1203 = vmatpush1.msra.mxu0 0.0
    %1204 = vmatprep.subr.mxu0 0.0
    %1205 = vmatpush1.msra.mxu0 0.0
    %1206 = vmatprep.subr.mxu0 0.0
    %1207 = vmatpush1.msra.mxu0 0.0
    %1208 = vmatprep.subr.mxu0 0.0
    %1209 = vmatpush1.msra.mxu0 0.0
    %1210 = vmatprep.subr.mxu0 0.0
    %1211 = vmatpush1.msra.mxu0 0.0
    %1212 = vmatprep.subr.mxu0 0.0
    %1213 = vmatpush1.msra.mxu0 0.0
    %1214 = vmatprep.subr.mxu0 0.0
    %1215 = vmatpush1.msra.mxu0 0.0
    %1216 = vmatprep.subr.mxu0 0.0
    %1217 = vmatpush1.msra.mxu0 0.0
    %1218 = vmatprep.subr.mxu0 0.0
    %1219 = vmatpush1.msra.mxu0 0.0
    %1220 = vmatprep.subr.mxu0 0.0
    %1221 = vmatpush1.msra.mxu0 0.0
    %1222 = vmatprep.subr.mxu0 0.0
    %1223 = vmatpush1.msra.mxu0 0.0
    %1224 = vmatprep.subr.mxu0 0.0
    %1225 = vmatpush1.msra.mxu0 0.0
    %1226 = vmatprep.subr.mxu0 0.0
    %1227 = vmatpush1.msra.mxu0 0.0
    %1228 = vmatprep.subr.mxu0 0.0
    %1229 = vmatpush1.msra.mxu0 0.0
    %1230 = vmatprep.subr.mxu0 0.0
    %1231 = vmatpush1.msra.mxu0 0.0
    %1232 = vmatprep.subr.mxu0 0.0
    %1233 = vmatpush1.msra.mxu0 0.0
    %1234 = vmatprep.subr.mxu0 0.0
    %1235 = vmatpush1.msra.mxu0 0.0
    %1236 = vmatprep.mubr.f32.mxu0 0.0
    %v1237 = vand.u32 %v1163, 4294901760
    %v1238 = vsub.f32 %v1163, %v1237
    %v1239 = vand.u32 %v1238, 4294901760
    %v1240 = vsub.f32 %v1238, %v1239
    %v1241 = vand.u32 %v1240, 4294901760
    %1242 = vmatmul.mubr.f32.gmra.mrb[0].mxu0 %v1241
    %v1243 = vpop.f32.mrb[0].mxu0
    %v1244 = vadd.f32 0.0, %v1243
    %v1245 = vpop.f32.mrb[0].mxu0
    %1246 = vmatprep.mubr.f32.mxu0 0.0
    %v1247 = vand.u32 %v1166, 4294901760
    %v1248 = vsub.f32 %v1166, %v1247
    %v1249 = vand.u32 %v1248, 4294901760
    %v1250 = vsub.f32 %v1248, %v1249
    %v1251 = vand.u32 %v1250, 4294901760
    %1252 = vmatmul.mubr.f32.gmra.mrb[0].mxu0 %v1251
    %v1253 = vpop.f32.mrb[0].mxu0
    %v1254 = vadd.f32 0.0, %v1253
    %v1255 = vpop.f32.mrb[0].mxu0
    %1256 = vdwg.mxu0
    %1257 = vmatprep.subr.mxu0 0.0
    %v1258 = vand.u32 %v1158, 4294901760
    %v1259 = vsub.f32 %v1158, %v1258
    %v1260 = vand.u32 %v1259, 4294901760
    %v1261 = vsub.f32 %v1259, %v1260
    %v1262 = vand.u32 %v1261, 4294901760
    %1263 = vmatpush1.msra.mxu0 %v1262
    %1264 = vmatprep.subr.mxu0 0.0
    %v1265 = vand.u32 %v1159, 4294901760
    %v1266 = vsub.f32 %v1159, %v1265
    %v1267 = vand.u32 %v1266, 4294901760
    %v1268 = vsub.f32 %v1266, %v1267
    %v1269 = vand.u32 %v1268, 4294901760
    %1270 = vmatpush1.msra.mxu0 %v1269
    %1271 = vmatprep.subr.mxu0 0.0
    %v1272 = vand.u32 %v1160, 4294901760
    %v1273 = vsub.f32 %v1160, %v1272
    %v1274 = vand.u32 %v1273, 4294901760
    %v1275 = vsub.f32 %v1273, %v1274
    %v1276 = vand.u32 %v1275, 4294901760
    %1277 = vmatpush1.msra.mxu0 %v1276
    %1278 = vmatprep.subr.mxu0 0.0
    %v1279 = vand.u32 %v1161, 4294901760
    %v1280 = vsub.f32 %v1161, %v1279
    %v1281 = vand.u32 %v1280, 4294901760
    %v1282 = vsub.f32 %v1280, %v1281
    %v1283 = vand.u32 %v1282, 4294901760
    %1284 = vmatpush1.msra.mxu0 %v1283
    %1285 = vmatprep.subr.mxu0 0.0
    %1286 = vmatpush1.msra.mxu0 0.0
    %1287 = vmatprep.subr.mxu0 0.0
    %1288 = vmatpush1.msra.mxu0 0.0
    %1289 = vmatprep.subr.mxu0 0.0
    %1290 = vmatpush1.msra.mxu0 0.0
    %1291 = vmatprep.subr.mxu0 0.0
    %1292 = vmatpush1.msra.mxu0 0.0
    %1293 = vmatprep.subr.mxu0 0.0
    %1294 = vmatpush1.msra.mxu0 0.0
    %1295 = vmatprep.subr.mxu0 0.0
    %1296 = vmatpush1.msra.mxu0 0.0
    %1297 = vmatprep.subr.mxu0 0.0
    %1298 = vmatpush1.msra.mxu0 0.0
    %1299 = vmatprep.subr.mxu0 0.0
    %1300 = vmatpush1.msra.mxu0 0.0
    %1301 = vmatprep.subr.mxu0 0.0
    %1302 = vmatpush1.msra.mxu0 0.0
    %1303 = vmatprep.subr.mxu0 0.0
    %1304 = vmatpush1.msra.mxu0 0.0
    %1305 = vmatprep.subr.mxu0 0.0
    %1306 = vmatpush1.msra.mxu0 0.0
    %1307 = vmatprep.subr.mxu0 0.0
    %1308 = vmatpush1.msra.mxu0 0.0
    %1309 = vmatprep.subr.mxu0 0.0
    %1310 = vmatpush1.msra.mxu0 0.0
    %1311 = vmatprep.subr.mxu0 0.0
    %1312 = vmatpush1.msra.mxu0 0.0
    %1313 = vmatprep.subr.mxu0 0.0
    %1314 = vmatpush1.msra.mxu0 0.0
    %1315 = vmatprep.subr.mxu0 0.0
    %1316 = vmatpush1.msra.mxu0 0.0
    %1317 = vmatprep.subr.mxu0 0.0
    %1318 = vmatpush1.msra.mxu0 0.0
    %1319 = vmatprep.subr.mxu0 0.0
    %1320 = vmatpush1.msra.mxu0 0.0
    %1321 = vmatprep.subr.mxu0 0.0
    %1322 = vmatpush1.msra.mxu0 0.0
    %1323 = vmatprep.subr.mxu0 0.0
    %1324 = vmatpush1.msra.mxu0 0.0
    %1325 = vmatprep.subr.mxu0 0.0
    %1326 = vmatpush1.msra.mxu0 0.0
    %1327 = vmatprep.subr.mxu0 0.0
    %1328 = vmatpush1.msra.mxu0 0.0
    %1329 = vmatprep.subr.mxu0 0.0
    %1330 = vmatpush1.msra.mxu0 0.0
    %1331 = vmatprep.subr.mxu0 0.0
    %1332 = vmatpush1.msra.mxu0 0.0
    %1333 = vmatprep.subr.mxu0 0.0
    %1334 = vmatpush1.msra.mxu0 0.0
    %1335 = vmatprep.subr.mxu0 0.0
    %1336 = vmatpush1.msra.mxu0 0.0
    %1337 = vmatprep.subr.mxu0 0.0
    %1338 = vmatpush1.msra.mxu0 0.0
    %1339 = vmatprep.subr.mxu0 0.0
    %1340 = vmatpush1.msra.mxu0 0.0
    %1341 = vmatprep.mubr.f32.mxu0 0.0
    %v1342 = vand.u32 %v1163, 4294901760
    %1343 = vmatmul.mubr.f32.gmra.mrb[0].mxu0 %v1342
    %v1344 = vpop.f32.mrb[0].mxu0
    %v1345 = vadd.f32 %v1244, %v1344
    %v1346 = vpop.f32.mrb[0].mxu0
    %1347 = vmatprep.mubr.f32.mxu0 0.0
    %v1348 = vand.u32 %v1166, 4294901760
    %1349 = vmatmul.mubr.f32.gmra.mrb[0].mxu0 %v1348
    %v1350 = vpop.f32.mrb[0].mxu0
    %v1351 = vadd.f32 %v1254, %v1350
    %v1352 = vpop.f32.mrb[0].mxu0
    %1353 = vdwg.mxu0
    %1354 = vmatprep.subr.mxu0 0.0
    %v1355 = vand.u32 %v1158, 4294901760
    %v1356 = vsub.f32 %v1158, %v1355
    %1357 = vmatpush1.msra.mxu0 %v1356
    %1358 = vmatprep.subr.mxu0 0.0
    %v1359 = vand.u32 %v1159, 4294901760
    %v1360 = vsub.f32 %v1159, %v1359
    %1361 = vmatpush1.msra.mxu0 %v1360
    %1362 = vmatprep.subr.mxu0 0.0
    %v1363 = vand.u32 %v1160, 4294901760
    %v1364 = vsub.f32 %v1160, %v1363
    %1365 = vmatpush1.msra.mxu0 %v1364
    %1366 = vmatprep.subr.mxu0 0.0
    %v1367 = vand.u32 %v1161, 4294901760
    %v1368 = vsub.f32 %v1161, %v1367
    %1369 = vmatpush1.msra.mxu0 %v1368
    %1370 = vmatprep.subr.mxu0 0.0
    %1371 = vmatpush1.msra.mxu0 0.0
    %1372 = vmatprep.subr.mxu0 0.0
    %1373 = vmatpush1.msra.mxu0 0.0
    %1374 = vmatprep.subr.mxu0 0.0
    %1375 = vmatpush1.msra.mxu0 0.0
    %1376 = vmatprep.subr.mxu0 0.0
    %1377 = vmatpush1.msra.mxu0 0.0
    %1378 = vmatprep.subr.mxu0 0.0
    %1379 = vmatpush1.msra.mxu0 0.0
    %1380 = vmatprep.subr.mxu0 0.0
    %1381 = vmatpush1.msra.mxu0 0.0
    %1382 = vmatprep.subr.mxu0 0.0
    %1383 = vmatpush1.msra.mxu0 0.0
    %1384 = vmatprep.subr.mxu0 0.0
    %1385 = vmatpush1.msra.mxu0 0.0
    %1386 = vmatprep.subr.mxu0 0.0
    %1387 = vmatpush1.msra.mxu0 0.0
    %1388 = vmatprep.subr.mxu0 0.0
    %1389 = vmatpush1.msra.mxu0 0.0
    %1390 = vmatprep.subr.mxu0 0.0
    %1391 = vmatpush1.msra.mxu0 0.0
    %1392 = vmatprep.subr.mxu0 0.0
    %1393 = vmatpush1.msra.mxu0 0.0
    %1394 = vmatprep.subr.mxu0 0.0
    %1395 = vmatpush1.msra.mxu0 0.0
    %1396 = vmatprep.subr.mxu0 0.0
    %1397 = vmatpush1.msra.mxu0 0.0
    %1398 = vmatprep.subr.mxu0 0.0
    %1399 = vmatpush1.msra.mxu0 0.0
    %1400 = vmatprep.subr.mxu0 0.0
    %1401 = vmatpush1.msra.mxu0 0.0
    %1402 = vmatprep.subr.mxu0 0.0
    %1403 = vmatpush1.msra.mxu0 0.0
    %1404 = vmatprep.subr.mxu0 0.0
    %1405 = vmatpush1.msra.mxu0 0.0
    %1406 = vmatprep.subr.mxu0 0.0
    %1407 = vmatpush1.msra.mxu0 0.0
    %1408 = vmatprep.subr.mxu0 0.0
    %1409 = vmatpush1.msra.mxu0 0.0
    %1410 = vmatprep.subr.mxu0 0.0
    %1411 = vmatpush1.msra.mxu0 0.0
    %1412 = vmatprep.subr.mxu0 0.0
    %1413 = vmatpush1.msra.mxu0 0.0
    %1414 = vmatprep.subr.mxu0 0.0
    %1415 = vmatpush1.msra.mxu0 0.0
    %1416 = vmatprep.subr.mxu0 0.0
    %1417 = vmatpush1.msra.mxu0 0.0
    %1418 = vmatprep.subr.mxu0 0.0
    %1419 = vmatpush1.msra.mxu0 0.0
    %1420 = vmatprep.subr.mxu0 0.0
    %1421 = vmatpush1.msra.mxu0 0.0
    %1422 = vmatprep.subr.mxu0 0.0
    %1423 = vmatpush1.msra.mxu0 0.0
    %1424 = vmatprep.subr.mxu0 0.0
    %1425 = vmatpush1.msra.mxu0 0.0
    %1426 = vmatprep.mubr.f32.mxu0 0.0
    %v1427 = vand.u32 %v1163, 4294901760
    %v1428 = vsub.f32 %v1163, %v1427
    %1429 = vmatmul.mubr.f32.gmra.mrb[0].mxu0 %v1428
    %v1430 = vpop.f32.mrb[0].mxu0
    %v1431 = vadd.f32 %v1345, %v1430
    %v1432 = vpop.f32.mrb[0].mxu0
    %1433 = vmatprep.mubr.f32.mxu0 0.0
    %v1434 = vand.u32 %v1166, 4294901760
    %v1435 = vsub.f32 %v1166, %v1434
    %1436 = vmatmul.mubr.f32.gmra.mrb[0].mxu0 %v1435
    %v1437 = vpop.f32.mrb[0].mxu0
    %v1438 = vadd.f32 %v1351, %v1437
    %v1439 = vpop.f32.mrb[0].mxu0
    %1440 = vdwg.mxu0
    %1441 = vmatprep.subr.mxu0 0.0
    %v1442 = vand.u32 %v1158, 4294901760
    %1443 = vmatpush1.msra.mxu0 %v1442
    %1444 = vmatprep.subr.mxu0 0.0
    %v1445 = vand.u32 %v1159, 4294901760
    %1446 = vmatpush1.msra.mxu0 %v1445
    %1447 = vmatprep.subr.mxu0 0.0
    %v1448 = vand.u32 %v1160, 4294901760
    %1449 = vmatpush1.msra.mxu0 %v1448
    %1450 = vmatprep.subr.mxu0 0.0
    %v1451 = vand.u32 %v1161, 4294901760
    %1452 = vmatpush1.msra.mxu0 %v1451
    %1453 = vmatprep.subr.mxu0 0.0
    %1454 = vmatpush1.msra.mxu0 0.0
    %1455 = vmatprep.subr.mxu0 0.0
    %1456 = vmatpush1.msra.mxu0 0.0
    %1457 = vmatprep.subr.mxu0 0.0
    %1458 = vmatpush1.msra.mxu0 0.0
    %1459 = vmatprep.subr.mxu0 0.0
    %1460 = vmatpush1.msra.mxu0 0.0
    %1461 = vmatprep.subr.mxu0 0.0
    %1462 = vmatpush1.msra.mxu0 0.0
    %1463 = vmatprep.subr.mxu0 0.0
    %1464 = vmatpush1.msra.mxu0 0.0
    %1465 = vmatprep.subr.mxu0 0.0
    %1466 = vmatpush1.msra.mxu0 0.0
    %1467 = vmatprep.subr.mxu0 0.0
    %1468 = vmatpush1.msra.mxu0 0.0
    %1469 = vmatprep.subr.mxu0 0.0
    %1470 = vmatpush1.msra.mxu0 0.0
    %1471 = vmatprep.subr.mxu0 0.0
    %1472 = vmatpush1.msra.mxu0 0.0
    %1473 = vmatprep.subr.mxu0 0.0
    %1474 = vmatpush1.msra.mxu0 0.0
    %1475 = vmatprep.subr.mxu0 0.0
    %1476 = vmatpush1.msra.mxu0 0.0
    %1477 = vmatprep.subr.mxu0 0.0
    %1478 = vmatpush1.msra.mxu0 0.0
    %1479 = vmatprep.subr.mxu0 0.0
    %1480 = vmatpush1.msra.mxu0 0.0
    %1481 = vmatprep.subr.mxu0 0.0
    %1482 = vmatpush1.msra.mxu0 0.0
    %1483 = vmatprep.subr.mxu0 0.0
    %1484 = vmatpush1.msra.mxu0 0.0
    %1485 = vmatprep.subr.mxu0 0.0
    %1486 = vmatpush1.msra.mxu0 0.0
    %1487 = vmatprep.subr.mxu0 0.0
    %1488 = vmatpush1.msra.mxu0 0.0
    %1489 = vmatprep.subr.mxu0 0.0
    %1490 = vmatpush1.msra.mxu0 0.0
    %1491 = vmatprep.subr.mxu0 0.0
    %1492 = vmatpush1.msra.mxu0 0.0
    %1493 = vmatprep.subr.mxu0 0.0
    %1494 = vmatpush1.msra.mxu0 0.0
    %1495 = vmatprep.subr.mxu0 0.0
    %1496 = vmatpush1.msra.mxu0 0.0
    %1497 = vmatprep.subr.mxu0 0.0
    %1498 = vmatpush1.msra.mxu0 0.0
    %1499 = vmatprep.subr.mxu0 0.0
    %1500 = vmatpush1.msra.mxu0 0.0
    %1501 = vmatprep.subr.mxu0 0.0
    %1502 = vmatpush1.msra.mxu0 0.0
    %1503 = vmatprep.subr.mxu0 0.0
    %1504 = vmatpush1.msra.mxu0 0.0
    %1505 = vmatprep.subr.mxu0 0.0
    %1506 = vmatpush1.msra.mxu0 0.0
    %1507 = vmatprep.subr.mxu0 0.0
    %1508 = vmatpush1.msra.mxu0 0.0
    %1509 = vmatprep.mubr.f32.mxu0 0.0
    %v1510 = vand.u32 %v1163, 4294901760
    %v1511 = vsub.f32 %v1163, %v1510
    %v1512 = vand.u32 %v1511, 4294901760
    %1513 = vmatmul.mubr.f32.gmra.mrb[0].mxu0 %v1512
    %v1514 = vpop.f32.mrb[0].mxu0
    %v1515 = vadd.f32 %v1431, %v1514
    %v1516 = vpop.f32.mrb[0].mxu0
    %1517 = vmatprep.mubr.f32.mxu0 0.0
    %v1518 = vand.u32 %v1166, 4294901760
    %v1519 = vsub.f32 %v1166, %v1518
    %v1520 = vand.u32 %v1519, 4294901760
    %1521 = vmatmul.mubr.f32.gmra.mrb[0].mxu0 %v1520
    %v1522 = vpop.f32.mrb[0].mxu0
    %v1523 = vadd.f32 %v1438, %v1522
    %v1524 = vpop.f32.mrb[0].mxu0
    %1525 = vdwg.mxu0
    %1526 = vmatprep.subr.mxu0 0.0
    %v1527 = vand.u32 %v1158, 4294901760
    %v1528 = vsub.f32 %v1158, %v1527
    %v1529 = vand.u32 %v1528, 4294901760
    %1530 = vmatpush1.msra.mxu0 %v1529
    %1531 = vmatprep.subr.mxu0 0.0
    %v1532 = vand.u32 %v1159, 4294901760
    %v1533 = vsub.f32 %v1159, %v1532
    %v1534 = vand.u32 %v1533, 4294901760
    %1535 = vmatpush1.msra.mxu0 %v1534
    %1536 = vmatprep.subr.mxu0 0.0
    %v1537 = vand.u32 %v1160, 4294901760
    %v1538 = vsub.f32 %v1160, %v1537
    %v1539 = vand.u32 %v1538, 4294901760
    %1540 = vmatpush1.msra.mxu0 %v1539
    %1541 = vmatprep.subr.mxu0 0.0
    %v1542 = vand.u32 %v1161, 4294901760
    %v1543 = vsub.f32 %v1161, %v1542
    %v1544 = vand.u32 %v1543, 4294901760
    %1545 = vmatpush1.msra.mxu0 %v1544
    %1546 = vmatprep.subr.mxu0 0.0
    %1547 = vmatpush1.msra.mxu0 0.0
    %1548 = vmatprep.subr.mxu0 0.0
    %1549 = vmatpush1.msra.mxu0 0.0
    %1550 = vmatprep.subr.mxu0 0.0
    %1551 = vmatpush1.msra.mxu0 0.0
    %1552 = vmatprep.subr.mxu0 0.0
    %1553 = vmatpush1.msra.mxu0 0.0
    %1554 = vmatprep.subr.mxu0 0.0
    %1555 = vmatpush1.msra.mxu0 0.0
    %1556 = vmatprep.subr.mxu0 0.0
    %1557 = vmatpush1.msra.mxu0 0.0
    %1558 = vmatprep.subr.mxu0 0.0
    %1559 = vmatpush1.msra.mxu0 0.0
    %1560 = vmatprep.subr.mxu0 0.0
    %1561 = vmatpush1.msra.mxu0 0.0
    %1562 = vmatprep.subr.mxu0 0.0
    %1563 = vmatpush1.msra.mxu0 0.0
    %1564 = vmatprep.subr.mxu0 0.0
    %1565 = vmatpush1.msra.mxu0 0.0
    %1566 = vmatprep.subr.mxu0 0.0
    %1567 = vmatpush1.msra.mxu0 0.0
    %1568 = vmatprep.subr.mxu0 0.0
    %1569 = vmatpush1.msra.mxu0 0.0
    %1570 = vmatprep.subr.mxu0 0.0
    %1571 = vmatpush1.msra.mxu0 0.0
    %1572 = vmatprep.subr.mxu0 0.0
    %1573 = vmatpush1.msra.mxu0 0.0
    %1574 = vmatprep.subr.mxu0 0.0
    %1575 = vmatpush1.msra.mxu0 0.0
    %1576 = vmatprep.subr.mxu0 0.0
    %1577 = vmatpush1.msra.mxu0 0.0
    %1578 = vmatprep.subr.mxu0 0.0
    %1579 = vmatpush1.msra.mxu0 0.0
    %1580 = vmatprep.subr.mxu0 0.0
    %1581 = vmatpush1.msra.mxu0 0.0
    %1582 = vmatprep.subr.mxu0 0.0
    %1583 = vmatpush1.msra.mxu0 0.0
    %1584 = vmatprep.subr.mxu0 0.0
    %1585 = vmatpush1.msra.mxu0 0.0
    %1586 = vmatprep.subr.mxu0 0.0
    %1587 = vmatpush1.msra.mxu0 0.0
    %1588 = vmatprep.subr.mxu0 0.0
    %1589 = vmatpush1.msra.mxu0 0.0
    %1590 = vmatprep.subr.mxu0 0.0
    %1591 = vmatpush1.msra.mxu0 0.0
    %1592 = vmatprep.subr.mxu0 0.0
    %1593 = vmatpush1.msra.mxu0 0.0
    %1594 = vmatprep.subr.mxu0 0.0
    %1595 = vmatpush1.msra.mxu0 0.0
    %1596 = vmatprep.subr.mxu0 0.0
    %1597 = vmatpush1.msra.mxu0 0.0
    %1598 = vmatprep.subr.mxu0 0.0
    %1599 = vmatpush1.msra.mxu0 0.0
    %1600 = vmatprep.subr.mxu0 0.0
    %1601 = vmatpush1.msra.mxu0 0.0
    %1602 = vmatprep.mubr.f32.mxu0 0.0
    %v1603 = vand.u32 %v1163, 4294901760
    %1604 = vmatmul.mubr.f32.gmra.mrb[0].mxu0 %v1603
    %v1605 = vpop.f32.mrb[0].mxu0
    %v1606 = vadd.f32 %v1515, %v1605
    %v1607 = vpop.f32.mrb[0].mxu0
    %1608 = vmatprep.mubr.f32.mxu0 0.0
    %v1609 = vand.u32 %v1166, 4294901760
    %1610 = vmatmul.mubr.f32.gmra.mrb[0].mxu0 %v1609
    %v1611 = vpop.f32.mrb[0].mxu0
    %v1612 = vadd.f32 %v1523, %v1611
    %v1613 = vpop.f32.mrb[0].mxu0
    %1614 = vdwg.mxu0
    %1615 = vmatprep.subr.mxu0 0.0
    %v1616 = vand.u32 %v1158, 4294901760
    %1617 = vmatpush1.msra.mxu0 %v1616
    %1618 = vmatprep.subr.mxu0 0.0
    %v1619 = vand.u32 %v1159, 4294901760
    %1620 = vmatpush1.msra.mxu0 %v1619
    %1621 = vmatprep.subr.mxu0 0.0
    %v1622 = vand.u32 %v1160, 4294901760
    %1623 = vmatpush1.msra.mxu0 %v1622
    %1624 = vmatprep.subr.mxu0 0.0
    %v1625 = vand.u32 %v1161, 4294901760
    %1626 = vmatpush1.msra.mxu0 %v1625
    %1627 = vmatprep.subr.mxu0 0.0
    %1628 = vmatpush1.msra.mxu0 0.0
    %1629 = vmatprep.subr.mxu0 0.0
    %1630 = vmatpush1.msra.mxu0 0.0
    %1631 = vmatprep.subr.mxu0 0.0
    %1632 = vmatpush1.msra.mxu0 0.0
    %1633 = vmatprep.subr.mxu0 0.0
    %1634 = vmatpush1.msra.mxu0 0.0
    %1635 = vmatprep.subr.mxu0 0.0
    %1636 = vmatpush1.msra.mxu0 0.0
    %1637 = vmatprep.subr.mxu0 0.0
    %1638 = vmatpush1.msra.mxu0 0.0
    %1639 = vmatprep.subr.mxu0 0.0
    %1640 = vmatpush1.msra.mxu0 0.0
    %1641 = vmatprep.subr.mxu0 0.0
    %1642 = vmatpush1.msra.mxu0 0.0
    %1643 = vmatprep.subr.mxu0 0.0
    %1644 = vmatpush1.msra.mxu0 0.0
    %1645 = vmatprep.subr.mxu0 0.0
    %1646 = vmatpush1.msra.mxu0 0.0
    %1647 = vmatprep.subr.mxu0 0.0
    %1648 = vmatpush1.msra.mxu0 0.0
    %1649 = vmatprep.subr.mxu0 0.0
    %1650 = vmatpush1.msra.mxu0 0.0
    %1651 = vmatprep.subr.mxu0 0.0
    %1652 = vmatpush1.msra.mxu0 0.0
    %1653 = vmatprep.subr.mxu0 0.0
    %1654 = vmatpush1.msra.mxu0 0.0
    %1655 = vmatprep.subr.mxu0 0.0
    %1656 = vmatpush1.msra.mxu0 0.0
    %1657 = vmatprep.subr.mxu0 0.0
    %1658 = vmatpush1.msra.mxu0 0.0
    %1659 = vmatprep.subr.mxu0 0.0
    %1660 = vmatpush1.msra.mxu0 0.0
    %1661 = vmatprep.subr.mxu0 0.0
    %1662 = vmatpush1.msra.mxu0 0.0
    %1663 = vmatprep.subr.mxu0 0.0
    %1664 = vmatpush1.msra.mxu0 0.0
    %1665 = vmatprep.subr.mxu0 0.0
    %1666 = vmatpush1.msra.mxu0 0.0
    %1667 = vmatprep.subr.mxu0 0.0
    %1668 = vmatpush1.msra.mxu0 0.0
    %1669 = vmatprep.subr.mxu0 0.0
    %1670 = vmatpush1.msra.mxu0 0.0
    %1671 = vmatprep.subr.mxu0 0.0
    %1672 = vmatpush1.msra.mxu0 0.0
    %1673 = vmatprep.subr.mxu0 0.0
    %1674 = vmatpush1.msra.mxu0 0.0
    %1675 = vmatprep.subr.mxu0 0.0
    %1676 = vmatpush1.msra.mxu0 0.0
    %1677 = vmatprep.subr.mxu0 0.0
    %1678 = vmatpush1.msra.mxu0 0.0
    %1679 = vmatprep.subr.mxu0 0.0
    %1680 = vmatpush1.msra.mxu0 0.0
    %1681 = vmatprep.subr.mxu0 0.0
    %1682 = vmatpush1.msra.mxu0 0.0
    %1683 = vmatprep.mubr.f32.mxu0 0.0
    %v1684 = vand.u32 %v1163, 4294901760
    %1685 = vmatmul.mubr.f32.gmra.mrb[0].mxu0 %v1684
    %v1686 = vpop.f32.mrb[0].mxu0
    %v1687 = vadd.f32 %v1606, %v1686
    %v1688 = vpop.f32.mrb[0].mxu0
    %1689 = vmatprep.mubr.f32.mxu0 0.0
    %v1690 = vand.u32 %v1166, 4294901760
    %1691 = vmatmul.mubr.f32.gmra.mrb[0].mxu0 %v1690
    %v1692 = vpop.f32.mrb[0].mxu0
    %v1693 = vadd.f32 %v1612, %v1692
    %v1694 = vpop.f32.mrb[0].mxu0
    %1695 = vdwg.mxu0
    %1698 = vrot.lane.b32.xlu0 %v1687, 64
    %v1699 = vpop.permute.xlu0 %1698
    %1700 = vrot.lane.b32.xlu0 %v1693, 64
    %v1701 = vpop.permute.xlu0 %1700
    %vm1704 = vcmask 785920
    %1705 = vst.msk [vmem:[#allocation5] sm:$0xff] %vm1704, %v1699
    %1706 = vst.msk [vmem:[#allocation5 + $0x8] sm:$0xff] %vm1704, %v1701
    %1707 = vset.pattern.permute.xlu0 3
    %1708 = vperm.xlu0 %1707, %v26
    %v1709 = vpop.permute.xlu0 %1708
    %1710 = vset.pattern.permute.xlu0 3
    %1711 = vperm.xlu0 %1710, %v27
    %v1712 = vpop.permute.xlu0 %1711
    %vm1713 = vcmp.eq.s32.totalorder %v1709, %v29
    %vm1714 = vcmp.eq.s32.totalorder %v1712, %v29
    %v1715 = vsel %vm1713, 1, 0
    %v1716 = vsel %vm1714, 1, 0
    %v1717 = vcvt.s32.f32 %v1715
    %v1718 = vcvt.s32.f32 %v1716
    %s1719 = scalar_lea.vmem [#allocation2], 96
    %v1720 = vld [vmem:[%s1719] sm:$0xff]
    %v1721 = vld [vmem:[%s1719 + $0x8] sm:$0xff]
    %v1722 = vld [vmem:[%s1719 + $0x10] sm:$0xff]
    %v1723 = vld [vmem:[%s1719 + $0x18] sm:$0xff]
    %v1725 = vsel %vm46, %v1717, 0
    %v1728 = vsel %vm46, %v1718, 0
    %1730 = vmatprep.subr.mxu0 0.0
    %v1731 = vand.u32 %v1720, 4294901760
    %1732 = vmatpush1.msra.mxu0 %v1731
    %1733 = vmatprep.subr.mxu0 0.0
    %v1734 = vand.u32 %v1721, 4294901760
    %1735 = vmatpush1.msra.mxu0 %v1734
    %1736 = vmatprep.subr.mxu0 0.0
    %v1737 = vand.u32 %v1722, 4294901760
    %1738 = vmatpush1.msra.mxu0 %v1737
    %1739 = vmatprep.subr.mxu0 0.0
    %v1740 = vand.u32 %v1723, 4294901760
    %1741 = vmatpush1.msra.mxu0 %v1740
    %1742 = vmatprep.subr.mxu0 0.0
    %1743 = vmatpush1.msra.mxu0 0.0
    %1744 = vmatprep.subr.mxu0 0.0
    %1745 = vmatpush1.msra.mxu0 0.0
    %1746 = vmatprep.subr.mxu0 0.0
    %1747 = vmatpush1.msra.mxu0 0.0
    %1748 = vmatprep.subr.mxu0 0.0
    %1749 = vmatpush1.msra.mxu0 0.0
    %1750 = vmatprep.subr.mxu0 0.0
    %1751 = vmatpush1.msra.mxu0 0.0
    %1752 = vmatprep.subr.mxu0 0.0
    %1753 = vmatpush1.msra.mxu0 0.0
    %1754 = vmatprep.subr.mxu0 0.0
    %1755 = vmatpush1.msra.mxu0 0.0
    %1756 = vmatprep.subr.mxu0 0.0
    %1757 = vmatpush1.msra.mxu0 0.0
    %1758 = vmatprep.subr.mxu0 0.0
    %1759 = vmatpush1.msra.mxu0 0.0
    %1760 = vmatprep.subr.mxu0 0.0
    %1761 = vmatpush1.msra.mxu0 0.0
    %1762 = vmatprep.subr.mxu0 0.0
    %1763 = vmatpush1.msra.mxu0 0.0
    %1764 = vmatprep.subr.mxu0 0.0
    %1765 = vmatpush1.msra.mxu0 0.0
    %1766 = vmatprep.subr.mxu0 0.0
    %1767 = vmatpush1.msra.mxu0 0.0
    %1768 = vmatprep.subr.mxu0 0.0
    %1769 = vmatpush1.msra.mxu0 0.0
    %1770 = vmatprep.subr.mxu0 0.0
    %1771 = vmatpush1.msra.mxu0 0.0
    %1772 = vmatprep.subr.mxu0 0.0
    %1773 = vmatpush1.msra.mxu0 0.0
    %1774 = vmatprep.subr.mxu0 0.0
    %1775 = vmatpush1.msra.mxu0 0.0
    %1776 = vmatprep.subr.mxu0 0.0
    %1777 = vmatpush1.msra.mxu0 0.0
    %1778 = vmatprep.subr.mxu0 0.0
    %1779 = vmatpush1.msra.mxu0 0.0
    %1780 = vmatprep.subr.mxu0 0.0
    %1781 = vmatpush1.msra.mxu0 0.0
    %1782 = vmatprep.subr.mxu0 0.0
    %1783 = vmatpush1.msra.mxu0 0.0
    %1784 = vmatprep.subr.mxu0 0.0
    %1785 = vmatpush1.msra.mxu0 0.0
    %1786 = vmatprep.subr.mxu0 0.0
    %1787 = vmatpush1.msra.mxu0 0.0
    %1788 = vmatprep.subr.mxu0 0.0
    %1789 = vmatpush1.msra.mxu0 0.0
    %1790 = vmatprep.subr.mxu0 0.0
    %1791 = vmatpush1.msra.mxu0 0.0
    %1792 = vmatprep.subr.mxu0 0.0
    %1793 = vmatpush1.msra.mxu0 0.0
    %1794 = vmatprep.subr.mxu0 0.0
    %1795 = vmatpush1.msra.mxu0 0.0
    %1796 = vmatprep.subr.mxu0 0.0
    %1797 = vmatpush1.msra.mxu0 0.0
    %1798 = vmatprep.mubr.f32.mxu0 0.0
    %v1799 = vand.u32 %v1725, 4294901760
    %v1800 = vsub.f32 %v1725, %v1799
    %v1801 = vand.u32 %v1800, 4294901760
    %v1802 = vsub.f32 %v1800, %v1801
    %v1803 = vand.u32 %v1802, 4294901760
    %1804 = vmatmul.mubr.f32.gmra.mrb[0].mxu0 %v1803
    %v1805 = vpop.f32.mrb[0].mxu0
    %v1806 = vadd.f32 0.0, %v1805
    %v1807 = vpop.f32.mrb[0].mxu0
    %1808 = vmatprep.mubr.f32.mxu0 0.0
    %v1809 = vand.u32 %v1728, 4294901760
    %v1810 = vsub.f32 %v1728, %v1809
    %v1811 = vand.u32 %v1810, 4294901760
    %v1812 = vsub.f32 %v1810, %v1811
    %v1813 = vand.u32 %v1812, 4294901760
    %1814 = vmatmul.mubr.f32.gmra.mrb[0].mxu0 %v1813
    %v1815 = vpop.f32.mrb[0].mxu0
    %v1816 = vadd.f32 0.0, %v1815
    %v1817 = vpop.f32.mrb[0].mxu0
    %1818 = vdwg.mxu0
    %1819 = vmatprep.subr.mxu0 0.0
    %v1820 = vand.u32 %v1720, 4294901760
    %v1821 = vsub.f32 %v1720, %v1820
    %v1822 = vand.u32 %v1821, 4294901760
    %v1823 = vsub.f32 %v1821, %v1822
    %v1824 = vand.u32 %v1823, 4294901760
    %1825 = vmatpush1.msra.mxu0 %v1824
    %1826 = vmatprep.subr.mxu0 0.0
    %v1827 = vand.u32 %v1721, 4294901760
    %v1828 = vsub.f32 %v1721, %v1827
    %v1829 = vand.u32 %v1828, 4294901760
    %v1830 = vsub.f32 %v1828, %v1829
    %v1831 = vand.u32 %v1830, 4294901760
    %1832 = vmatpush1.msra.mxu0 %v1831
    %1833 = vmatprep.subr.mxu0 0.0
    %v1834 = vand.u32 %v1722, 4294901760
    %v1835 = vsub.f32 %v1722, %v1834
    %v1836 = vand.u32 %v1835, 4294901760
    %v1837 = vsub.f32 %v1835, %v1836
    %v1838 = vand.u32 %v1837, 4294901760
    %1839 = vmatpush1.msra.mxu0 %v1838
    %1840 = vmatprep.subr.mxu0 0.0
    %v1841 = vand.u32 %v1723, 4294901760
    %v1842 = vsub.f32 %v1723, %v1841
    %v1843 = vand.u32 %v1842, 4294901760
    %v1844 = vsub.f32 %v1842, %v1843
    %v1845 = vand.u32 %v1844, 4294901760
    %1846 = vmatpush1.msra.mxu0 %v1845
    %1847 = vmatprep.subr.mxu0 0.0
    %1848 = vmatpush1.msra.mxu0 0.0
    %1849 = vmatprep.subr.mxu0 0.0
    %1850 = vmatpush1.msra.mxu0 0.0
    %1851 = vmatprep.subr.mxu0 0.0
    %1852 = vmatpush1.msra.mxu0 0.0
    %1853 = vmatprep.subr.mxu0 0.0
    %1854 = vmatpush1.msra.mxu0 0.0
    %1855 = vmatprep.subr.mxu0 0.0
    %1856 = vmatpush1.msra.mxu0 0.0
    %1857 = vmatprep.subr.mxu0 0.0
    %1858 = vmatpush1.msra.mxu0 0.0
    %1859 = vmatprep.subr.mxu0 0.0
    %1860 = vmatpush1.msra.mxu0 0.0
    %1861 = vmatprep.subr.mxu0 0.0
    %1862 = vmatpush1.msra.mxu0 0.0
    %1863 = vmatprep.subr.mxu0 0.0
    %1864 = vmatpush1.msra.mxu0 0.0
    %1865 = vmatprep.subr.mxu0 0.0
    %1866 = vmatpush1.msra.mxu0 0.0
    %1867 = vmatprep.subr.mxu0 0.0
    %1868 = vmatpush1.msra.mxu0 0.0
    %1869 = vmatprep.subr.mxu0 0.0
    %1870 = vmatpush1.msra.mxu0 0.0
    %1871 = vmatprep.subr.mxu0 0.0
    %1872 = vmatpush1.msra.mxu0 0.0
    %1873 = vmatprep.subr.mxu0 0.0
    %1874 = vmatpush1.msra.mxu0 0.0
    %1875 = vmatprep.subr.mxu0 0.0
    %1876 = vmatpush1.msra.mxu0 0.0
    %1877 = vmatprep.subr.mxu0 0.0
    %1878 = vmatpush1.msra.mxu0 0.0
    %1879 = vmatprep.subr.mxu0 0.0
    %1880 = vmatpush1.msra.mxu0 0.0
    %1881 = vmatprep.subr.mxu0 0.0
    %1882 = vmatpush1.msra.mxu0 0.0
    %1883 = vmatprep.subr.mxu0 0.0
    %1884 = vmatpush1.msra.mxu0 0.0
    %1885 = vmatprep.subr.mxu0 0.0
    %1886 = vmatpush1.msra.mxu0 0.0
    %1887 = vmatprep.subr.mxu0 0.0
    %1888 = vmatpush1.msra.mxu0 0.0
    %1889 = vmatprep.subr.mxu0 0.0
    %1890 = vmatpush1.msra.mxu0 0.0
    %1891 = vmatprep.subr.mxu0 0.0
    %1892 = vmatpush1.msra.mxu0 0.0
    %1893 = vmatprep.subr.mxu0 0.0
    %1894 = vmatpush1.msra.mxu0 0.0
    %1895 = vmatprep.subr.mxu0 0.0
    %1896 = vmatpush1.msra.mxu0 0.0
    %1897 = vmatprep.subr.mxu0 0.0
    %1898 = vmatpush1.msra.mxu0 0.0
    %1899 = vmatprep.subr.mxu0 0.0
    %1900 = vmatpush1.msra.mxu0 0.0
    %1901 = vmatprep.subr.mxu0 0.0
    %1902 = vmatpush1.msra.mxu0 0.0
    %1903 = vmatprep.mubr.f32.mxu0 0.0
    %v1904 = vand.u32 %v1725, 4294901760
    %1905 = vmatmul.mubr.f32.gmra.mrb[0].mxu0 %v1904
    %v1906 = vpop.f32.mrb[0].mxu0
    %v1907 = vadd.f32 %v1806, %v1906
    %v1908 = vpop.f32.mrb[0].mxu0
    %1909 = vmatprep.mubr.f32.mxu0 0.0
    %v1910 = vand.u32 %v1728, 4294901760
    %1911 = vmatmul.mubr.f32.gmra.mrb[0].mxu0 %v1910
    %v1912 = vpop.f32.mrb[0].mxu0
    %v1913 = vadd.f32 %v1816, %v1912
    %v1914 = vpop.f32.mrb[0].mxu0
    %1915 = vdwg.mxu0
    %1916 = vmatprep.subr.mxu0 0.0
    %v1917 = vand.u32 %v1720, 4294901760
    %v1918 = vsub.f32 %v1720, %v1917
    %1919 = vmatpush1.msra.mxu0 %v1918
    %1920 = vmatprep.subr.mxu0 0.0
    %v1921 = vand.u32 %v1721, 4294901760
    %v1922 = vsub.f32 %v1721, %v1921
    %1923 = vmatpush1.msra.mxu0 %v1922
    %1924 = vmatprep.subr.mxu0 0.0
    %v1925 = vand.u32 %v1722, 4294901760
    %v1926 = vsub.f32 %v1722, %v1925
    %1927 = vmatpush1.msra.mxu0 %v1926
    %1928 = vmatprep.subr.mxu0 0.0
    %v1929 = vand.u32 %v1723, 4294901760
    %v1930 = vsub.f32 %v1723, %v1929
    %1931 = vmatpush1.msra.mxu0 %v1930
    %1932 = vmatprep.subr.mxu0 0.0
    %1933 = vmatpush1.msra.mxu0 0.0
    %1934 = vmatprep.subr.mxu0 0.0
    %1935 = vmatpush1.msra.mxu0 0.0
    %1936 = vmatprep.subr.mxu0 0.0
    %1937 = vmatpush1.msra.mxu0 0.0
    %1938 = vmatprep.subr.mxu0 0.0
    %1939 = vmatpush1.msra.mxu0 0.0
    %1940 = vmatprep.subr.mxu0 0.0
    %1941 = vmatpush1.msra.mxu0 0.0
    %1942 = vmatprep.subr.mxu0 0.0
    %1943 = vmatpush1.msra.mxu0 0.0
    %1944 = vmatprep.subr.mxu0 0.0
    %1945 = vmatpush1.msra.mxu0 0.0
    %1946 = vmatprep.subr.mxu0 0.0
    %1947 = vmatpush1.msra.mxu0 0.0
    %1948 = vmatprep.subr.mxu0 0.0
    %1949 = vmatpush1.msra.mxu0 0.0
    %1950 = vmatprep.subr.mxu0 0.0
    %1951 = vmatpush1.msra.mxu0 0.0
    %1952 = vmatprep.subr.mxu0 0.0
    %1953 = vmatpush1.msra.mxu0 0.0
    %1954 = vmatprep.subr.mxu0 0.0
    %1955 = vmatpush1.msra.mxu0 0.0
    %1956 = vmatprep.subr.mxu0 0.0
    %1957 = vmatpush1.msra.mxu0 0.0
    %1958 = vmatprep.subr.mxu0 0.0
    %1959 = vmatpush1.msra.mxu0 0.0
    %1960 = vmatprep.subr.mxu0 0.0
    %1961 = vmatpush1.msra.mxu0 0.0
    %1962 = vmatprep.subr.mxu0 0.0
    %1963 = vmatpush1.msra.mxu0 0.0
    %1964 = vmatprep.subr.mxu0 0.0
    %1965 = vmatpush1.msra.mxu0 0.0
    %1966 = vmatprep.subr.mxu0 0.0
    %1967 = vmatpush1.msra.mxu0 0.0
    %1968 = vmatprep.subr.mxu0 0.0
    %1969 = vmatpush1.msra.mxu0 0.0
    %1970 = vmatprep.subr.mxu0 0.0
    %1971 = vmatpush1.msra.mxu0 0.0
    %1972 = vmatprep.subr.mxu0 0.0
    %1973 = vmatpush1.msra.mxu0 0.0
    %1974 = vmatprep.subr.mxu0 0.0
    %1975 = vmatpush1.msra.mxu0 0.0
    %1976 = vmatprep.subr.mxu0 0.0
    %1977 = vmatpush1.msra.mxu0 0.0
    %1978 = vmatprep.subr.mxu0 0.0
    %1979 = vmatpush1.msra.mxu0 0.0
    %1980 = vmatprep.subr.mxu0 0.0
    %1981 = vmatpush1.msra.mxu0 0.0
    %1982 = vmatprep.subr.mxu0 0.0
    %1983 = vmatpush1.msra.mxu0 0.0
    %1984 = vmatprep.subr.mxu0 0.0
    %1985 = vmatpush1.msra.mxu0 0.0
    %1986 = vmatprep.subr.mxu0 0.0
    %1987 = vmatpush1.msra.mxu0 0.0
    %1988 = vmatprep.mubr.f32.mxu0 0.0
    %v1989 = vand.u32 %v1725, 4294901760
    %v1990 = vsub.f32 %v1725, %v1989
    %1991 = vmatmul.mubr.f32.gmra.mrb[0].mxu0 %v1990
    %v1992 = vpop.f32.mrb[0].mxu0
    %v1993 = vadd.f32 %v1907, %v1992
    %v1994 = vpop.f32.mrb[0].mxu0
    %1995 = vmatprep.mubr.f32.mxu0 0.0
    %v1996 = vand.u32 %v1728, 4294901760
    %v1997 = vsub.f32 %v1728, %v1996
    %1998 = vmatmul.mubr.f32.gmra.mrb[0].mxu0 %v1997
    %v1999 = vpop.f32.mrb[0].mxu0
    %v2000 = vadd.f32 %v1913, %v1999
    %v2001 = vpop.f32.mrb[0].mxu0
    %2002 = vdwg.mxu0
    %2003 = vmatprep.subr.mxu0 0.0
    %v2004 = vand.u32 %v1720, 4294901760
    %2005 = vmatpush1.msra.mxu0 %v2004
    %2006 = vmatprep.subr.mxu0 0.0
    %v2007 = vand.u32 %v1721, 4294901760
    %2008 = vmatpush1.msra.mxu0 %v2007
    %2009 = vmatprep.subr.mxu0 0.0
    %v2010 = vand.u32 %v1722, 4294901760
    %2011 = vmatpush1.msra.mxu0 %v2010
    %2012 = vmatprep.subr.mxu0 0.0
    %v2013 = vand.u32 %v1723, 4294901760
    %2014 = vmatpush1.msra.mxu0 %v2013
    %2015 = vmatprep.subr.mxu0 0.0
    %2016 = vmatpush1.msra.mxu0 0.0
    %2017 = vmatprep.subr.mxu0 0.0
    %2018 = vmatpush1.msra.mxu0 0.0
    %2019 = vmatprep.subr.mxu0 0.0
    %2020 = vmatpush1.msra.mxu0 0.0
    %2021 = vmatprep.subr.mxu0 0.0
    %2022 = vmatpush1.msra.mxu0 0.0
    %2023 = vmatprep.subr.mxu0 0.0
    %2024 = vmatpush1.msra.mxu0 0.0
    %2025 = vmatprep.subr.mxu0 0.0
    %2026 = vmatpush1.msra.mxu0 0.0
    %2027 = vmatprep.subr.mxu0 0.0
    %2028 = vmatpush1.msra.mxu0 0.0
    %2029 = vmatprep.subr.mxu0 0.0
    %2030 = vmatpush1.msra.mxu0 0.0
    %2031 = vmatprep.subr.mxu0 0.0
    %2032 = vmatpush1.msra.mxu0 0.0
    %2033 = vmatprep.subr.mxu0 0.0
    %2034 = vmatpush1.msra.mxu0 0.0
    %2035 = vmatprep.subr.mxu0 0.0
    %2036 = vmatpush1.msra.mxu0 0.0
    %2037 = vmatprep.subr.mxu0 0.0
    %2038 = vmatpush1.msra.mxu0 0.0
    %2039 = vmatprep.subr.mxu0 0.0
    %2040 = vmatpush1.msra.mxu0 0.0
    %2041 = vmatprep.subr.mxu0 0.0
    %2042 = vmatpush1.msra.mxu0 0.0
    %2043 = vmatprep.subr.mxu0 0.0
    %2044 = vmatpush1.msra.mxu0 0.0
    %2045 = vmatprep.subr.mxu0 0.0
    %2046 = vmatpush1.msra.mxu0 0.0
    %2047 = vmatprep.subr.mxu0 0.0
    %2048 = vmatpush1.msra.mxu0 0.0
    %2049 = vmatprep.subr.mxu0 0.0
    %2050 = vmatpush1.msra.mxu0 0.0
    %2051 = vmatprep.subr.mxu0 0.0
    %2052 = vmatpush1.msra.mxu0 0.0
    %2053 = vmatprep.subr.mxu0 0.0
    %2054 = vmatpush1.msra.mxu0 0.0
    %2055 = vmatprep.subr.mxu0 0.0
    %2056 = vmatpush1.msra.mxu0 0.0
    %2057 = vmatprep.subr.mxu0 0.0
    %2058 = vmatpush1.msra.mxu0 0.0
    %2059 = vmatprep.subr.mxu0 0.0
    %2060 = vmatpush1.msra.mxu0 0.0
    %2061 = vmatprep.subr.mxu0 0.0
    %2062 = vmatpush1.msra.mxu0 0.0
    %2063 = vmatprep.subr.mxu0 0.0
    %2064 = vmatpush1.msra.mxu0 0.0
    %2065 = vmatprep.subr.mxu0 0.0
    %2066 = vmatpush1.msra.mxu0 0.0
    %2067 = vmatprep.subr.mxu0 0.0
    %2068 = vmatpush1.msra.mxu0 0.0
    %2069 = vmatprep.subr.mxu0 0.0
    %2070 = vmatpush1.msra.mxu0 0.0
    %2071 = vmatprep.mubr.f32.mxu0 0.0
    %v2072 = vand.u32 %v1725, 4294901760
    %v2073 = vsub.f32 %v1725, %v2072
    %v2074 = vand.u32 %v2073, 4294901760
    %2075 = vmatmul.mubr.f32.gmra.mrb[0].mxu0 %v2074
    %v2076 = vpop.f32.mrb[0].mxu0
    %v2077 = vadd.f32 %v1993, %v2076
    %v2078 = vpop.f32.mrb[0].mxu0
    %2079 = vmatprep.mubr.f32.mxu0 0.0
    %v2080 = vand.u32 %v1728, 4294901760
    %v2081 = vsub.f32 %v1728, %v2080
    %v2082 = vand.u32 %v2081, 4294901760
    %2083 = vmatmul.mubr.f32.gmra.mrb[0].mxu0 %v2082
    %v2084 = vpop.f32.mrb[0].mxu0
    %v2085 = vadd.f32 %v2000, %v2084
    %v2086 = vpop.f32.mrb[0].mxu0
    %2087 = vdwg.mxu0
    %2088 = vmatprep.subr.mxu0 0.0
    %v2089 = vand.u32 %v1720, 4294901760
    %v2090 = vsub.f32 %v1720, %v2089
    %v2091 = vand.u32 %v2090, 4294901760
    %2092 = vmatpush1.msra.mxu0 %v2091
    %2093 = vmatprep.subr.mxu0 0.0
    %v2094 = vand.u32 %v1721, 4294901760
    %v2095 = vsub.f32 %v1721, %v2094
    %v2096 = vand.u32 %v2095, 4294901760
    %2097 = vmatpush1.msra.mxu0 %v2096
    %2098 = vmatprep.subr.mxu0 0.0
    %v2099 = vand.u32 %v1722, 4294901760
    %v2100 = vsub.f32 %v1722, %v2099
    %v2101 = vand.u32 %v2100, 4294901760
    %2102 = vmatpush1.msra.mxu0 %v2101
    %2103 = vmatprep.subr.mxu0 0.0
    %v2104 = vand.u32 %v1723, 4294901760
    %v2105 = vsub.f32 %v1723, %v2104
    %v2106 = vand.u32 %v2105, 4294901760
    %2107 = vmatpush1.msra.mxu0 %v2106
    %2108 = vmatprep.subr.mxu0 0.0
    %2109 = vmatpush1.msra.mxu0 0.0
    %2110 = vmatprep.subr.mxu0 0.0
    %2111 = vmatpush1.msra.mxu0 0.0
    %2112 = vmatprep.subr.mxu0 0.0
    %2113 = vmatpush1.msra.mxu0 0.0
    %2114 = vmatprep.subr.mxu0 0.0
    %2115 = vmatpush1.msra.mxu0 0.0
    %2116 = vmatprep.subr.mxu0 0.0
    %2117 = vmatpush1.msra.mxu0 0.0
    %2118 = vmatprep.subr.mxu0 0.0
    %2119 = vmatpush1.msra.mxu0 0.0
    %2120 = vmatprep.subr.mxu0 0.0
    %2121 = vmatpush1.msra.mxu0 0.0
    %2122 = vmatprep.subr.mxu0 0.0
    %2123 = vmatpush1.msra.mxu0 0.0
    %2124 = vmatprep.subr.mxu0 0.0
    %2125 = vmatpush1.msra.mxu0 0.0
    %2126 = vmatprep.subr.mxu0 0.0
    %2127 = vmatpush1.msra.mxu0 0.0
    %2128 = vmatprep.subr.mxu0 0.0
    %2129 = vmatpush1.msra.mxu0 0.0
    %2130 = vmatprep.subr.mxu0 0.0
    %2131 = vmatpush1.msra.mxu0 0.0
    %2132 = vmatprep.subr.mxu0 0.0
    %2133 = vmatpush1.msra.mxu0 0.0
    %2134 = vmatprep.subr.mxu0 0.0
    %2135 = vmatpush1.msra.mxu0 0.0
    %2136 = vmatprep.subr.mxu0 0.0
    %2137 = vmatpush1.msra.mxu0 0.0
    %2138 = vmatprep.subr.mxu0 0.0
    %2139 = vmatpush1.msra.mxu0 0.0
    %2140 = vmatprep.subr.mxu0 0.0
    %2141 = vmatpush1.msra.mxu0 0.0
    %2142 = vmatprep.subr.mxu0 0.0
    %2143 = vmatpush1.msra.mxu0 0.0
    %2144 = vmatprep.subr.mxu0 0.0
    %2145 = vmatpush1.msra.mxu0 0.0
    %2146 = vmatprep.subr.mxu0 0.0
    %2147 = vmatpush1.msra.mxu0 0.0
    %2148 = vmatprep.subr.mxu0 0.0
    %2149 = vmatpush1.msra.mxu0 0.0
    %2150 = vmatprep.subr.mxu0 0.0
    %2151 = vmatpush1.msra.mxu0 0.0
    %2152 = vmatprep.subr.mxu0 0.0
    %2153 = vmatpush1.msra.mxu0 0.0
    %2154 = vmatprep.subr.mxu0 0.0
    %2155 = vmatpush1.msra.mxu0 0.0
    %2156 = vmatprep.subr.mxu0 0.0
    %2157 = vmatpush1.msra.mxu0 0.0
    %2158 = vmatprep.subr.mxu0 0.0
    %2159 = vmatpush1.msra.mxu0 0.0
    %2160 = vmatprep.subr.mxu0 0.0
    %2161 = vmatpush1.msra.mxu0 0.0
    %2162 = vmatprep.subr.mxu0 0.0
    %2163 = vmatpush1.msra.mxu0 0.0
    %2164 = vmatprep.mubr.f32.mxu0 0.0
    %v2165 = vand.u32 %v1725, 4294901760
    %2166 = vmatmul.mubr.f32.gmra.mrb[0].mxu0 %v2165
    %v2167 = vpop.f32.mrb[0].mxu0
    %v2168 = vadd.f32 %v2077, %v2167
    %v2169 = vpop.f32.mrb[0].mxu0
    %2170 = vmatprep.mubr.f32.mxu0 0.0
    %v2171 = vand.u32 %v1728, 4294901760
    %2172 = vmatmul.mubr.f32.gmra.mrb[0].mxu0 %v2171
    %v2173 = vpop.f32.mrb[0].mxu0
    %v2174 = vadd.f32 %v2085, %v2173
    %v2175 = vpop.f32.mrb[0].mxu0
    %2176 = vdwg.mxu0
    %2177 = vmatprep.subr.mxu0 0.0
    %v2178 = vand.u32 %v1720, 4294901760
    %2179 = vmatpush1.msra.mxu0 %v2178
    %2180 = vmatprep.subr.mxu0 0.0
    %v2181 = vand.u32 %v1721, 4294901760
    %2182 = vmatpush1.msra.mxu0 %v2181
    %2183 = vmatprep.subr.mxu0 0.0
    %v2184 = vand.u32 %v1722, 4294901760
    %2185 = vmatpush1.msra.mxu0 %v2184
    %2186 = vmatprep.subr.mxu0 0.0
    %v2187 = vand.u32 %v1723, 4294901760
    %2188 = vmatpush1.msra.mxu0 %v2187
    %2189 = vmatprep.subr.mxu0 0.0
    %2190 = vmatpush1.msra.mxu0 0.0
    %2191 = vmatprep.subr.mxu0 0.0
    %2192 = vmatpush1.msra.mxu0 0.0
    %2193 = vmatprep.subr.mxu0 0.0
    %2194 = vmatpush1.msra.mxu0 0.0
    %2195 = vmatprep.subr.mxu0 0.0
    %2196 = vmatpush1.msra.mxu0 0.0
    %2197 = vmatprep.subr.mxu0 0.0
    %2198 = vmatpush1.msra.mxu0 0.0
    %2199 = vmatprep.subr.mxu0 0.0
    %2200 = vmatpush1.msra.mxu0 0.0
    %2201 = vmatprep.subr.mxu0 0.0
    %2202 = vmatpush1.msra.mxu0 0.0
    %2203 = vmatprep.subr.mxu0 0.0
    %2204 = vmatpush1.msra.mxu0 0.0
    %2205 = vmatprep.subr.mxu0 0.0
    %2206 = vmatpush1.msra.mxu0 0.0
    %2207 = vmatprep.subr.mxu0 0.0
    %2208 = vmatpush1.msra.mxu0 0.0
    %2209 = vmatprep.subr.mxu0 0.0
    %2210 = vmatpush1.msra.mxu0 0.0
    %2211 = vmatprep.subr.mxu0 0.0
    %2212 = vmatpush1.msra.mxu0 0.0
    %2213 = vmatprep.subr.mxu0 0.0
    %2214 = vmatpush1.msra.mxu0 0.0
    %2215 = vmatprep.subr.mxu0 0.0
    %2216 = vmatpush1.msra.mxu0 0.0
    %2217 = vmatprep.subr.mxu0 0.0
    %2218 = vmatpush1.msra.mxu0 0.0
    %2219 = vmatprep.subr.mxu0 0.0
    %2220 = vmatpush1.msra.mxu0 0.0
    %2221 = vmatprep.subr.mxu0 0.0
    %2222 = vmatpush1.msra.mxu0 0.0
    %2223 = vmatprep.subr.mxu0 0.0
    %2224 = vmatpush1.msra.mxu0 0.0
    %2225 = vmatprep.subr.mxu0 0.0
    %2226 = vmatpush1.msra.mxu0 0.0
    %2227 = vmatprep.subr.mxu0 0.0
    %2228 = vmatpush1.msra.mxu0 0.0
    %2229 = vmatprep.subr.mxu0 0.0
    %2230 = vmatpush1.msra.mxu0 0.0
    %2231 = vmatprep.subr.mxu0 0.0
    %2232 = vmatpush1.msra.mxu0 0.0
    %2233 = vmatprep.subr.mxu0 0.0
    %2234 = vmatpush1.msra.mxu0 0.0
    %2235 = vmatprep.subr.mxu0 0.0
    %2236 = vmatpush1.msra.mxu0 0.0
    %2237 = vmatprep.subr.mxu0 0.0
    %2238 = vmatpush1.msra.mxu0 0.0
    %2239 = vmatprep.subr.mxu0 0.0
    %2240 = vmatpush1.msra.mxu0 0.0
    %2241 = vmatprep.subr.mxu0 0.0
    %2242 = vmatpush1.msra.mxu0 0.0
    %2243 = vmatprep.subr.mxu0 0.0
    %2244 = vmatpush1.msra.mxu0 0.0
    %2245 = vmatprep.mubr.f32.mxu0 0.0
    %v2246 = vand.u32 %v1725, 4294901760
    %2247 = vmatmul.mubr.f32.gmra.mrb[0].mxu0 %v2246
    %v2248 = vpop.f32.mrb[0].mxu0
    %v2249 = vadd.f32 %v2168, %v2248
    %v2250 = vpop.f32.mrb[0].mxu0
    %2251 = vmatprep.mubr.f32.mxu0 0.0
    %v2252 = vand.u32 %v1728, 4294901760
    %2253 = vmatmul.mubr.f32.gmra.mrb[0].mxu0 %v2252
    %v2254 = vpop.f32.mrb[0].mxu0
    %v2255 = vadd.f32 %v2174, %v2254
    %v2256 = vpop.f32.mrb[0].mxu0
    %2257 = vdwg.mxu0
    %2260 = vrot.lane.b32.xlu0 %v2249, 96
    %v2261 = vpop.permute.xlu0 %2260
    %2262 = vrot.lane.b32.xlu0 %v2255, 96
    %v2263 = vpop.permute.xlu0 %2262
    %vm2266 = vcmask 1048320
    %2267 = vst.msk [vmem:[#allocation5] sm:$0xff] %vm2266, %v2261
    %2268 = vst.msk [vmem:[#allocation5 + $0x8] sm:$0xff] %vm2266, %v2263
    // Predicated region
    $region14: #{tpu_custom_call.1} parent=1 // pred_check
      _
    $region15: #{tpu_custom_call.1} parent=1 // pred_check_branch
      %2270 = sbr.rel (0) target = $region17
    $region16: #{tpu_custom_call.1} parent=1 // pred_region
      %s2272 = ssub.s32 256, 256
      %2273 = vsyncadd [#allocation4], %s2272
      %s2274 = sshll.u32 [#allocation5], 4
      %s2275 = int_to_ptr.vmem [resolvable:$true] %s2274
      %2280 = dma.vmem_to_hbm [thread:$0]  %s2275, 256, %s2, [#allocation4], 128, 128, 8
    $region17: #{tpu_custom_call.1} parent=1 // pred_fallthru
      _
    // Predicated region
    $region18: #{tpu_custom_call.1} parent=1 // pred_check
      _
    $region19: #{tpu_custom_call.1} parent=1 // pred_check_branch
      %2282 = sbr.rel (0) target = $region21
    $region20: #{tpu_custom_call.1} parent=1 // pred_region
      %2283 = dma.done [#allocation4], 256
    $region21: #{tpu_custom_call.1} parent=1 // pred_fallthru
      _
    %2284 = vsyncpa [#allocation3], 1
    %2285 = vsyncpa [#allocation4], 1

// kernel: tpu_custom_call.1
$region0: #{tpu_custom_call.1}
  #allocation0 [shape = 'u32[]', space=smem, size = 0x4, offset = 0x4, fixed_abs, tag = 'smem constant byte address 0x4 - core index']
  #allocation1 [shape = 'u32[144,128]{1,0:T(1,128)}', space=vmem, size = 0x12000, scoped, tag = 'internal scratch']
  %s0 = inlined_call_operand.vmem [shape: s32[16,4], index: 0, kind: input, shape index: {}]
  %s1 = inlined_call_operand.hbm [shape: f32[4,32,32], index: 1, kind: input, shape index: {}]
  %s2 = inlined_call_operand.hbm [shape: f32[16,128], index: 2, kind: output, shape index: {}]
  %s3 = sld [smem:[#allocation0]]
  $region22: #{tpu_custom_call.1} parent=0
    _
  %s5 = ssub.s32 1, %s3
  %s6 = scalar_select 0, %s5, %s3
  $region1: #{tpu_custom_call.1} parent=0
    #allocation2 [shape = 'u8[65536]{0}', space=vmem, size = 0x10000, scoped, tag = 'input window, operand 1, single buffered']
    #allocation3 [shape = 's32[1]{0}', space=sflag, size = 0x4, scoped, tag = 'scoped memory for tpu_custom_call.1']
    #allocation4 [shape = 's32[1]{0}', space=sflag, size = 0x4, scoped, tag = 'scoped memory for tpu_custom_call.1']
    #allocation5 [shape = 'u8[8192]{0}', space=vmem, size = 0x2000, scoped, tag = 'output window, operand 0, single buffered']
    %7 = vsyncpa [#allocation3], 0
    %8 = vsyncpa [#allocation4], 0
    // Predicated region
    $region2: #{tpu_custom_call.1} parent=1 // pred_check
      _
    $region3: #{tpu_custom_call.1} parent=1 // pred_check_branch
      %10 = sbr.rel (0) target = $region5
    $region4: #{tpu_custom_call.1} parent=1 // pred_region
      _
    $region5: #{tpu_custom_call.1} parent=1 // pred_fallthru
      _
    // Predicated region
    $region6: #{tpu_custom_call.1} parent=1 // pred_check
      _
    $region7: #{tpu_custom_call.1} parent=1 // pred_check_branch
      %12 = sbr.rel (0) target = $region9
    $region8: #{tpu_custom_call.1} parent=1 // pred_region
      %s14 = ssub.s32 2048, 2048
      %15 = vsyncadd [#allocation3], %s14
      %s16 = sshll.u32 [#allocation2], 4
      %s17 = int_to_ptr.vmem [resolvable:$true] %s16
      %22 = dma.hbm_to_vmem [thread:$0]  %s1, 2048, %s17, [#allocation3], 128, 128, 8
    $region9: #{tpu_custom_call.1} parent=1 // pred_fallthru
      _
    // Predicated region
    $region10: #{tpu_custom_call.1} parent=1 // pred_check
      _
    $region11: #{tpu_custom_call.1} parent=1 // pred_check_branch
      %24 = sbr.rel (0) target = $region13
    $region12: #{tpu_custom_call.1} parent=1 // pred_region
      %25 = dma.done [#allocation3], 2048
    $region13: #{tpu_custom_call.1} parent=1 // pred_fallthru
      _
    %v26 = vld [vmem:[%s0] sm:$0xff]
    %v27 = vld [vmem:[%s0 + $0x8] sm:$0xff]
    %v28 = vlaneseq
    %v29 = vand.u32 %v28, 127
    %30 = vset.pattern.permute.xlu0 0
    %31 = vperm.xlu0 %30, %v26
    %v32 = vpop.permute.xlu0 %31
    %33 = vset.pattern.permute.xlu0 0
    %34 = vperm.xlu0 %33, %v27
    %v35 = vpop.permute.xlu0 %34
    %vm36 = vcmp.eq.s32.totalorder %v32, %v29
    %vm37 = vcmp.eq.s32.totalorder %v35, %v29
    %v38 = vsel %vm36, 1, 0
    %v39 = vsel %vm37, 1, 0
    %v40 = vcvt.s32.f32 %v38
    %v41 = vcvt.s32.f32 %v39
    %v42 = vld [vmem:[#allocation2] sm:$0xff]
    %v43 = vld [vmem:[#allocation2 + $0x8] sm:$0xff]
    %v44 = vld [vmem:[#allocation2 + $0x10] sm:$0xff]
    %v45 = vld [vmem:[#allocation2 + $0x18] sm:$0xff]
    %vm46 = vcmask 261120
    %v48 = vsel %vm46, %v40, 0
    %v51 = vsel %vm46, %v41, 0
    %53 = vmatprep.subr.mxu0 0.0
    %v54 = vand.u32 %v42, 4294901760
    %55 = vmatpush1.msra.mxu0 %v54
    %56 = vmatprep.subr.mxu0 0.0
    %v57 = vand.u32 %v43, 4294901760
    %58 = vmatpush1.msra.mxu0 %v57
    %59 = vmatprep.subr.mxu0 0.0
    %v60 = vand.u32 %v44, 4294901760
    %61 = vmatpush1.msra.mxu0 %v60
    %62 = vmatprep.subr.mxu0 0.0
    %v63 = vand.u32 %v45, 4294901760
    %64 = vmatpush1.msra.mxu0 %v63
    %65 = vmatprep.subr.mxu0 0.0
    %66 = vmatpush1.msra.mxu0 0.0
    %67 = vmatprep.subr.mxu0 0.0
    %68 = vmatpush1.msra.mxu0 0.0
    %69 = vmatprep.subr.mxu0 0.0
    %70 = vmatpush1.msra.mxu0 0.0
    %71 = vmatprep.subr.mxu0 0.0
    %72 = vmatpush1.msra.mxu0 0.0
    %73 = vmatprep.subr.mxu0 0.0
    %74 = vmatpush1.msra.mxu0 0.0
    %75 = vmatprep.subr.mxu0 0.0
    %76 = vmatpush1.msra.mxu0 0.0
    %77 = vmatprep.subr.mxu0 0.0
    %78 = vmatpush1.msra.mxu0 0.0
    %79 = vmatprep.subr.mxu0 0.0
    %80 = vmatpush1.msra.mxu0 0.0
    %81 = vmatprep.subr.mxu0 0.0
    %82 = vmatpush1.msra.mxu0 0.0
    %83 = vmatprep.subr.mxu0 0.0
    %84 = vmatpush1.msra.mxu0 0.0
    %85 = vmatprep.subr.mxu0 0.0
    %86 = vmatpush1.msra.mxu0 0.0
    %87 = vmatprep.subr.mxu0 0.0
    %88 = vmatpush1.msra.mxu0 0.0
    %89 = vmatprep.subr.mxu0 0.0
    %90 = vmatpush1.msra.mxu0 0.0
    %91 = vmatprep.subr.mxu0 0.0
    %92 = vmatpush1.msra.mxu0 0.0
    %93 = vmatprep.subr.mxu0 0.0
    %94 = vmatpush1.msra.mxu0 0.0
    %95 = vmatprep.subr.mxu0 0.0
    %96 = vmatpush1.msra.mxu0 0.0
    %97 = vmatprep.subr.mxu0 0.0
    %98 = vmatpush1.msra.mxu0 0.0
    %99 = vmatprep.subr.mxu0 0.0
    %100 = vmatpush1.msra.mxu0 0.0
    %101 = vmatprep.subr.mxu0 0.0
    %102 = vmatpush1.msra.mxu0 0.0
    %103 = vmatprep.subr.mxu0 0.0
    %104 = vmatpush1.msra.mxu0 0.0
    %105 = vmatprep.subr.mxu0 0.0
    %106 = vmatpush1.msra.mxu0 0.0
    %107 = vmatprep.subr.mxu0 0.0
    %108 = vmatpush1.msra.mxu0 0.0
    %109 = vmatprep.subr.mxu0 0.0
    %110 = vmatpush1.msra.mxu0 0.0
    %111 = vmatprep.subr.mxu0 0.0
    %112 = vmatpush1.msra.mxu0 0.0
    %113 = vmatprep.subr.mxu0 0.0
    %114 = vmatpush1.msra.mxu0 0.0
    %115 = vmatprep.subr.mxu0 0.0
    %116 = vmatpush1.msra.mxu0 0.0
    %117 = vmatprep.subr.mxu0 0.0
    %118 = vmatpush1.msra.mxu0 0.0
    %119 = vmatprep.subr.mxu0 0.0
    %120 = vmatpush1.msra.mxu0 0.0
    %121 = vmatprep.mubr.f32.mxu0 0.0
    %v122 = vand.u32 %v48, 4294901760
    %v123 = vsub.f32 %v48, %v122
    %v124 = vand.u32 %v123, 4294901760
    %v125 = vsub.f32 %v123, %v124
    %v126 = vand.u32 %v125, 4294901760
    %127 = vmatmul.mubr.f32.gmra.mrb[0].mxu0 %v126
    %v128 = vpop.f32.mrb[0].mxu0
    %v129 = vadd.f32 0.0, %v128
    %v130 = vpop.f32.mrb[0].mxu0
    %131 = vmatprep.mubr.f32.mxu0 0.0
    %v132 = vand.u32 %v51, 4294901760
    %v133 = vsub.f32 %v51, %v132
    %v134 = vand.u32 %v133, 4294901760
    %v135 = vsub.f32 %v133, %v134
    %v136 = vand.u32 %v135, 4294901760
    %137 = vmatmul.mubr.f32.gmra.mrb[0].mxu0 %v136
    %v138 = vpop.f32.mrb[0].mxu0
    %v139 = vadd.f32 0.0, %v138
    %v140 = vpop.f32.mrb[0].mxu0
    %141 = vdwg.mxu0
    %142 = vmatprep.subr.mxu0 0.0
    %v143 = vand.u32 %v42, 4294901760
    %v144 = vsub.f32 %v42, %v143
    %v145 = vand.u32 %v144, 4294901760
    %v146 = vsub.f32 %v144, %v145
    %v147 = vand.u32 %v146, 4294901760
    %148 = vmatpush1.msra.mxu0 %v147
    %149 = vmatprep.subr.mxu0 0.0
    %v150 = vand.u32 %v43, 4294901760
    %v151 = vsub.f32 %v43, %v150
    %v152 = vand.u32 %v151, 4294901760
    %v153 = vsub.f32 %v151, %v152
    %v154 = vand.u32 %v153, 4294901760
    %155 = vmatpush1.msra.mxu0 %v154
    %156 = vmatprep.subr.mxu0 0.0
    %v157 = vand.u32 %v44, 4294901760
    %v158 = vsub.f32 %v44, %v157
    %v159 = vand.u32 %v158, 4294901760
    %v160 = vsub.f32 %v158, %v159
    %v161 = vand.u32 %v160, 4294901760
    %162 = vmatpush1.msra.mxu0 %v161
    %163 = vmatprep.subr.mxu0 0.0
    %v164 = vand.u32 %v45, 4294901760
    %v165 = vsub.f32 %v45, %v164
    %v166 = vand.u32 %v165, 4294901760
    %v167 = vsub.f32 %v165, %v166
    %v168 = vand.u32 %v167, 4294901760
    %169 = vmatpush1.msra.mxu0 %v168
    %170 = vmatprep.subr.mxu0 0.0
    %171 = vmatpush1.msra.mxu0 0.0
    %172 = vmatprep.subr.mxu0 0.0
    %173 = vmatpush1.msra.mxu0 0.0
    %174 = vmatprep.subr.mxu0 0.0
    %175 = vmatpush1.msra.mxu0 0.0
    %176 = vmatprep.subr.mxu0 0.0
    %177 = vmatpush1.msra.mxu0 0.0
    %178 = vmatprep.subr.mxu0 0.0
    %179 = vmatpush1.msra.mxu0 0.0
    %180 = vmatprep.subr.mxu0 0.0
    %181 = vmatpush1.msra.mxu0 0.0
    %182 = vmatprep.subr.mxu0 0.0
    %183 = vmatpush1.msra.mxu0 0.0
    %184 = vmatprep.subr.mxu0 0.0
    %185 = vmatpush1.msra.mxu0 0.0
    %186 = vmatprep.subr.mxu0 0.0
    %187 = vmatpush1.msra.mxu0 0.0
    %188 = vmatprep.subr.mxu0 0.0
    %189 = vmatpush1.msra.mxu0 0.0
    %190 = vmatprep.subr.mxu0 0.0
    %191 = vmatpush1.msra.mxu0 0.0
    %192 = vmatprep.subr.mxu0 0.0
    %193 = vmatpush1.msra.mxu0 0.0
    %194 = vmatprep.subr.mxu0 0.0
    %195 = vmatpush1.msra.mxu0 0.0
    %196 = vmatprep.subr.mxu0 0.0
    %197 = vmatpush1.msra.mxu0 0.0
    %198 = vmatprep.subr.mxu0 0.0
    %199 = vmatpush1.msra.mxu0 0.0
    %200 = vmatprep.subr.mxu0 0.0
    %201 = vmatpush1.msra.mxu0 0.0
    %202 = vmatprep.subr.mxu0 0.0
    %203 = vmatpush1.msra.mxu0 0.0
    %204 = vmatprep.subr.mxu0 0.0
    %205 = vmatpush1.msra.mxu0 0.0
    %206 = vmatprep.subr.mxu0 0.0
    %207 = vmatpush1.msra.mxu0 0.0
    %208 = vmatprep.subr.mxu0 0.0
    %209 = vmatpush1.msra.mxu0 0.0
    %210 = vmatprep.subr.mxu0 0.0
    %211 = vmatpush1.msra.mxu0 0.0
    %212 = vmatprep.subr.mxu0 0.0
    %213 = vmatpush1.msra.mxu0 0.0
    %214 = vmatprep.subr.mxu0 0.0
    %215 = vmatpush1.msra.mxu0 0.0
    %216 = vmatprep.subr.mxu0 0.0
    %217 = vmatpush1.msra.mxu0 0.0
    %218 = vmatprep.subr.mxu0 0.0
    %219 = vmatpush1.msra.mxu0 0.0
    %220 = vmatprep.subr.mxu0 0.0
    %221 = vmatpush1.msra.mxu0 0.0
    %222 = vmatprep.subr.mxu0 0.0
    %223 = vmatpush1.msra.mxu0 0.0
    %224 = vmatprep.subr.mxu0 0.0
    %225 = vmatpush1.msra.mxu0 0.0
    %226 = vmatprep.mubr.f32.mxu0 0.0
    %v227 = vand.u32 %v48, 4294901760
    %228 = vmatmul.mubr.f32.gmra.mrb[0].mxu0 %v227
    %v229 = vpop.f32.mrb[0].mxu0
    %v230 = vadd.f32 %v129, %v229
    %v231 = vpop.f32.mrb[0].mxu0
    %232 = vmatprep.mubr.f32.mxu0 0.0
    %v233 = vand.u32 %v51, 4294901760
    %234 = vmatmul.mubr.f32.gmra.mrb[0].mxu0 %v233
    %v235 = vpop.f32.mrb[0].mxu0
    %v236 = vadd.f32 %v139, %v235
    %v237 = vpop.f32.mrb[0].mxu0
    %238 = vdwg.mxu0
    %239 = vmatprep.subr.mxu0 0.0
    %v240 = vand.u32 %v42, 4294901760
    %v241 = vsub.f32 %v42, %v240
    %242 = vmatpush1.msra.mxu0 %v241
    %243 = vmatprep.subr.mxu0 0.0
    %v244 = vand.u32 %v43, 4294901760
    %v245 = vsub.f32 %v43, %v244
    %246 = vmatpush1.msra.mxu0 %v245
    %247 = vmatprep.subr.mxu0 0.0
    %v248 = vand.u32 %v44, 4294901760
    %v249 = vsub.f32 %v44, %v248
    %250 = vmatpush1.msra.mxu0 %v249
    %251 = vmatprep.subr.mxu0 0.0
    %v252 = vand.u32 %v45, 4294901760
    %v253 = vsub.f32 %v45, %v252
    %254 = vmatpush1.msra.mxu0 %v253
    %255 = vmatprep.subr.mxu0 0.0
    %256 = vmatpush1.msra.mxu0 0.0
    %257 = vmatprep.subr.mxu0 0.0
    %258 = vmatpush1.msra.mxu0 0.0
    %259 = vmatprep.subr.mxu0 0.0
    %260 = vmatpush1.msra.mxu0 0.0
    %261 = vmatprep.subr.mxu0 0.0
    %262 = vmatpush1.msra.mxu0 0.0
    %263 = vmatprep.subr.mxu0 0.0
    %264 = vmatpush1.msra.mxu0 0.0
    %265 = vmatprep.subr.mxu0 0.0
    %266 = vmatpush1.msra.mxu0 0.0
    %267 = vmatprep.subr.mxu0 0.0
    %268 = vmatpush1.msra.mxu0 0.0
    %269 = vmatprep.subr.mxu0 0.0
    %270 = vmatpush1.msra.mxu0 0.0
    %271 = vmatprep.subr.mxu0 0.0
    %272 = vmatpush1.msra.mxu0 0.0
    %273 = vmatprep.subr.mxu0 0.0
    %274 = vmatpush1.msra.mxu0 0.0
    %275 = vmatprep.subr.mxu0 0.0
    %276 = vmatpush1.msra.mxu0 0.0
    %277 = vmatprep.subr.mxu0 0.0
    %278 = vmatpush1.msra.mxu0 0.0
    %279 = vmatprep.subr.mxu0 0.0
    %280 = vmatpush1.msra.mxu0 0.0
    %281 = vmatprep.subr.mxu0 0.0
    %282 = vmatpush1.msra.mxu0 0.0
    %283 = vmatprep.subr.mxu0 0.0
    %284 = vmatpush1.msra.mxu0 0.0
    %285 = vmatprep.subr.mxu0 0.0
    %286 = vmatpush1.msra.mxu0 0.0
    %287 = vmatprep.subr.mxu0 0.0
    %288 = vmatpush1.msra.mxu0 0.0
    %289 = vmatprep.subr.mxu0 0.0
    %290 = vmatpush1.msra.mxu0 0.0
    %291 = vmatprep.subr.mxu0 0.0
    %292 = vmatpush1.msra.mxu0 0.0
    %293 = vmatprep.subr.mxu0 0.0
    %294 = vmatpush1.msra.mxu0 0.0
    %295 = vmatprep.subr.mxu0 0.0
    %296 = vmatpush1.msra.mxu0 0.0
    %297 = vmatprep.subr.mxu0 0.0
    %298 = vmatpush1.msra.mxu0 0.0
    %299 = vmatprep.subr.mxu0 0.0
    %300 = vmatpush1.msra.mxu0 0.0
    %301 = vmatprep.subr.mxu0 0.0
    %302 = vmatpush1.msra.mxu0 0.0
    %303 = vmatprep.subr.mxu0 0.0
    %304 = vmatpush1.msra.mxu0 0.0
    %305 = vmatprep.subr.mxu0 0.0
    %306 = vmatpush1.msra.mxu0 0.0
    %307 = vmatprep.subr.mxu0 0.0
    %308 = vmatpush1.msra.mxu0 0.0
    %309 = vmatprep.subr.mxu0 0.0
    %310 = vmatpush1.msra.mxu0 0.0
    %311 = vmatprep.mubr.f32.mxu0 0.0
    %v312 = vand.u32 %v48, 4294901760
    %v313 = vsub.f32 %v48, %v312
    %314 = vmatmul.mubr.f32.gmra.mrb[0].mxu0 %v313
    %v315 = vpop.f32.mrb[0].mxu0
    %v316 = vadd.f32 %v230, %v315
    %v317 = vpop.f32.mrb[0].mxu0
    %318 = vmatprep.mubr.f32.mxu0 0.0
    %v319 = vand.u32 %v51, 4294901760
    %v320 = vsub.f32 %v51, %v319
    %321 = vmatmul.mubr.f32.gmra.mrb[0].mxu0 %v320
    %v322 = vpop.f32.mrb[0].mxu0
    %v323 = vadd.f32 %v236, %v322
    %v324 = vpop.f32.mrb[0].mxu0
    %325 = vdwg.mxu0
    %326 = vmatprep.subr.mxu0 0.0
    %v327 = vand.u32 %v42, 4294901760
    %328 = vmatpush1.msra.mxu0 %v327
    %329 = vmatprep.subr.mxu0 0.0
    %v330 = vand.u32 %v43, 4294901760
    %331 = vmatpush1.msra.mxu0 %v330
    %332 = vmatprep.subr.mxu0 0.0
    %v333 = vand.u32 %v44, 4294901760
    %334 = vmatpush1.msra.mxu0 %v333
    %335 = vmatprep.subr.mxu0 0.0
    %v336 = vand.u32 %v45, 4294901760
    %337 = vmatpush1.msra.mxu0 %v336
    %338 = vmatprep.subr.mxu0 0.0
    %339 = vmatpush1.msra.mxu0 0.0
    %340 = vmatprep.subr.mxu0 0.0
    %341 = vmatpush1.msra.mxu0 0.0
    %342 = vmatprep.subr.mxu0 0.0
    %343 = vmatpush1.msra.mxu0 0.0
    %344 = vmatprep.subr.mxu0 0.0
    %345 = vmatpush1.msra.mxu0 0.0
    %346 = vmatprep.subr.mxu0 0.0
    %347 = vmatpush1.msra.mxu0 0.0
    %348 = vmatprep.subr.mxu0 0.0
    %349 = vmatpush1.msra.mxu0 0.0
    %350 = vmatprep.subr.mxu0 0.0
    %351 = vmatpush1.msra.mxu0 0.0
    %352 = vmatprep.subr.mxu0 0.0
    %353 = vmatpush1.msra.mxu0 0.0
    %354 = vmatprep.subr.mxu0 0.0
    %355 = vmatpush1.msra.mxu0 0.0
    %356 = vmatprep.subr.mxu0 0.0
    %357 = vmatpush1.msra.mxu0 0.0
    %358 = vmatprep.subr.mxu0 0.0
    %359 = vmatpush1.msra.mxu0 0.0
    %360 = vmatprep.subr.mxu0 0.0
    %361 = vmatpush1.msra.mxu0 0.0
    %362 = vmatprep.subr.mxu0 0.0
    %363 = vmatpush1.msra.mxu0 0.0
    %364 = vmatprep.subr.mxu0 0.0
    %365 = vmatpush1.msra.mxu0 0.0
    %366 = vmatprep.subr.mxu0 0.0
    %367 = vmatpush1.msra.mxu0 0.0
    %368 = vmatprep.subr.mxu0 0.0
    %369 = vmatpush1.msra.mxu0 0.0
    %370 = vmatprep.subr.mxu0 0.0
    %371 = vmatpush1.msra.mxu0 0.0
    %372 = vmatprep.subr.mxu0 0.0
    %373 = vmatpush1.msra.mxu0 0.0
    %374 = vmatprep.subr.mxu0 0.0
    %375 = vmatpush1.msra.mxu0 0.0
    %376 = vmatprep.subr.mxu0 0.0
    %377 = vmatpush1.msra.mxu0 0.0
    %378 = vmatprep.subr.mxu0 0.0
    %379 = vmatpush1.msra.mxu0 0.0
    %380 = vmatprep.subr.mxu0 0.0
    %381 = vmatpush1.msra.mxu0 0.0
    %382 = vmatprep.subr.mxu0 0.0
    %383 = vmatpush1.msra.mxu0 0.0
    %384 = vmatprep.subr.mxu0 0.0
    %385 = vmatpush1.msra.mxu0 0.0
    %386 = vmatprep.subr.mxu0 0.0
    %387 = vmatpush1.msra.mxu0 0.0
    %388 = vmatprep.subr.mxu0 0.0
    %389 = vmatpush1.msra.mxu0 0.0
    %390 = vmatprep.subr.mxu0 0.0
    %391 = vmatpush1.msra.mxu0 0.0
    %392 = vmatprep.subr.mxu0 0.0
    %393 = vmatpush1.msra.mxu0 0.0
    %394 = vmatprep.mubr.f32.mxu0 0.0
    %v395 = vand.u32 %v48, 4294901760
    %v396 = vsub.f32 %v48, %v395
    %v397 = vand.u32 %v396, 4294901760
    %398 = vmatmul.mubr.f32.gmra.mrb[0].mxu0 %v397
    %v399 = vpop.f32.mrb[0].mxu0
    %v400 = vadd.f32 %v316, %v399
    %v401 = vpop.f32.mrb[0].mxu0
    %402 = vmatprep.mubr.f32.mxu0 0.0
    %v403 = vand.u32 %v51, 4294901760
    %v404 = vsub.f32 %v51, %v403
    %v405 = vand.u32 %v404, 4294901760
    %406 = vmatmul.mubr.f32.gmra.mrb[0].mxu0 %v405
    %v407 = vpop.f32.mrb[0].mxu0
    %v408 = vadd.f32 %v323, %v407
    %v409 = vpop.f32.mrb[0].mxu0
    %410 = vdwg.mxu0
    %411 = vmatprep.subr.mxu0 0.0
    %v412 = vand.u32 %v42, 4294901760
    %v413 = vsub.f32 %v42, %v412
    %v414 = vand.u32 %v413, 4294901760
    %415 = vmatpush1.msra.mxu0 %v414
    %416 = vmatprep.subr.mxu0 0.0
    %v417 = vand.u32 %v43, 4294901760
    %v418 = vsub.f32 %v43, %v417
    %v419 = vand.u32 %v418, 4294901760
    %420 = vmatpush1.msra.mxu0 %v419
    %421 = vmatprep.subr.mxu0 0.0
    %v422 = vand.u32 %v44, 4294901760
    %v423 = vsub.f32 %v44, %v422
    %v424 = vand.u32 %v423, 4294901760
    %425 = vmatpush1.msra.mxu0 %v424
    %426 = vmatprep.subr.mxu0 0.0
    %v427 = vand.u32 %v45, 4294901760
    %v428 = vsub.f32 %v45, %v427
    %v429 = vand.u32 %v428, 4294901760
    %430 = vmatpush1.msra.mxu0 %v429
    %431 = vmatprep.subr.mxu0 0.0
    %432 = vmatpush1.msra.mxu0 0.0
    %433 = vmatprep.subr.mxu0 0.0
    %434 = vmatpush1.msra.mxu0 0.0
    %435 = vmatprep.subr.mxu0 0.0
    %436 = vmatpush1.msra.mxu0 0.0
    %437 = vmatprep.subr.mxu0 0.0
    %438 = vmatpush1.msra.mxu0 0.0
    %439 = vmatprep.subr.mxu0 0.0
    %440 = vmatpush1.msra.mxu0 0.0
    %441 = vmatprep.subr.mxu0 0.0
    %442 = vmatpush1.msra.mxu0 0.0
    %443 = vmatprep.subr.mxu0 0.0
    %444 = vmatpush1.msra.mxu0 0.0
    %445 = vmatprep.subr.mxu0 0.0
    %446 = vmatpush1.msra.mxu0 0.0
    %447 = vmatprep.subr.mxu0 0.0
    %448 = vmatpush1.msra.mxu0 0.0
    %449 = vmatprep.subr.mxu0 0.0
    %450 = vmatpush1.msra.mxu0 0.0
    %451 = vmatprep.subr.mxu0 0.0
    %452 = vmatpush1.msra.mxu0 0.0
    %453 = vmatprep.subr.mxu0 0.0
    %454 = vmatpush1.msra.mxu0 0.0
    %455 = vmatprep.subr.mxu0 0.0
    %456 = vmatpush1.msra.mxu0 0.0
    %457 = vmatprep.subr.mxu0 0.0
    %458 = vmatpush1.msra.mxu0 0.0
    %459 = vmatprep.subr.mxu0 0.0
    %460 = vmatpush1.msra.mxu0 0.0
    %461 = vmatprep.subr.mxu0 0.0
    %462 = vmatpush1.msra.mxu0 0.0
    %463 = vmatprep.subr.mxu0 0.0
    %464 = vmatpush1.msra.mxu0 0.0
    %465 = vmatprep.subr.mxu0 0.0
    %466 = vmatpush1.msra.mxu0 0.0
    %467 = vmatprep.subr.mxu0 0.0
    %468 = vmatpush1.msra.mxu0 0.0
    %469 = vmatprep.subr.mxu0 0.0
    %470 = vmatpush1.msra.mxu0 0.0
    %471 = vmatprep.subr.mxu0 0.0
    %472 = vmatpush1.msra.mxu0 0.0
    %473 = vmatprep.subr.mxu0 0.0
    %474 = vmatpush1.msra.mxu0 0.0
    %475 = vmatprep.subr.mxu0 0.0
    %476 = vmatpush1.msra.mxu0 0.0
    %477 = vmatprep.subr.mxu0 0.0
    %478 = vmatpush1.msra.mxu0 0.0
    %479 = vmatprep.subr.mxu0 0.0
    %480 = vmatpush1.msra.mxu0 0.0
    %481 = vmatprep.subr.mxu0 0.0
    %482 = vmatpush1.msra.mxu0 0.0
    %483 = vmatprep.subr.mxu0 0.0
    %484 = vmatpush1.msra.mxu0 0.0
    %485 = vmatprep.subr.mxu0 0.0
    %486 = vmatpush1.msra.mxu0 0.0
    %487 = vmatprep.mubr.f32.mxu0 0.0
    %v488 = vand.u32 %v48, 4294901760
    %489 = vmatmul.mubr.f32.gmra.mrb[0].mxu0 %v488
    %v490 = vpop.f32.mrb[0].mxu0
    %v491 = vadd.f32 %v400, %v490
    %v492 = vpop.f32.mrb[0].mxu0
    %493 = vmatprep.mubr.f32.mxu0 0.0
    %v494 = vand.u32 %v51, 4294901760
    %495 = vmatmul.mubr.f32.gmra.mrb[0].mxu0 %v494
    %v496 = vpop.f32.mrb[0].mxu0
    %v497 = vadd.f32 %v408, %v496
    %v498 = vpop.f32.mrb[0].mxu0
    %499 = vdwg.mxu0
    %500 = vmatprep.subr.mxu0 0.0
    %v501 = vand.u32 %v42, 4294901760
    %502 = vmatpush1.msra.mxu0 %v501
    %503 = vmatprep.subr.mxu0 0.0
    %v504 = vand.u32 %v43, 4294901760
    %505 = vmatpush1.msra.mxu0 %v504
    %506 = vmatprep.subr.mxu0 0.0
    %v507 = vand.u32 %v44, 4294901760
    %508 = vmatpush1.msra.mxu0 %v507
    %509 = vmatprep.subr.mxu0 0.0
    %v510 = vand.u32 %v45, 4294901760
    %511 = vmatpush1.msra.mxu0 %v510
    %512 = vmatprep.subr.mxu0 0.0
    %513 = vmatpush1.msra.mxu0 0.0
    %514 = vmatprep.subr.mxu0 0.0
    %515 = vmatpush1.msra.mxu0 0.0
    %516 = vmatprep.subr.mxu0 0.0
    %517 = vmatpush1.msra.mxu0 0.0
    %518 = vmatprep.subr.mxu0 0.0
    %519 = vmatpush1.msra.mxu0 0.0
    %520 = vmatprep.subr.mxu0 0.0
    %521 = vmatpush1.msra.mxu0 0.0
    %522 = vmatprep.subr.mxu0 0.0
    %523 = vmatpush1.msra.mxu0 0.0
    %524 = vmatprep.subr.mxu0 0.0
    %525 = vmatpush1.msra.mxu0 0.0
    %526 = vmatprep.subr.mxu0 0.0
    %527 = vmatpush1.msra.mxu0 0.0
    %528 = vmatprep.subr.mxu0 0.0
    %529 = vmatpush1.msra.mxu0 0.0
    %530 = vmatprep.subr.mxu0 0.0
    %531 = vmatpush1.msra.mxu0 0.0
    %532 = vmatprep.subr.mxu0 0.0
    %533 = vmatpush1.msra.mxu0 0.0
    %534 = vmatprep.subr.mxu0 0.0
    %535 = vmatpush1.msra.mxu0 0.0
    %536 = vmatprep.subr.mxu0 0.0
    %537 = vmatpush1.msra.mxu0 0.0
    %538 = vmatprep.subr.mxu0 0.0
    %539 = vmatpush1.msra.mxu0 0.0
    %540 = vmatprep.subr.mxu0 0.0
    %541 = vmatpush1.msra.mxu0 0.0
    %542 = vmatprep.subr.mxu0 0.0
    %543 = vmatpush1.msra.mxu0 0.0
    %544 = vmatprep.subr.mxu0 0.0
    %545 = vmatpush1.msra.mxu0 0.0
    %546 = vmatprep.subr.mxu0 0.0
    %547 = vmatpush1.msra.mxu0 0.0
    %548 = vmatprep.subr.mxu0 0.0
    %549 = vmatpush1.msra.mxu0 0.0
    %550 = vmatprep.subr.mxu0 0.0
    %551 = vmatpush1.msra.mxu0 0.0
    %552 = vmatprep.subr.mxu0 0.0
    %553 = vmatpush1.msra.mxu0 0.0
    %554 = vmatprep.subr.mxu0 0.0
    %555 = vmatpush1.msra.mxu0 0.0
    %556 = vmatprep.subr.mxu0 0.0
    %557 = vmatpush1.msra.mxu0 0.0
    %558 = vmatprep.subr.mxu0 0.0
    %559 = vmatpush1.msra.mxu0 0.0
    %560 = vmatprep.subr.mxu0 0.0
    %561 = vmatpush1.msra.mxu0 0.0
    %562 = vmatprep.subr.mxu0 0.0
    %563 = vmatpush1.msra.mxu0 0.0
    %564 = vmatprep.subr.mxu0 0.0
    %565 = vmatpush1.msra.mxu0 0.0
    %566 = vmatprep.subr.mxu0 0.0
    %567 = vmatpush1.msra.mxu0 0.0
    %568 = vmatprep.mubr.f32.mxu0 0.0
    %v569 = vand.u32 %v48, 4294901760
    %570 = vmatmul.mubr.f32.gmra.mrb[0].mxu0 %v569
    %v571 = vpop.f32.mrb[0].mxu0
    %v572 = vadd.f32 %v491, %v571
    %v573 = vpop.f32.mrb[0].mxu0
    %574 = vmatprep.mubr.f32.mxu0 0.0
    %v575 = vand.u32 %v51, 4294901760
    %576 = vmatmul.mubr.f32.gmra.mrb[0].mxu0 %v575
    %v577 = vpop.f32.mrb[0].mxu0
    %v578 = vadd.f32 %v497, %v577
    %v579 = vpop.f32.mrb[0].mxu0
    %580 = vdwg.mxu0
    %581 = vst.msk [vmem:[#allocation5] sm:$0xff] %vm46, %v572
    %582 = vst.msk [vmem:[#allocation5 + $0x8] sm:$0xff] %vm46, %v578
    %583 = vset.pattern.permute.xlu0 1
    %584 = vperm.xlu0 %583, %v26
    %v585 = vpop.permute.xlu0 %584
    %586 = vset.pattern.permute.xlu0 1
    %587 = vperm.xlu0 %586, %v27
    %v588 = vpop.permute.xlu0 %587
    %vm589 = vcmp.eq.s32.totalorder %v585, %v29
    %vm590 = vcmp.eq.s32.totalorder %v588, %v29
    %v591 = vsel %vm589, 1, 0
    %v592 = vsel %vm590, 1, 0
    %v593 = vcvt.s32.f32 %v591
    %v594 = vcvt.s32.f32 %v592
    %s595 = scalar_lea.vmem [#allocation2], 32
    %v596 = vld [vmem:[%s595] sm:$0xff]
    %v597 = vld [vmem:[%s595 + $0x8] sm:$0xff]
    %v598 = vld [vmem:[%s595 + $0x10] sm:$0xff]
    %v599 = vld [vmem:[%s595 + $0x18] sm:$0xff]
    %v601 = vsel %vm46, %v593, 0
    %v604 = vsel %vm46, %v594, 0
    %606 = vmatprep.subr.mxu0 0.0
    %v607 = vand.u32 %v596, 4294901760
    %608 = vmatpush1.msra.mxu0 %v607
    %609 = vmatprep.subr.mxu0 0.0
    %v610 = vand.u32 %v597, 4294901760
    %611 = vmatpush1.msra.mxu0 %v610
    %612 = vmatprep.subr.mxu0 0.0
    %v613 = vand.u32 %v598, 4294901760
    %614 = vmatpush1.msra.mxu0 %v613
    %615 = vmatprep.subr.mxu0 0.0
    %v616 = vand.u32 %v599, 4294901760
    %617 = vmatpush1.msra.mxu0 %v616
    %618 = vmatprep.subr.mxu0 0.0
    %619 = vmatpush1.msra.mxu0 0.0
    %620 = vmatprep.subr.mxu0 0.0
    %621 = vmatpush1.msra.mxu0 0.0
    %622 = vmatprep.subr.mxu0 0.0
    %623 = vmatpush1.msra.mxu0 0.0
    %624 = vmatprep.subr.mxu0 0.0
    %625 = vmatpush1.msra.mxu0 0.0
    %626 = vmatprep.subr.mxu0 0.0
    %627 = vmatpush1.msra.mxu0 0.0
    %628 = vmatprep.subr.mxu0 0.0
    %629 = vmatpush1.msra.mxu0 0.0
    %630 = vmatprep.subr.mxu0 0.0
    %631 = vmatpush1.msra.mxu0 0.0
    %632 = vmatprep.subr.mxu0 0.0
    %633 = vmatpush1.msra.mxu0 0.0
    %634 = vmatprep.subr.mxu0 0.0
    %635 = vmatpush1.msra.mxu0 0.0
    %636 = vmatprep.subr.mxu0 0.0
    %637 = vmatpush1.msra.mxu0 0.0
    %638 = vmatprep.subr.mxu0 0.0
    %639 = vmatpush1.msra.mxu0 0.0
    %640 = vmatprep.subr.mxu0 0.0
    %641 = vmatpush1.msra.mxu0 0.0
    %642 = vmatprep.subr.mxu0 0.0
    %643 = vmatpush1.msra.mxu0 0.0
    %644 = vmatprep.subr.mxu0 0.0
    %645 = vmatpush1.msra.mxu0 0.0
    %646 = vmatprep.subr.mxu0 0.0
    %647 = vmatpush1.msra.mxu0 0.0
    %648 = vmatprep.subr.mxu0 0.0
    %649 = vmatpush1.msra.mxu0 0.0
    %650 = vmatprep.subr.mxu0 0.0
    %651 = vmatpush1.msra.mxu0 0.0
    %652 = vmatprep.subr.mxu0 0.0
    %653 = vmatpush1.msra.mxu0 0.0
    %654 = vmatprep.subr.mxu0 0.0
    %655 = vmatpush1.msra.mxu0 0.0
    %656 = vmatprep.subr.mxu0 0.0
    %657 = vmatpush1.msra.mxu0 0.0
    %658 = vmatprep.subr.mxu0 0.0
    %659 = vmatpush1.msra.mxu0 0.0
    %660 = vmatprep.subr.mxu0 0.0
    %661 = vmatpush1.msra.mxu0 0.0
    %662 = vmatprep.subr.mxu0 0.0
    %663 = vmatpush1.msra.mxu0 0.0
    %664 = vmatprep.subr.mxu0 0.0
    %665 = vmatpush1.msra.mxu0 0.0
    %666 = vmatprep.subr.mxu0 0.0
    %667 = vmatpush1.msra.mxu0 0.0
    %668 = vmatprep.subr.mxu0 0.0
    %669 = vmatpush1.msra.mxu0 0.0
    %670 = vmatprep.subr.mxu0 0.0
    %671 = vmatpush1.msra.mxu0 0.0
    %672 = vmatprep.subr.mxu0 0.0
    %673 = vmatpush1.msra.mxu0 0.0
    %674 = vmatprep.mubr.f32.mxu0 0.0
    %v675 = vand.u32 %v601, 4294901760
    %v676 = vsub.f32 %v601, %v675
    %v677 = vand.u32 %v676, 4294901760
    %v678 = vsub.f32 %v676, %v677
    %v679 = vand.u32 %v678, 4294901760
    %680 = vmatmul.mubr.f32.gmra.mrb[0].mxu0 %v679
    %v681 = vpop.f32.mrb[0].mxu0
    %v682 = vadd.f32 0.0, %v681
    %v683 = vpop.f32.mrb[0].mxu0
    %684 = vmatprep.mubr.f32.mxu0 0.0
    %v685 = vand.u32 %v604, 4294901760
    %v686 = vsub.f32 %v604, %v685
    %v687 = vand.u32 %v686, 4294901760
    %v688 = vsub.f32 %v686, %v687
    %v689 = vand.u32 %v688, 4294901760
    %690 = vmatmul.mubr.f32.gmra.mrb[0].mxu0 %v689
    %v691 = vpop.f32.mrb[0].mxu0
    %v692 = vadd.f32 0.0, %v691
    %v693 = vpop.f32.mrb[0].mxu0
    %694 = vdwg.mxu0
    %695 = vmatprep.subr.mxu0 0.0
    %v696 = vand.u32 %v596, 4294901760
    %v697 = vsub.f32 %v596, %v696
    %v698 = vand.u32 %v697, 4294901760
    %v699 = vsub.f32 %v697, %v698
    %v700 = vand.u32 %v699, 4294901760
    %701 = vmatpush1.msra.mxu0 %v700
    %702 = vmatprep.subr.mxu0 0.0
    %v703 = vand.u32 %v597, 4294901760
    %v704 = vsub.f32 %v597, %v703
    %v705 = vand.u32 %v704, 4294901760
    %v706 = vsub.f32 %v704, %v705
    %v707 = vand.u32 %v706, 4294901760
    %708 = vmatpush1.msra.mxu0 %v707
    %709 = vmatprep.subr.mxu0 0.0
    %v710 = vand.u32 %v598, 4294901760
    %v711 = vsub.f32 %v598, %v710
    %v712 = vand.u32 %v711, 4294901760
    %v713 = vsub.f32 %v711, %v712
    %v714 = vand.u32 %v713, 4294901760
    %715 = vmatpush1.msra.mxu0 %v714
    %716 = vmatprep.subr.mxu0 0.0
    %v717 = vand.u32 %v599, 4294901760
    %v718 = vsub.f32 %v599, %v717
    %v719 = vand.u32 %v718, 4294901760
    %v720 = vsub.f32 %v718, %v719
    %v721 = vand.u32 %v720, 4294901760
    %722 = vmatpush1.msra.mxu0 %v721
    %723 = vmatprep.subr.mxu0 0.0
    %724 = vmatpush1.msra.mxu0 0.0
    %725 = vmatprep.subr.mxu0 0.0
    %726 = vmatpush1.msra.mxu0 0.0
    %727 = vmatprep.subr.mxu0 0.0
    %728 = vmatpush1.msra.mxu0 0.0
    %729 = vmatprep.subr.mxu0 0.0
    %730 = vmatpush1.msra.mxu0 0.0
    %731 = vmatprep.subr.mxu0 0.0
    %732 = vmatpush1.msra.mxu0 0.0
    %733 = vmatprep.subr.mxu0 0.0
    %734 = vmatpush1.msra.mxu0 0.0
    %735 = vmatprep.subr.mxu0 0.0
    %736 = vmatpush1.msra.mxu0 0.0
    %737 = vmatprep.subr.mxu0 0.0
    %738 = vmatpush1.msra.mxu0 0.0
    %739 = vmatprep.subr.mxu0 0.0
    %740 = vmatpush1.msra.mxu0 0.0
    %741 = vmatprep.subr.mxu0 0.0
    %742 = vmatpush1.msra.mxu0 0.0
    %743 = vmatprep.subr.mxu0 0.0
    %744 = vmatpush1.msra.mxu0 0.0
    %745 = vmatprep.subr.mxu0 0.0
    %746 = vmatpush1.msra.mxu0 0.0
    %747 = vmatprep.subr.mxu0 0.0
    %748 = vmatpush1.msra.mxu0 0.0
    %749 = vmatprep.subr.mxu0 0.0
    %750 = vmatpush1.msra.mxu0 0.0
    %751 = vmatprep.subr.mxu0 0.0
    %752 = vmatpush1.msra.mxu0 0.0
    %753 = vmatprep.subr.mxu0 0.0
    %754 = vmatpush1.msra.mxu0 0.0
    %755 = vmatprep.subr.mxu0 0.0
    %756 = vmatpush1.msra.mxu0 0.0
    %757 = vmatprep.subr.mxu0 0.0
    %758 = vmatpush1.msra.mxu0 0.0
    %759 = vmatprep.subr.mxu0 0.0
    %760 = vmatpush1.msra.mxu0 0.0
    %761 = vmatprep.subr.mxu0 0.0
    %762 = vmatpush1.msra.mxu0 0.0
    %763 = vmatprep.subr.mxu0 0.0
    %764 = vmatpush1.msra.mxu0 0.0
    %765 = vmatprep.subr.mxu0 0.0
    %766 = vmatpush1.msra.mxu0 0.0
    %767 = vmatprep.subr.mxu0 0.0
    %768 = vmatpush1.msra.mxu0 0.0
    %769 = vmatprep.subr.mxu0 0.0
    %770 = vmatpush1.msra.mxu0 0.0
    %771 = vmatprep.subr.mxu0 0.0
    %772 = vmatpush1.msra.mxu0 0.0
    %773 = vmatprep.subr.mxu0 0.0
    %774 = vmatpush1.msra.mxu0 0.0
    %775 = vmatprep.subr.mxu0 0.0
    %776 = vmatpush1.msra.mxu0 0.0
    %777 = vmatprep.subr.mxu0 0.0
    %778 = vmatpush1.msra.mxu0 0.0
    %779 = vmatprep.mubr.f32.mxu0 0.0
    %v780 = vand.u32 %v601, 4294901760
    %781 = vmatmul.mubr.f32.gmra.mrb[0].mxu0 %v780
    %v782 = vpop.f32.mrb[0].mxu0
    %v783 = vadd.f32 %v682, %v782
    %v784 = vpop.f32.mrb[0].mxu0
    %785 = vmatprep.mubr.f32.mxu0 0.0
    %v786 = vand.u32 %v604, 4294901760
    %787 = vmatmul.mubr.f32.gmra.mrb[0].mxu0 %v786
    %v788 = vpop.f32.mrb[0].mxu0
    %v789 = vadd.f32 %v692, %v788
    %v790 = vpop.f32.mrb[0].mxu0
    %791 = vdwg.mxu0
    %792 = vmatprep.subr.mxu0 0.0
    %v793 = vand.u32 %v596, 4294901760
    %v794 = vsub.f32 %v596, %v793
    %795 = vmatpush1.msra.mxu0 %v794
    %796 = vmatprep.subr.mxu0 0.0
    %v797 = vand.u32 %v597, 4294901760
    %v798 = vsub.f32 %v597, %v797
    %799 = vmatpush1.msra.mxu0 %v798
    %800 = vmatprep.subr.mxu0 0.0
    %v801 = vand.u32 %v598, 4294901760
    %v802 = vsub.f32 %v598, %v801
    %803 = vmatpush1.msra.mxu0 %v802
    %804 = vmatprep.subr.mxu0 0.0
    %v805 = vand.u32 %v599, 4294901760
    %v806 = vsub.f32 %v599, %v805
    %807 = vmatpush1.msra.mxu0 %v806
    %808 = vmatprep.subr.mxu0 0.0
    %809 = vmatpush1.msra.mxu0 0.0
    %810 = vmatprep.subr.mxu0 0.0
    %811 = vmatpush1.msra.mxu0 0.0
    %812 = vmatprep.subr.mxu0 0.0
    %813 = vmatpush1.msra.mxu0 0.0
    %814 = vmatprep.subr.mxu0 0.0
    %815 = vmatpush1.msra.mxu0 0.0
    %816 = vmatprep.subr.mxu0 0.0
    %817 = vmatpush1.msra.mxu0 0.0
    %818 = vmatprep.subr.mxu0 0.0
    %819 = vmatpush1.msra.mxu0 0.0
    %820 = vmatprep.subr.mxu0 0.0
    %821 = vmatpush1.msra.mxu0 0.0
    %822 = vmatprep.subr.mxu0 0.0
    %823 = vmatpush1.msra.mxu0 0.0
    %824 = vmatprep.subr.mxu0 0.0
    %825 = vmatpush1.msra.mxu0 0.0
    %826 = vmatprep.subr.mxu0 0.0
    %827 = vmatpush1.msra.mxu0 0.0
    %828 = vmatprep.subr.mxu0 0.0
    %829 = vmatpush1.msra.mxu0 0.0
    %830 = vmatprep.subr.mxu0 0.0
    %831 = vmatpush1.msra.mxu0 0.0
    %832 = vmatprep.subr.mxu0 0.0
    %833 = vmatpush1.msra.mxu0 0.0
    %834 = vmatprep.subr.mxu0 0.0
    %835 = vmatpush1.msra.mxu0 0.0
    %836 = vmatprep.subr.mxu0 0.0
    %837 = vmatpush1.msra.mxu0 0.0
    %838 = vmatprep.subr.mxu0 0.0
    %839 = vmatpush1.msra.mxu0 0.0
    %840 = vmatprep.subr.mxu0 0.0
    %841 = vmatpush1.msra.mxu0 0.0
    %842 = vmatprep.subr.mxu0 0.0
    %843 = vmatpush1.msra.mxu0 0.0
    %844 = vmatprep.subr.mxu0 0.0
    %845 = vmatpush1.msra.mxu0 0.0
    %846 = vmatprep.subr.mxu0 0.0
    %847 = vmatpush1.msra.mxu0 0.0
    %848 = vmatprep.subr.mxu0 0.0
    %849 = vmatpush1.msra.mxu0 0.0
    %850 = vmatprep.subr.mxu0 0.0
    %851 = vmatpush1.msra.mxu0 0.0
    %852 = vmatprep.subr.mxu0 0.0
    %853 = vmatpush1.msra.mxu0 0.0
    %854 = vmatprep.subr.mxu0 0.0
    %855 = vmatpush1.msra.mxu0 0.0
    %856 = vmatprep.subr.mxu0 0.0
    %857 = vmatpush1.msra.mxu0 0.0
    %858 = vmatprep.subr.mxu0 0.0
    %859 = vmatpush1.msra.mxu0 0.0
    %860 = vmatprep.subr.mxu0 0.0
    %861 = vmatpush1.msra.mxu0 0.0
    %862 = vmatprep.subr.mxu0 0.0
    %863 = vmatpush1.msra.mxu0 0.0
    %864 = vmatprep.mubr.f32.mxu0 0.0
    %v865 = vand.u32 %v601, 4294901760
    %v866 = vsub.f32 %v601, %v865
    %867 = vmatmul.mubr.f32.gmra.mrb[0].mxu0 %v866
    %v868 = vpop.f32.mrb[0].mxu0
    %v869 = vadd.f32 %v783, %v868
    %v870 = vpop.f32.mrb[0].mxu0
    %871 = vmatprep.mubr.f32.mxu0 0.0
    %v872 = vand.u32 %v604, 4294901760
    %v873 = vsub.f32 %v604, %v872
    %874 = vmatmul.mubr.f32.gmra.mrb[0].mxu0 %v873
    %v875 = vpop.f32.mrb[0].mxu0
    %v876 = vadd.f32 %v789, %v875
    %v877 = vpop.f32.mrb[0].mxu0
    %878 = vdwg.mxu0
    %879 = vmatprep.subr.mxu0 0.0
    %v880 = vand.u32 %v596, 4294901760
    %881 = vmatpush1.msra.mxu0 %v880
    %882 = vmatprep.subr.mxu0 0.0
    %v883 = vand.u32 %v597, 4294901760
    %884 = vmatpush1.msra.mxu0 %v883
    %885 = vmatprep.subr.mxu0 0.0
    %v886 = vand.u32 %v598, 4294901760
    %887 = vmatpush1.msra.mxu0 %v886
    %888 = vmatprep.subr.mxu0 0.0
    %v889 = vand.u32 %v599, 4294901760
    %890 = vmatpush1.msra.mxu0 %v889
    %891 = vmatprep.subr.mxu0 0.0
    %892 = vmatpush1.msra.mxu0 0.0
    %893 = vmatprep.subr.mxu0 0.0
    %894 = vmatpush1.msra.mxu0 0.0
    %895 = vmatprep.subr.mxu0 0.0
    %896 = vmatpush1.msra.mxu0 0.0
    %897 = vmatprep.subr.mxu0 0.0
    %898 = vmatpush1.msra.mxu0 0.0
    %899 = vmatprep.subr.mxu0 0.0
    %900 = vmatpush1.msra.mxu0 0.0
    %901 = vmatprep.subr.mxu0 0.0
    %902 = vmatpush1.msra.mxu0 0.0
    %903 = vmatprep.subr.mxu0 0.0
    %904 = vmatpush1.msra.mxu0 0.0
    %905 = vmatprep.subr.mxu0 0.0
    %906 = vmatpush1.msra.mxu0 0.0
    %907 = vmatprep.subr.mxu0 0.0
    %908 = vmatpush1.msra.mxu0 0.0
    %909 = vmatprep.subr.mxu0 0.0
    %910 = vmatpush1.msra.mxu0 0.0
    %911 = vmatprep.subr.mxu0 0.0
    %912 = vmatpush1.msra.mxu0 0.0
    %913 = vmatprep.subr.mxu0 0.0
    %914 = vmatpush1.msra.mxu0 0.0
    %915 = vmatprep.subr.mxu0 0.0
    %916 = vmatpush1.msra.mxu0 0.0
    %917 = vmatprep.subr.mxu0 0.0
    %918 = vmatpush1.msra.mxu0 0.0
    %919 = vmatprep.subr.mxu0 0.0
    %920 = vmatpush1.msra.mxu0 0.0
    %921 = vmatprep.subr.mxu0 0.0
    %922 = vmatpush1.msra.mxu0 0.0
    %923 = vmatprep.subr.mxu0 0.0
    %924 = vmatpush1.msra.mxu0 0.0
    %925 = vmatprep.subr.mxu0 0.0
    %926 = vmatpush1.msra.mxu0 0.0
    %927 = vmatprep.subr.mxu0 0.0
    %928 = vmatpush1.msra.mxu0 0.0
    %929 = vmatprep.subr.mxu0 0.0
    %930 = vmatpush1.msra.mxu0 0.0
    %931 = vmatprep.subr.mxu0 0.0
    %932 = vmatpush1.msra.mxu0 0.0
    %933 = vmatprep.subr.mxu0 0.0
    %934 = vmatpush1.msra.mxu0 0.0
    %935 = vmatprep.subr.mxu0 0.0
    %936 = vmatpush1.msra.mxu0 0.0
    %937 = vmatprep.subr.mxu0 0.0
    %938 = vmatpush1.msra.mxu0 0.0
    %939 = vmatprep.subr.mxu0 0.0
    %940 = vmatpush1.msra.mxu0 0.0
    %941 = vmatprep.subr.mxu0 0.0
    %942 = vmatpush1.msra.mxu0 0.0
    %943 = vmatprep.subr.mxu0 0.0
    %944 = vmatpush1.msra.mxu0 0.0
    %945 = vmatprep.subr.mxu0 0.0
    %946 = vmatpush1.msra.mxu0 0.0
    %947 = vmatprep.mubr.f32.mxu0 0.0
    %v948 = vand.u32 %v601, 4294901760
    %v949 = vsub.f32 %v601, %v948
    %v950 = vand.u32 %v949, 4294901760
    %951 = vmatmul.mubr.f32.gmra.mrb[0].mxu0 %v950
    %v952 = vpop.f32.mrb[0].mxu0
    %v953 = vadd.f32 %v869, %v952
    %v954 = vpop.f32.mrb[0].mxu0
    %955 = vmatprep.mubr.f32.mxu0 0.0
    %v956 = vand.u32 %v604, 4294901760
    %v957 = vsub.f32 %v604, %v956
    %v958 = vand.u32 %v957, 4294901760
    %959 = vmatmul.mubr.f32.gmra.mrb[0].mxu0 %v958
    %v960 = vpop.f32.mrb[0].mxu0
    %v961 = vadd.f32 %v876, %v960
    %v962 = vpop.f32.mrb[0].mxu0
    %963 = vdwg.mxu0
    %964 = vmatprep.subr.mxu0 0.0
    %v965 = vand.u32 %v596, 4294901760
    %v966 = vsub.f32 %v596, %v965
    %v967 = vand.u32 %v966, 4294901760
    %968 = vmatpush1.msra.mxu0 %v967
    %969 = vmatprep.subr.mxu0 0.0
    %v970 = vand.u32 %v597, 4294901760
    %v971 = vsub.f32 %v597, %v970
    %v972 = vand.u32 %v971, 4294901760
    %973 = vmatpush1.msra.mxu0 %v972
    %974 = vmatprep.subr.mxu0 0.0
    %v975 = vand.u32 %v598, 4294901760
    %v976 = vsub.f32 %v598, %v975
    %v977 = vand.u32 %v976, 4294901760
    %978 = vmatpush1.msra.mxu0 %v977
    %979 = vmatprep.subr.mxu0 0.0
    %v980 = vand.u32 %v599, 4294901760
    %v981 = vsub.f32 %v599, %v980
    %v982 = vand.u32 %v981, 4294901760
    %983 = vmatpush1.msra.mxu0 %v982
    %984 = vmatprep.subr.mxu0 0.0
    %985 = vmatpush1.msra.mxu0 0.0
    %986 = vmatprep.subr.mxu0 0.0
    %987 = vmatpush1.msra.mxu0 0.0
    %988 = vmatprep.subr.mxu0 0.0
    %989 = vmatpush1.msra.mxu0 0.0
    %990 = vmatprep.subr.mxu0 0.0
    %991 = vmatpush1.msra.mxu0 0.0
    %992 = vmatprep.subr.mxu0 0.0
    %993 = vmatpush1.msra.mxu0 0.0
    %994 = vmatprep.subr.mxu0 0.0
    %995 = vmatpush1.msra.mxu0 0.0
    %996 = vmatprep.subr.mxu0 0.0
    %997 = vmatpush1.msra.mxu0 0.0
    %998 = vmatprep.subr.mxu0 0.0
    %999 = vmatpush1.msra.mxu0 0.0
    %1000 = vmatprep.subr.mxu0 0.0
    %1001 = vmatpush1.msra.mxu0 0.0
    %1002 = vmatprep.subr.mxu0 0.0
    %1003 = vmatpush1.msra.mxu0 0.0
    %1004 = vmatprep.subr.mxu0 0.0
    %1005 = vmatpush1.msra.mxu0 0.0
    %1006 = vmatprep.subr.mxu0 0.0
    %1007 = vmatpush1.msra.mxu0 0.0
    %1008 = vmatprep.subr.mxu0 0.0
    %1009 = vmatpush1.msra.mxu0 0.0
    %1010 = vmatprep.subr.mxu0 0.0
    %1011 = vmatpush1.msra.mxu0 0.0
    %1012 = vmatprep.subr.mxu0 0.0
    %1013 = vmatpush1.msra.mxu0 0.0
    %1014 = vmatprep.subr.mxu0 0.0
    %1015 = vmatpush1.msra.mxu0 0.0
    %1016 = vmatprep.subr.mxu0 0.0
    %1017 = vmatpush1.msra.mxu0 0.0
    %1018 = vmatprep.subr.mxu0 0.0
    %1019 = vmatpush1.msra.mxu0 0.0
    %1020 = vmatprep.subr.mxu0 0.0
    %1021 = vmatpush1.msra.mxu0 0.0
    %1022 = vmatprep.subr.mxu0 0.0
    %1023 = vmatpush1.msra.mxu0 0.0
    %1024 = vmatprep.subr.mxu0 0.0
    %1025 = vmatpush1.msra.mxu0 0.0
    %1026 = vmatprep.subr.mxu0 0.0
    %1027 = vmatpush1.msra.mxu0 0.0
    %1028 = vmatprep.subr.mxu0 0.0
    %1029 = vmatpush1.msra.mxu0 0.0
    %1030 = vmatprep.subr.mxu0 0.0
    %1031 = vmatpush1.msra.mxu0 0.0
    %1032 = vmatprep.subr.mxu0 0.0
    %1033 = vmatpush1.msra.mxu0 0.0
    %1034 = vmatprep.subr.mxu0 0.0
    %1035 = vmatpush1.msra.mxu0 0.0
    %1036 = vmatprep.subr.mxu0 0.0
    %1037 = vmatpush1.msra.mxu0 0.0
    %1038 = vmatprep.subr.mxu0 0.0
    %1039 = vmatpush1.msra.mxu0 0.0
    %1040 = vmatprep.mubr.f32.mxu0 0.0
    %v1041 = vand.u32 %v601, 4294901760
    %1042 = vmatmul.mubr.f32.gmra.mrb[0].mxu0 %v1041
    %v1043 = vpop.f32.mrb[0].mxu0
    %v1044 = vadd.f32 %v953, %v1043
    %v1045 = vpop.f32.mrb[0].mxu0
    %1046 = vmatprep.mubr.f32.mxu0 0.0
    %v1047 = vand.u32 %v604, 4294901760
    %1048 = vmatmul.mubr.f32.gmra.mrb[0].mxu0 %v1047
    %v1049 = vpop.f32.mrb[0].mxu0
    %v1050 = vadd.f32 %v961, %v1049
    %v1051 = vpop.f32.mrb[0].mxu0
    %1052 = vdwg.mxu0
    %1053 = vmatprep.subr.mxu0 0.0
    %v1054 = vand.u32 %v596, 4294901760
    %1055 = vmatpush1.msra.mxu0 %v1054
    %1056 = vmatprep.subr.mxu0 0.0
    %v1057 = vand.u32 %v597, 4294901760
    %1058 = vmatpush1.msra.mxu0 %v1057
    %1059 = vmatprep.subr.mxu0 0.0
    %v1060 = vand.u32 %v598, 4294901760
    %1061 = vmatpush1.msra.mxu0 %v1060
    %1062 = vmatprep.subr.mxu0 0.0
    %v1063 = vand.u32 %v599, 4294901760
    %1064 = vmatpush1.msra.mxu0 %v1063
    %1065 = vmatprep.subr.mxu0 0.0
    %1066 = vmatpush1.msra.mxu0 0.0
    %1067 = vmatprep.subr.mxu0 0.0
    %1068 = vmatpush1.msra.mxu0 0.0
    %1069 = vmatprep.subr.mxu0 0.0
    %1070 = vmatpush1.msra.mxu0 0.0
    %1071 = vmatprep.subr.mxu0 0.0
    %1072 = vmatpush1.msra.mxu0 0.0
    %1073 = vmatprep.subr.mxu0 0.0
    %1074 = vmatpush1.msra.mxu0 0.0
    %1075 = vmatprep.subr.mxu0 0.0
    %1076 = vmatpush1.msra.mxu0 0.0
    %1077 = vmatprep.subr.mxu0 0.0
    %1078 = vmatpush1.msra.mxu0 0.0
    %1079 = vmatprep.subr.mxu0 0.0
    %1080 = vmatpush1.msra.mxu0 0.0
    %1081 = vmatprep.subr.mxu0 0.0
    %1082 = vmatpush1.msra.mxu0 0.0
    %1083 = vmatprep.subr.mxu0 0.0
    %1084 = vmatpush1.msra.mxu0 0.0
    %1085 = vmatprep.subr.mxu0 0.0
    %1086 = vmatpush1.msra.mxu0 0.0
    %1087 = vmatprep.subr.mxu0 0.0
    %1088 = vmatpush1.msra.mxu0 0.0
    %1089 = vmatprep.subr.mxu0 0.0
    %1090 = vmatpush1.msra.mxu0 0.0
    %1091 = vmatprep.subr.mxu0 0.0
    %1092 = vmatpush1.msra.mxu0 0.0
    %1093 = vmatprep.subr.mxu0 0.0
    %1094 = vmatpush1.msra.mxu0 0.0
    %1095 = vmatprep.subr.mxu0 0.0
    %1096 = vmatpush1.msra.mxu0 0.0
    %1097 = vmatprep.subr.mxu0 0.0
    %1098 = vmatpush1.msra.mxu0 0.0
    %1099 = vmatprep.subr.mxu0 0.0
    %1100 = vmatpush1.msra.mxu0 0.0
    %1101 = vmatprep.subr.mxu0 0.0
    %1102 = vmatpush1.msra.mxu0 0.0
    %1103 = vmatprep.subr.mxu0 0.0
    %1104 = vmatpush1.msra.mxu0 0.0
    %1105 = vmatprep.subr.mxu0 0.0
    %1106 = vmatpush1.msra.mxu0 0.0
    %1107 = vmatprep.subr.mxu0 0.0
    %1108 = vmatpush1.msra.mxu0 0.0
    %1109 = vmatprep.subr.mxu0 0.0
    %1110 = vmatpush1.msra.mxu0 0.0
    %1111 = vmatprep.subr.mxu0 0.0
    %1112 = vmatpush1.msra.mxu0 0.0
    %1113 = vmatprep.subr.mxu0 0.0
    %1114 = vmatpush1.msra.mxu0 0.0
    %1115 = vmatprep.subr.mxu0 0.0
    %1116 = vmatpush1.msra.mxu0 0.0
    %1117 = vmatprep.subr.mxu0 0.0
    %1118 = vmatpush1.msra.mxu0 0.0
    %1119 = vmatprep.subr.mxu0 0.0
    %1120 = vmatpush1.msra.mxu0 0.0
    %1121 = vmatprep.mubr.f32.mxu0 0.0
    %v1122 = vand.u32 %v601, 4294901760
    %1123 = vmatmul.mubr.f32.gmra.mrb[0].mxu0 %v1122
    %v1124 = vpop.f32.mrb[0].mxu0
    %v1125 = vadd.f32 %v1044, %v1124
    %v1126 = vpop.f32.mrb[0].mxu0
    %1127 = vmatprep.mubr.f32.mxu0 0.0
    %v1128 = vand.u32 %v604, 4294901760
    %1129 = vmatmul.mubr.f32.gmra.mrb[0].mxu0 %v1128
    %v1130 = vpop.f32.mrb[0].mxu0
    %v1131 = vadd.f32 %v1050, %v1130
    %v1132 = vpop.f32.mrb[0].mxu0
    %1133 = vdwg.mxu0
    %1136 = vrot.lane.b32.xlu0 %v1125, 32
    %v1137 = vpop.permute.xlu0 %1136
    %1138 = vrot.lane.b32.xlu0 %v1131, 32
    %v1139 = vpop.permute.xlu0 %1138
    %vm1142 = vcmask 523520
    %1143 = vst.msk [vmem:[#allocation5] sm:$0xff] %vm1142, %v1137
    %1144 = vst.msk [vmem:[#allocation5 + $0x8] sm:$0xff] %vm1142, %v1139
    %1145 = vset.pattern.permute.xlu0 2
    %1146 = vperm.xlu0 %1145, %v26
    %v1147 = vpop.permute.xlu0 %1146
    %1148 = vset.pattern.permute.xlu0 2
    %1149 = vperm.xlu0 %1148, %v27
    %v1150 = vpop.permute.xlu0 %1149
    %vm1151 = vcmp.eq.s32.totalorder %v1147, %v29
    %vm1152 = vcmp.eq.s32.totalorder %v1150, %v29
    %v1153 = vsel %vm1151, 1, 0
    %v1154 = vsel %vm1152, 1, 0
    %v1155 = vcvt.s32.f32 %v1153
    %v1156 = vcvt.s32.f32 %v1154
    %s1157 = scalar_lea.vmem [#allocation2], 64
    %v1158 = vld [vmem:[%s1157] sm:$0xff]
    %v1159 = vld [vmem:[%s1157 + $0x8] sm:$0xff]
    %v1160 = vld [vmem:[%s1157 + $0x10] sm:$0xff]
    %v1161 = vld [vmem:[%s1157 + $0x18] sm:$0xff]
    %v1163 = vsel %vm46, %v1155, 0
    %v1166 = vsel %vm46, %v1156, 0
    %1168 = vmatprep.subr.mxu0 0.0
    %v1169 = vand.u32 %v1158, 4294901760
    %1170 = vmatpush1.msra.mxu0 %v1169
    %1171 = vmatprep.subr.mxu0 0.0
    %v1172 = vand.u32 %v1159, 4294901760
    %1173 = vmatpush1.msra.mxu0 %v1172
    %1174 = vmatprep.subr.mxu0 0.0
    %v1175 = vand.u32 %v1160, 4294901760
    %1176 = vmatpush1.msra.mxu0 %v1175
    %1177 = vmatprep.subr.mxu0 0.0
    %v1178 = vand.u32 %v1161, 4294901760
    %1179 = vmatpush1.msra.mxu0 %v1178
    %1180 = vmatprep.subr.mxu0 0.0
    %1181 = vmatpush1.msra.mxu0 0.0
    %1182 = vmatprep.subr.mxu0 0.0
    %1183 = vmatpush1.msra.mxu0 0.0
    %1184 = vmatprep.subr.mxu0 0.0
    %1185 = vmatpush1.msra.mxu0 0.0
    %1186 = vmatprep.subr.mxu0 0.0
    %1187 = vmatpush1.msra.mxu0 0.0
    %1188 = vmatprep.subr.mxu0 0.0
    %1189 = vmatpush1.msra.mxu0 0.0
    %1190 = vmatprep.subr.mxu0 0.0
    %1191 = vmatpush1.msra.mxu0 0.0
    %1192 = vmatprep.subr.mxu0 0.0
    %1193 = vmatpush1.msra.mxu0 0.0
    %1194 = vmatprep.subr.mxu0 0.0
    %1195 = vmatpush1.msra.mxu0 0.0
    %1196 = vmatprep.subr.mxu0 0.0
    %1197 = vmatpush1.msra.mxu0 0.0
    %1198 = vmatprep.subr.mxu0 0.0
    %1199 = vmatpush1.msra.mxu0 0.0
    %1200 = vmatprep.subr.mxu0 0.0
    %1201 = vmatpush1.msra.mxu0 0.0
    %1202 = vmatprep.subr.mxu0 0.0
    %1203 = vmatpush1.msra.mxu0 0.0
    %1204 = vmatprep.subr.mxu0 0.0
    %1205 = vmatpush1.msra.mxu0 0.0
    %1206 = vmatprep.subr.mxu0 0.0
    %1207 = vmatpush1.msra.mxu0 0.0
    %1208 = vmatprep.subr.mxu0 0.0
    %1209 = vmatpush1.msra.mxu0 0.0
    %1210 = vmatprep.subr.mxu0 0.0
    %1211 = vmatpush1.msra.mxu0 0.0
    %1212 = vmatprep.subr.mxu0 0.0
    %1213 = vmatpush1.msra.mxu0 0.0
    %1214 = vmatprep.subr.mxu0 0.0
    %1215 = vmatpush1.msra.mxu0 0.0
    %1216 = vmatprep.subr.mxu0 0.0
    %1217 = vmatpush1.msra.mxu0 0.0
    %1218 = vmatprep.subr.mxu0 0.0
    %1219 = vmatpush1.msra.mxu0 0.0
    %1220 = vmatprep.subr.mxu0 0.0
    %1221 = vmatpush1.msra.mxu0 0.0
    %1222 = vmatprep.subr.mxu0 0.0
    %1223 = vmatpush1.msra.mxu0 0.0
    %1224 = vmatprep.subr.mxu0 0.0
    %1225 = vmatpush1.msra.mxu0 0.0
    %1226 = vmatprep.subr.mxu0 0.0
    %1227 = vmatpush1.msra.mxu0 0.0
    %1228 = vmatprep.subr.mxu0 0.0
    %1229 = vmatpush1.msra.mxu0 0.0
    %1230 = vmatprep.subr.mxu0 0.0
    %1231 = vmatpush1.msra.mxu0 0.0
    %1232 = vmatprep.subr.mxu0 0.0
    %1233 = vmatpush1.msra.mxu0 0.0
    %1234 = vmatprep.subr.mxu0 0.0
    %1235 = vmatpush1.msra.mxu0 0.0
    %1236 = vmatprep.mubr.f32.mxu0 0.0
    %v1237 = vand.u32 %v1163, 4294901760
    %v1238 = vsub.f32 %v1163, %v1237
    %v1239 = vand.u32 %v1238, 4294901760
    %v1240 = vsub.f32 %v1238, %v1239
    %v1241 = vand.u32 %v1240, 4294901760
    %1242 = vmatmul.mubr.f32.gmra.mrb[0].mxu0 %v1241
    %v1243 = vpop.f32.mrb[0].mxu0
    %v1244 = vadd.f32 0.0, %v1243
    %v1245 = vpop.f32.mrb[0].mxu0
    %1246 = vmatprep.mubr.f32.mxu0 0.0
    %v1247 = vand.u32 %v1166, 4294901760
    %v1248 = vsub.f32 %v1166, %v1247
    %v1249 = vand.u32 %v1248, 4294901760
    %v1250 = vsub.f32 %v1248, %v1249
    %v1251 = vand.u32 %v1250, 4294901760
    %1252 = vmatmul.mubr.f32.gmra.mrb[0].mxu0 %v1251
    %v1253 = vpop.f32.mrb[0].mxu0
    %v1254 = vadd.f32 0.0, %v1253
    %v1255 = vpop.f32.mrb[0].mxu0
    %1256 = vdwg.mxu0
    %1257 = vmatprep.subr.mxu0 0.0
    %v1258 = vand.u32 %v1158, 4294901760
    %v1259 = vsub.f32 %v1158, %v1258
    %v1260 = vand.u32 %v1259, 4294901760
    %v1261 = vsub.f32 %v1259, %v1260
    %v1262 = vand.u32 %v1261, 4294901760
    %1263 = vmatpush1.msra.mxu0 %v1262
    %1264 = vmatprep.subr.mxu0 0.0
    %v1265 = vand.u32 %v1159, 4294901760
    %v1266 = vsub.f32 %v1159, %v1265
    %v1267 = vand.u32 %v1266, 4294901760
    %v1268 = vsub.f32 %v1266, %v1267
    %v1269 = vand.u32 %v1268, 4294901760
    %1270 = vmatpush1.msra.mxu0 %v1269
    %1271 = vmatprep.subr.mxu0 0.0
    %v1272 = vand.u32 %v1160, 4294901760
    %v1273 = vsub.f32 %v1160, %v1272
    %v1274 = vand.u32 %v1273, 4294901760
    %v1275 = vsub.f32 %v1273, %v1274
    %v1276 = vand.u32 %v1275, 4294901760
    %1277 = vmatpush1.msra.mxu0 %v1276
    %1278 = vmatprep.subr.mxu0 0.0
    %v1279 = vand.u32 %v1161, 4294901760
    %v1280 = vsub.f32 %v1161, %v1279
    %v1281 = vand.u32 %v1280, 4294901760
    %v1282 = vsub.f32 %v1280, %v1281
    %v1283 = vand.u32 %v1282, 4294901760
    %1284 = vmatpush1.msra.mxu0 %v1283
    %1285 = vmatprep.subr.mxu0 0.0
    %1286 = vmatpush1.msra.mxu0 0.0
    %1287 = vmatprep.subr.mxu0 0.0
    %1288 = vmatpush1.msra.mxu0 0.0
    %1289 = vmatprep.subr.mxu0 0.0
    %1290 = vmatpush1.msra.mxu0 0.0
    %1291 = vmatprep.subr.mxu0 0.0
    %1292 = vmatpush1.msra.mxu0 0.0
    %1293 = vmatprep.subr.mxu0 0.0
    %1294 = vmatpush1.msra.mxu0 0.0
    %1295 = vmatprep.subr.mxu0 0.0
    %1296 = vmatpush1.msra.mxu0 0.0
    %1297 = vmatprep.subr.mxu0 0.0
    %1298 = vmatpush1.msra.mxu0 0.0
    %1299 = vmatprep.subr.mxu0 0.0
    %1300 = vmatpush1.msra.mxu0 0.0
    %1301 = vmatprep.subr.mxu0 0.0
    %1302 = vmatpush1.msra.mxu0 0.0
    %1303 = vmatprep.subr.mxu0 0.0
    %1304 = vmatpush1.msra.mxu0 0.0
    %1305 = vmatprep.subr.mxu0 0.0
    %1306 = vmatpush1.msra.mxu0 0.0
    %1307 = vmatprep.subr.mxu0 0.0
    %1308 = vmatpush1.msra.mxu0 0.0
    %1309 = vmatprep.subr.mxu0 0.0
    %1310 = vmatpush1.msra.mxu0 0.0
    %1311 = vmatprep.subr.mxu0 0.0
    %1312 = vmatpush1.msra.mxu0 0.0
    %1313 = vmatprep.subr.mxu0 0.0
    %1314 = vmatpush1.msra.mxu0 0.0
    %1315 = vmatprep.subr.mxu0 0.0
    %1316 = vmatpush1.msra.mxu0 0.0
    %1317 = vmatprep.subr.mxu0 0.0
    %1318 = vmatpush1.msra.mxu0 0.0
    %1319 = vmatprep.subr.mxu0 0.0
    %1320 = vmatpush1.msra.mxu0 0.0
    %1321 = vmatprep.subr.mxu0 0.0
    %1322 = vmatpush1.msra.mxu0 0.0
    %1323 = vmatprep.subr.mxu0 0.0
    %1324 = vmatpush1.msra.mxu0 0.0
    %1325 = vmatprep.subr.mxu0 0.0
    %1326 = vmatpush1.msra.mxu0 0.0
    %1327 = vmatprep.subr.mxu0 0.0
    %1328 = vmatpush1.msra.mxu0 0.0
    %1329 = vmatprep.subr.mxu0 0.0
    %1330 = vmatpush1.msra.mxu0 0.0
    %1331 = vmatprep.subr.mxu0 0.0
    %1332 = vmatpush1.msra.mxu0 0.0
    %1333 = vmatprep.subr.mxu0 0.0
    %1334 = vmatpush1.msra.mxu0 0.0
    %1335 = vmatprep.subr.mxu0 0.0
    %1336 = vmatpush1.msra.mxu0 0.0
    %1337 = vmatprep.subr.mxu0 0.0
    %1338 = vmatpush1.msra.mxu0 0.0
    %1339 = vmatprep.subr.mxu0 0.0
    %1340 = vmatpush1.msra.mxu0 0.0
    %1341 = vmatprep.mubr.f32.mxu0 0.0
    %v1342 = vand.u32 %v1163, 4294901760
    %1343 = vmatmul.mubr.f32.gmra.mrb[0].mxu0 %v1342
    %v1344 = vpop.f32.mrb[0].mxu0
    %v1345 = vadd.f32 %v1244, %v1344
    %v1346 = vpop.f32.mrb[0].mxu0
    %1347 = vmatprep.mubr.f32.mxu0 0.0
    %v1348 = vand.u32 %v1166, 4294901760
    %1349 = vmatmul.mubr.f32.gmra.mrb[0].mxu0 %v1348
    %v1350 = vpop.f32.mrb[0].mxu0
    %v1351 = vadd.f32 %v1254, %v1350
    %v1352 = vpop.f32.mrb[0].mxu0
    %1353 = vdwg.mxu0
    %1354 = vmatprep.subr.mxu0 0.0
    %v1355 = vand.u32 %v1158, 4294901760
    %v1356 = vsub.f32 %v1158, %v1355
    %1357 = vmatpush1.msra.mxu0 %v1356
    %1358 = vmatprep.subr.mxu0 0.0
    %v1359 = vand.u32 %v1159, 4294901760
    %v1360 = vsub.f32 %v1159, %v1359
    %1361 = vmatpush1.msra.mxu0 %v1360
    %1362 = vmatprep.subr.mxu0 0.0
    %v1363 = vand.u32 %v1160, 4294901760
    %v1364 = vsub.f32 %v1160, %v1363
    %1365 = vmatpush1.msra.mxu0 %v1364
    %1366 = vmatprep.subr.mxu0 0.0
    %v1367 = vand.u32 %v1161, 4294901760
    %v1368 = vsub.f32 %v1161, %v1367
    %1369 = vmatpush1.msra.mxu0 %v1368
    %1370 = vmatprep.subr.mxu0 0.0
    %1371 = vmatpush1.msra.mxu0 0.0
    %1372 = vmatprep.subr.mxu0 0.0
    %1373 = vmatpush1.msra.mxu0 0.0
    %1374 = vmatprep.subr.mxu0 0.0
    %1375 = vmatpush1.msra.mxu0 0.0
    %1376 = vmatprep.subr.mxu0 0.0
    %1377 = vmatpush1.msra.mxu0 0.0
    %1378 = vmatprep.subr.mxu0 0.0
    %1379 = vmatpush1.msra.mxu0 0.0
    %1380 = vmatprep.subr.mxu0 0.0
    %1381 = vmatpush1.msra.mxu0 0.0
    %1382 = vmatprep.subr.mxu0 0.0
    %1383 = vmatpush1.msra.mxu0 0.0
    %1384 = vmatprep.subr.mxu0 0.0
    %1385 = vmatpush1.msra.mxu0 0.0
    %1386 = vmatprep.subr.mxu0 0.0
    %1387 = vmatpush1.msra.mxu0 0.0
    %1388 = vmatprep.subr.mxu0 0.0
    %1389 = vmatpush1.msra.mxu0 0.0
    %1390 = vmatprep.subr.mxu0 0.0
    %1391 = vmatpush1.msra.mxu0 0.0
    %1392 = vmatprep.subr.mxu0 0.0
    %1393 = vmatpush1.msra.mxu0 0.0
    %1394 = vmatprep.subr.mxu0 0.0
    %1395 = vmatpush1.msra.mxu0 0.0
    %1396 = vmatprep.subr.mxu0 0.0
    %1397 = vmatpush1.msra.mxu0 0.0
    %1398 = vmatprep.subr.mxu0 0.0
    %1399 = vmatpush1.msra.mxu0 0.0
    %1400 = vmatprep.subr.mxu0 0.0
    %1401 = vmatpush1.msra.mxu0 0.0
    %1402 = vmatprep.subr.mxu0 0.0
    %1403 = vmatpush1.msra.mxu0 0.0
    %1404 = vmatprep.subr.mxu0 0.0
    %1405 = vmatpush1.msra.mxu0 0.0
    %1406 = vmatprep.subr.mxu0 0.0
    %1407 = vmatpush1.msra.mxu0 0.0
    %1408 = vmatprep.subr.mxu0 0.0
    %1409 = vmatpush1.msra.mxu0 0.0
    %1410 = vmatprep.subr.mxu0 0.0
    %1411 = vmatpush1.msra.mxu0 0.0
    %1412 = vmatprep.subr.mxu0 0.0
    %1413 = vmatpush1.msra.mxu0 0.0
    %1414 = vmatprep.subr.mxu0 0.0
    %1415 = vmatpush1.msra.mxu0 0.0
    %1416 = vmatprep.subr.mxu0 0.0
    %1417 = vmatpush1.msra.mxu0 0.0
    %1418 = vmatprep.subr.mxu0 0.0
    %1419 = vmatpush1.msra.mxu0 0.0
    %1420 = vmatprep.subr.mxu0 0.0
    %1421 = vmatpush1.msra.mxu0 0.0
    %1422 = vmatprep.subr.mxu0 0.0
    %1423 = vmatpush1.msra.mxu0 0.0
    %1424 = vmatprep.subr.mxu0 0.0
    %1425 = vmatpush1.msra.mxu0 0.0
    %1426 = vmatprep.mubr.f32.mxu0 0.0
    %v1427 = vand.u32 %v1163, 4294901760
    %v1428 = vsub.f32 %v1163, %v1427
    %1429 = vmatmul.mubr.f32.gmra.mrb[0].mxu0 %v1428
    %v1430 = vpop.f32.mrb[0].mxu0
    %v1431 = vadd.f32 %v1345, %v1430
    %v1432 = vpop.f32.mrb[0].mxu0
    %1433 = vmatprep.mubr.f32.mxu0 0.0
    %v1434 = vand.u32 %v1166, 4294901760
    %v1435 = vsub.f32 %v1166, %v1434
    %1436 = vmatmul.mubr.f32.gmra.mrb[0].mxu0 %v1435
    %v1437 = vpop.f32.mrb[0].mxu0
    %v1438 = vadd.f32 %v1351, %v1437
    %v1439 = vpop.f32.mrb[0].mxu0
    %1440 = vdwg.mxu0
    %1441 = vmatprep.subr.mxu0 0.0
    %v1442 = vand.u32 %v1158, 4294901760
    %1443 = vmatpush1.msra.mxu0 %v1442
    %1444 = vmatprep.subr.mxu0 0.0
    %v1445 = vand.u32 %v1159, 4294901760
    %1446 = vmatpush1.msra.mxu0 %v1445
    %1447 = vmatprep.subr.mxu0 0.0
    %v1448 = vand.u32 %v1160, 4294901760
    %1449 = vmatpush1.msra.mxu0 %v1448
    %1450 = vmatprep.subr.mxu0 0.0
    %v1451 = vand.u32 %v1161, 4294901760
    %1452 = vmatpush1.msra.mxu0 %v1451
    %1453 = vmatprep.subr.mxu0 0.0
    %1454 = vmatpush1.msra.mxu0 0.0
    %1455 = vmatprep.subr.mxu0 0.0
    %1456 = vmatpush1.msra.mxu0 0.0
    %1457 = vmatprep.subr.mxu0 0.0
    %1458 = vmatpush1.msra.mxu0 0.0
    %1459 = vmatprep.subr.mxu0 0.0
    %1460 = vmatpush1.msra.mxu0 0.0
    %1461 = vmatprep.subr.mxu0 0.0
    %1462 = vmatpush1.msra.mxu0 0.0
    %1463 = vmatprep.subr.mxu0 0.0
    %1464 = vmatpush1.msra.mxu0 0.0
    %1465 = vmatprep.subr.mxu0 0.0
    %1466 = vmatpush1.msra.mxu0 0.0
    %1467 = vmatprep.subr.mxu0 0.0
    %1468 = vmatpush1.msra.mxu0 0.0
    %1469 = vmatprep.subr.mxu0 0.0
    %1470 = vmatpush1.msra.mxu0 0.0
    %1471 = vmatprep.subr.mxu0 0.0
    %1472 = vmatpush1.msra.mxu0 0.0
    %1473 = vmatprep.subr.mxu0 0.0
    %1474 = vmatpush1.msra.mxu0 0.0
    %1475 = vmatprep.subr.mxu0 0.0
    %1476 = vmatpush1.msra.mxu0 0.0
    %1477 = vmatprep.subr.mxu0 0.0
    %1478 = vmatpush1.msra.mxu0 0.0
    %1479 = vmatprep.subr.mxu0 0.0
    %1480 = vmatpush1.msra.mxu0 0.0
    %1481 = vmatprep.subr.mxu0 0.0
    %1482 = vmatpush1.msra.mxu0 0.0
    %1483 = vmatprep.subr.mxu0 0.0
    %1484 = vmatpush1.msra.mxu0 0.0
    %1485 = vmatprep.subr.mxu0 0.0
    %1486 = vmatpush1.msra.mxu0 0.0
    %1487 = vmatprep.subr.mxu0 0.0
    %1488 = vmatpush1.msra.mxu0 0.0
    %1489 = vmatprep.subr.mxu0 0.0
    %1490 = vmatpush1.msra.mxu0 0.0
    %1491 = vmatprep.subr.mxu0 0.0
    %1492 = vmatpush1.msra.mxu0 0.0
    %1493 = vmatprep.subr.mxu0 0.0
    %1494 = vmatpush1.msra.mxu0 0.0
    %1495 = vmatprep.subr.mxu0 0.0
    %1496 = vmatpush1.msra.mxu0 0.0
    %1497 = vmatprep.subr.mxu0 0.0
    %1498 = vmatpush1.msra.mxu0 0.0
    %1499 = vmatprep.subr.mxu0 0.0
    %1500 = vmatpush1.msra.mxu0 0.0
    %1501 = vmatprep.subr.mxu0 0.0
    %1502 = vmatpush1.msra.mxu0 0.0
    %1503 = vmatprep.subr.mxu0 0.0
    %1504 = vmatpush1.msra.mxu0 0.0
    %1505 = vmatprep.subr.mxu0 0.0
    %1506 = vmatpush1.msra.mxu0 0.0
    %1507 = vmatprep.subr.mxu0 0.0
    %1508 = vmatpush1.msra.mxu0 0.0
    %1509 = vmatprep.mubr.f32.mxu0 0.0
    %v1510 = vand.u32 %v1163, 4294901760
    %v1511 = vsub.f32 %v1163, %v1510
    %v1512 = vand.u32 %v1511, 4294901760
    %1513 = vmatmul.mubr.f32.gmra.mrb[0].mxu0 %v1512
    %v1514 = vpop.f32.mrb[0].mxu0
    %v1515 = vadd.f32 %v1431, %v1514
    %v1516 = vpop.f32.mrb[0].mxu0
    %1517 = vmatprep.mubr.f32.mxu0 0.0
    %v1518 = vand.u32 %v1166, 4294901760
    %v1519 = vsub.f32 %v1166, %v1518
    %v1520 = vand.u32 %v1519, 4294901760
    %1521 = vmatmul.mubr.f32.gmra.mrb[0].mxu0 %v1520
    %v1522 = vpop.f32.mrb[0].mxu0
    %v1523 = vadd.f32 %v1438, %v1522
    %v1524 = vpop.f32.mrb[0].mxu0
    %1525 = vdwg.mxu0
    %1526 = vmatprep.subr.mxu0 0.0
    %v1527 = vand.u32 %v1158, 4294901760
    %v1528 = vsub.f32 %v1158, %v1527
    %v1529 = vand.u32 %v1528, 4294901760
    %1530 = vmatpush1.msra.mxu0 %v1529
    %1531 = vmatprep.subr.mxu0 0.0
    %v1532 = vand.u32 %v1159, 4294901760
    %v1533 = vsub.f32 %v1159, %v1532
    %v1534 = vand.u32 %v1533, 4294901760
    %1535 = vmatpush1.msra.mxu0 %v1534
    %1536 = vmatprep.subr.mxu0 0.0
    %v1537 = vand.u32 %v1160, 4294901760
    %v1538 = vsub.f32 %v1160, %v1537
    %v1539 = vand.u32 %v1538, 4294901760
    %1540 = vmatpush1.msra.mxu0 %v1539
    %1541 = vmatprep.subr.mxu0 0.0
    %v1542 = vand.u32 %v1161, 4294901760
    %v1543 = vsub.f32 %v1161, %v1542
    %v1544 = vand.u32 %v1543, 4294901760
    %1545 = vmatpush1.msra.mxu0 %v1544
    %1546 = vmatprep.subr.mxu0 0.0
    %1547 = vmatpush1.msra.mxu0 0.0
    %1548 = vmatprep.subr.mxu0 0.0
    %1549 = vmatpush1.msra.mxu0 0.0
    %1550 = vmatprep.subr.mxu0 0.0
    %1551 = vmatpush1.msra.mxu0 0.0
    %1552 = vmatprep.subr.mxu0 0.0
    %1553 = vmatpush1.msra.mxu0 0.0
    %1554 = vmatprep.subr.mxu0 0.0
    %1555 = vmatpush1.msra.mxu0 0.0
    %1556 = vmatprep.subr.mxu0 0.0
    %1557 = vmatpush1.msra.mxu0 0.0
    %1558 = vmatprep.subr.mxu0 0.0
    %1559 = vmatpush1.msra.mxu0 0.0
    %1560 = vmatprep.subr.mxu0 0.0
    %1561 = vmatpush1.msra.mxu0 0.0
    %1562 = vmatprep.subr.mxu0 0.0
    %1563 = vmatpush1.msra.mxu0 0.0
    %1564 = vmatprep.subr.mxu0 0.0
    %1565 = vmatpush1.msra.mxu0 0.0
    %1566 = vmatprep.subr.mxu0 0.0
    %1567 = vmatpush1.msra.mxu0 0.0
    %1568 = vmatprep.subr.mxu0 0.0
    %1569 = vmatpush1.msra.mxu0 0.0
    %1570 = vmatprep.subr.mxu0 0.0
    %1571 = vmatpush1.msra.mxu0 0.0
    %1572 = vmatprep.subr.mxu0 0.0
    %1573 = vmatpush1.msra.mxu0 0.0
    %1574 = vmatprep.subr.mxu0 0.0
    %1575 = vmatpush1.msra.mxu0 0.0
    %1576 = vmatprep.subr.mxu0 0.0
    %1577 = vmatpush1.msra.mxu0 0.0
    %1578 = vmatprep.subr.mxu0 0.0
    %1579 = vmatpush1.msra.mxu0 0.0
    %1580 = vmatprep.subr.mxu0 0.0
    %1581 = vmatpush1.msra.mxu0 0.0
    %1582 = vmatprep.subr.mxu0 0.0
    %1583 = vmatpush1.msra.mxu0 0.0
    %1584 = vmatprep.subr.mxu0 0.0
    %1585 = vmatpush1.msra.mxu0 0.0
    %1586 = vmatprep.subr.mxu0 0.0
    %1587 = vmatpush1.msra.mxu0 0.0
    %1588 = vmatprep.subr.mxu0 0.0
    %1589 = vmatpush1.msra.mxu0 0.0
    %1590 = vmatprep.subr.mxu0 0.0
    %1591 = vmatpush1.msra.mxu0 0.0
    %1592 = vmatprep.subr.mxu0 0.0
    %1593 = vmatpush1.msra.mxu0 0.0
    %1594 = vmatprep.subr.mxu0 0.0
    %1595 = vmatpush1.msra.mxu0 0.0
    %1596 = vmatprep.subr.mxu0 0.0
    %1597 = vmatpush1.msra.mxu0 0.0
    %1598 = vmatprep.subr.mxu0 0.0
    %1599 = vmatpush1.msra.mxu0 0.0
    %1600 = vmatprep.subr.mxu0 0.0
    %1601 = vmatpush1.msra.mxu0 0.0
    %1602 = vmatprep.mubr.f32.mxu0 0.0
    %v1603 = vand.u32 %v1163, 4294901760
    %1604 = vmatmul.mubr.f32.gmra.mrb[0].mxu0 %v1603
    %v1605 = vpop.f32.mrb[0].mxu0
    %v1606 = vadd.f32 %v1515, %v1605
    %v1607 = vpop.f32.mrb[0].mxu0
    %1608 = vmatprep.mubr.f32.mxu0 0.0
    %v1609 = vand.u32 %v1166, 4294901760
    %1610 = vmatmul.mubr.f32.gmra.mrb[0].mxu0 %v1609
    %v1611 = vpop.f32.mrb[0].mxu0
    %v1612 = vadd.f32 %v1523, %v1611
    %v1613 = vpop.f32.mrb[0].mxu0
    %1614 = vdwg.mxu0
    %1615 = vmatprep.subr.mxu0 0.0
    %v1616 = vand.u32 %v1158, 4294901760
    %1617 = vmatpush1.msra.mxu0 %v1616
    %1618 = vmatprep.subr.mxu0 0.0
    %v1619 = vand.u32 %v1159, 4294901760
    %1620 = vmatpush1.msra.mxu0 %v1619
    %1621 = vmatprep.subr.mxu0 0.0
    %v1622 = vand.u32 %v1160, 4294901760
    %1623 = vmatpush1.msra.mxu0 %v1622
    %1624 = vmatprep.subr.mxu0 0.0
    %v1625 = vand.u32 %v1161, 4294901760
    %1626 = vmatpush1.msra.mxu0 %v1625
    %1627 = vmatprep.subr.mxu0 0.0
    %1628 = vmatpush1.msra.mxu0 0.0
    %1629 = vmatprep.subr.mxu0 0.0
    %1630 = vmatpush1.msra.mxu0 0.0
    %1631 = vmatprep.subr.mxu0 0.0
    %1632 = vmatpush1.msra.mxu0 0.0
    %1633 = vmatprep.subr.mxu0 0.0
    %1634 = vmatpush1.msra.mxu0 0.0
    %1635 = vmatprep.subr.mxu0 0.0
    %1636 = vmatpush1.msra.mxu0 0.0
    %1637 = vmatprep.subr.mxu0 0.0
    %1638 = vmatpush1.msra.mxu0 0.0
    %1639 = vmatprep.subr.mxu0 0.0
    %1640 = vmatpush1.msra.mxu0 0.0
    %1641 = vmatprep.subr.mxu0 0.0
    %1642 = vmatpush1.msra.mxu0 0.0
    %1643 = vmatprep.subr.mxu0 0.0
    %1644 = vmatpush1.msra.mxu0 0.0
    %1645 = vmatprep.subr.mxu0 0.0
    %1646 = vmatpush1.msra.mxu0 0.0
    %1647 = vmatprep.subr.mxu0 0.0
    %1648 = vmatpush1.msra.mxu0 0.0
    %1649 = vmatprep.subr.mxu0 0.0
    %1650 = vmatpush1.msra.mxu0 0.0
    %1651 = vmatprep.subr.mxu0 0.0
    %1652 = vmatpush1.msra.mxu0 0.0
    %1653 = vmatprep.subr.mxu0 0.0
    %1654 = vmatpush1.msra.mxu0 0.0
    %1655 = vmatprep.subr.mxu0 0.0
    %1656 = vmatpush1.msra.mxu0 0.0
    %1657 = vmatprep.subr.mxu0 0.0
    %1658 = vmatpush1.msra.mxu0 0.0
    %1659 = vmatprep.subr.mxu0 0.0
    %1660 = vmatpush1.msra.mxu0 0.0
    %1661 = vmatprep.subr.mxu0 0.0
    %1662 = vmatpush1.msra.mxu0 0.0
    %1663 = vmatprep.subr.mxu0 0.0
    %1664 = vmatpush1.msra.mxu0 0.0
    %1665 = vmatprep.subr.mxu0 0.0
    %1666 = vmatpush1.msra.mxu0 0.0
    %1667 = vmatprep.subr.mxu0 0.0
    %1668 = vmatpush1.msra.mxu0 0.0
    %1669 = vmatprep.subr.mxu0 0.0
    %1670 = vmatpush1.msra.mxu0 0.0
    %1671 = vmatprep.subr.mxu0 0.0
    %1672 = vmatpush1.msra.mxu0 0.0
    %1673 = vmatprep.subr.mxu0 0.0
    %1674 = vmatpush1.msra.mxu0 0.0
    %1675 = vmatprep.subr.mxu0 0.0
    %1676 = vmatpush1.msra.mxu0 0.0
    %1677 = vmatprep.subr.mxu0 0.0
    %1678 = vmatpush1.msra.mxu0 0.0
    %1679 = vmatprep.subr.mxu0 0.0
    %1680 = vmatpush1.msra.mxu0 0.0
    %1681 = vmatprep.subr.mxu0 0.0
    %1682 = vmatpush1.msra.mxu0 0.0
    %1683 = vmatprep.mubr.f32.mxu0 0.0
    %v1684 = vand.u32 %v1163, 4294901760
    %1685 = vmatmul.mubr.f32.gmra.mrb[0].mxu0 %v1684
    %v1686 = vpop.f32.mrb[0].mxu0
    %v1687 = vadd.f32 %v1606, %v1686
    %v1688 = vpop.f32.mrb[0].mxu0
    %1689 = vmatprep.mubr.f32.mxu0 0.0
    %v1690 = vand.u32 %v1166, 4294901760
    %1691 = vmatmul.mubr.f32.gmra.mrb[0].mxu0 %v1690
    %v1692 = vpop.f32.mrb[0].mxu0
    %v1693 = vadd.f32 %v1612, %v1692
    %v1694 = vpop.f32.mrb[0].mxu0
    %1695 = vdwg.mxu0
    %1698 = vrot.lane.b32.xlu0 %v1687, 64
    %v1699 = vpop.permute.xlu0 %1698
    %1700 = vrot.lane.b32.xlu0 %v1693, 64
    %v1701 = vpop.permute.xlu0 %1700
    %vm1704 = vcmask 785920
    %1705 = vst.msk [vmem:[#allocation5] sm:$0xff] %vm1704, %v1699
    %1706 = vst.msk [vmem:[#allocation5 + $0x8] sm:$0xff] %vm1704, %v1701
    %1707 = vset.pattern.permute.xlu0 3
    %1708 = vperm.xlu0 %1707, %v26
    %v1709 = vpop.permute.xlu0 %1708
    %1710 = vset.pattern.permute.xlu0 3
    %1711 = vperm.xlu0 %1710, %v27
    %v1712 = vpop.permute.xlu0 %1711
    %vm1713 = vcmp.eq.s32.totalorder %v1709, %v29
    %vm1714 = vcmp.eq.s32.totalorder %v1712, %v29
    %v1715 = vsel %vm1713, 1, 0
    %v1716 = vsel %vm1714, 1, 0
    %v1717 = vcvt.s32.f32 %v1715
    %v1718 = vcvt.s32.f32 %v1716
    %s1719 = scalar_lea.vmem [#allocation2], 96
    %v1720 = vld [vmem:[%s1719] sm:$0xff]
    %v1721 = vld [vmem:[%s1719 + $0x8] sm:$0xff]
    %v1722 = vld [vmem:[%s1719 + $0x10] sm:$0xff]
    %v1723 = vld [vmem:[%s1719 + $0x18] sm:$0xff]
    %v1725 = vsel %vm46, %v1717, 0
    %v1728 = vsel %vm46, %v1718, 0
    %1730 = vmatprep.subr.mxu0 0.0
    %v1731 = vand.u32 %v1720, 4294901760
    %1732 = vmatpush1.msra.mxu0 %v1731
    %1733 = vmatprep.subr.mxu0 0.0
    %v1734 = vand.u32 %v1721, 4294901760
    %1735 = vmatpush1.msra.mxu0 %v1734
    %1736 = vmatprep.subr.mxu0 0.0
    %v1737 = vand.u32 %v1722, 4294901760
    %1738 = vmatpush1.msra.mxu0 %v1737
    %1739 = vmatprep.subr.mxu0 0.0
    %v1740 = vand.u32 %v1723, 4294901760
    %1741 = vmatpush1.msra.mxu0 %v1740
    %1742 = vmatprep.subr.mxu0 0.0
    %1743 = vmatpush1.msra.mxu0 0.0
    %1744 = vmatprep.subr.mxu0 0.0
    %1745 = vmatpush1.msra.mxu0 0.0
    %1746 = vmatprep.subr.mxu0 0.0
    %1747 = vmatpush1.msra.mxu0 0.0
    %1748 = vmatprep.subr.mxu0 0.0
    %1749 = vmatpush1.msra.mxu0 0.0
    %1750 = vmatprep.subr.mxu0 0.0
    %1751 = vmatpush1.msra.mxu0 0.0
    %1752 = vmatprep.subr.mxu0 0.0
    %1753 = vmatpush1.msra.mxu0 0.0
    %1754 = vmatprep.subr.mxu0 0.0
    %1755 = vmatpush1.msra.mxu0 0.0
    %1756 = vmatprep.subr.mxu0 0.0
    %1757 = vmatpush1.msra.mxu0 0.0
    %1758 = vmatprep.subr.mxu0 0.0
    %1759 = vmatpush1.msra.mxu0 0.0
    %1760 = vmatprep.subr.mxu0 0.0
    %1761 = vmatpush1.msra.mxu0 0.0
    %1762 = vmatprep.subr.mxu0 0.0
    %1763 = vmatpush1.msra.mxu0 0.0
    %1764 = vmatprep.subr.mxu0 0.0
    %1765 = vmatpush1.msra.mxu0 0.0
    %1766 = vmatprep.subr.mxu0 0.0
    %1767 = vmatpush1.msra.mxu0 0.0
    %1768 = vmatprep.subr.mxu0 0.0
    %1769 = vmatpush1.msra.mxu0 0.0
    %1770 = vmatprep.subr.mxu0 0.0
    %1771 = vmatpush1.msra.mxu0 0.0
    %1772 = vmatprep.subr.mxu0 0.0
    %1773 = vmatpush1.msra.mxu0 0.0
    %1774 = vmatprep.subr.mxu0 0.0
    %1775 = vmatpush1.msra.mxu0 0.0
    %1776 = vmatprep.subr.mxu0 0.0
    %1777 = vmatpush1.msra.mxu0 0.0
    %1778 = vmatprep.subr.mxu0 0.0
    %1779 = vmatpush1.msra.mxu0 0.0
    %1780 = vmatprep.subr.mxu0 0.0
    %1781 = vmatpush1.msra.mxu0 0.0
    %1782 = vmatprep.subr.mxu0 0.0
    %1783 = vmatpush1.msra.mxu0 0.0
    %1784 = vmatprep.subr.mxu0 0.0
    %1785 = vmatpush1.msra.mxu0 0.0
    %1786 = vmatprep.subr.mxu0 0.0
    %1787 = vmatpush1.msra.mxu0 0.0
    %1788 = vmatprep.subr.mxu0 0.0
    %1789 = vmatpush1.msra.mxu0 0.0
    %1790 = vmatprep.subr.mxu0 0.0
    %1791 = vmatpush1.msra.mxu0 0.0
    %1792 = vmatprep.subr.mxu0 0.0
    %1793 = vmatpush1.msra.mxu0 0.0
    %1794 = vmatprep.subr.mxu0 0.0
    %1795 = vmatpush1.msra.mxu0 0.0
    %1796 = vmatprep.subr.mxu0 0.0
    %1797 = vmatpush1.msra.mxu0 0.0
    %1798 = vmatprep.mubr.f32.mxu0 0.0
    %v1799 = vand.u32 %v1725, 4294901760
    %v1800 = vsub.f32 %v1725, %v1799
    %v1801 = vand.u32 %v1800, 4294901760
    %v1802 = vsub.f32 %v1800, %v1801
    %v1803 = vand.u32 %v1802, 4294901760
    %1804 = vmatmul.mubr.f32.gmra.mrb[0].mxu0 %v1803
    %v1805 = vpop.f32.mrb[0].mxu0
    %v1806 = vadd.f32 0.0, %v1805
    %v1807 = vpop.f32.mrb[0].mxu0
    %1808 = vmatprep.mubr.f32.mxu0 0.0
    %v1809 = vand.u32 %v1728, 4294901760
    %v1810 = vsub.f32 %v1728, %v1809
    %v1811 = vand.u32 %v1810, 4294901760
    %v1812 = vsub.f32 %v1810, %v1811
    %v1813 = vand.u32 %v1812, 4294901760
    %1814 = vmatmul.mubr.f32.gmra.mrb[0].mxu0 %v1813
    %v1815 = vpop.f32.mrb[0].mxu0
    %v1816 = vadd.f32 0.0, %v1815
    %v1817 = vpop.f32.mrb[0].mxu0
    %1818 = vdwg.mxu0
    %1819 = vmatprep.subr.mxu0 0.0
    %v1820 = vand.u32 %v1720, 4294901760
    %v1821 = vsub.f32 %v1720, %v1820
    %v1822 = vand.u32 %v1821, 4294901760
    %v1823 = vsub.f32 %v1821, %v1822
    %v1824 = vand.u32 %v1823, 4294901760
    %1825 = vmatpush1.msra.mxu0 %v1824
    %1826 = vmatprep.subr.mxu0 0.0
    %v1827 = vand.u32 %v1721, 4294901760
    %v1828 = vsub.f32 %v1721, %v1827
    %v1829 = vand.u32 %v1828, 4294901760
    %v1830 = vsub.f32 %v1828, %v1829
    %v1831 = vand.u32 %v1830, 4294901760
    %1832 = vmatpush1.msra.mxu0 %v1831
    %1833 = vmatprep.subr.mxu0 0.0
    %v1834 = vand.u32 %v1722, 4294901760
    %v1835 = vsub.f32 %v1722, %v1834
    %v1836 = vand.u32 %v1835, 4294901760
    %v1837 = vsub.f32 %v1835, %v1836
    %v1838 = vand.u32 %v1837, 4294901760
    %1839 = vmatpush1.msra.mxu0 %v1838
    %1840 = vmatprep.subr.mxu0 0.0
    %v1841 = vand.u32 %v1723, 4294901760
    %v1842 = vsub.f32 %v1723, %v1841
    %v1843 = vand.u32 %v1842, 4294901760
    %v1844 = vsub.f32 %v1842, %v1843
    %v1845 = vand.u32 %v1844, 4294901760
    %1846 = vmatpush1.msra.mxu0 %v1845
    %1847 = vmatprep.subr.mxu0 0.0
    %1848 = vmatpush1.msra.mxu0 0.0
    %1849 = vmatprep.subr.mxu0 0.0
    %1850 = vmatpush1.msra.mxu0 0.0
    %1851 = vmatprep.subr.mxu0 0.0
    %1852 = vmatpush1.msra.mxu0 0.0
    %1853 = vmatprep.subr.mxu0 0.0
    %1854 = vmatpush1.msra.mxu0 0.0
    %1855 = vmatprep.subr.mxu0 0.0
    %1856 = vmatpush1.msra.mxu0 0.0
    %1857 = vmatprep.subr.mxu0 0.0
    %1858 = vmatpush1.msra.mxu0 0.0
    %1859 = vmatprep.subr.mxu0 0.0
    %1860 = vmatpush1.msra.mxu0 0.0
    %1861 = vmatprep.subr.mxu0 0.0
    %1862 = vmatpush1.msra.mxu0 0.0
    %1863 = vmatprep.subr.mxu0 0.0
    %1864 = vmatpush1.msra.mxu0 0.0
    %1865 = vmatprep.subr.mxu0 0.0
    %1866 = vmatpush1.msra.mxu0 0.0
    %1867 = vmatprep.subr.mxu0 0.0
    %1868 = vmatpush1.msra.mxu0 0.0
    %1869 = vmatprep.subr.mxu0 0.0
    %1870 = vmatpush1.msra.mxu0 0.0
    %1871 = vmatprep.subr.mxu0 0.0
    %1872 = vmatpush1.msra.mxu0 0.0
    %1873 = vmatprep.subr.mxu0 0.0
    %1874 = vmatpush1.msra.mxu0 0.0
    %1875 = vmatprep.subr.mxu0 0.0
    %1876 = vmatpush1.msra.mxu0 0.0
    %1877 = vmatprep.subr.mxu0 0.0
    %1878 = vmatpush1.msra.mxu0 0.0
    %1879 = vmatprep.subr.mxu0 0.0
    %1880 = vmatpush1.msra.mxu0 0.0
    %1881 = vmatprep.subr.mxu0 0.0
    %1882 = vmatpush1.msra.mxu0 0.0
    %1883 = vmatprep.subr.mxu0 0.0
    %1884 = vmatpush1.msra.mxu0 0.0
    %1885 = vmatprep.subr.mxu0 0.0
    %1886 = vmatpush1.msra.mxu0 0.0
    %1887 = vmatprep.subr.mxu0 0.0
    %1888 = vmatpush1.msra.mxu0 0.0
    %1889 = vmatprep.subr.mxu0 0.0
    %1890 = vmatpush1.msra.mxu0 0.0
    %1891 = vmatprep.subr.mxu0 0.0
    %1892 = vmatpush1.msra.mxu0 0.0
    %1893 = vmatprep.subr.mxu0 0.0
    %1894 = vmatpush1.msra.mxu0 0.0
    %1895 = vmatprep.subr.mxu0 0.0
    %1896 = vmatpush1.msra.mxu0 0.0
    %1897 = vmatprep.subr.mxu0 0.0
    %1898 = vmatpush1.msra.mxu0 0.0
    %1899 = vmatprep.subr.mxu0 0.0
    %1900 = vmatpush1.msra.mxu0 0.0
    %1901 = vmatprep.subr.mxu0 0.0
    %1902 = vmatpush1.msra.mxu0 0.0
    %1903 = vmatprep.mubr.f32.mxu0 0.0
    %v1904 = vand.u32 %v1725, 4294901760
    %1905 = vmatmul.mubr.f32.gmra.mrb[0].mxu0 %v1904
    %v1906 = vpop.f32.mrb[0].mxu0
    %v1907 = vadd.f32 %v1806, %v1906
    %v1908 = vpop.f32.mrb[0].mxu0
    %1909 = vmatprep.mubr.f32.mxu0 0.0
    %v1910 = vand.u32 %v1728, 4294901760
    %1911 = vmatmul.mubr.f32.gmra.mrb[0].mxu0 %v1910
    %v1912 = vpop.f32.mrb[0].mxu0
    %v1913 = vadd.f32 %v1816, %v1912
    %v1914 = vpop.f32.mrb[0].mxu0
    %1915 = vdwg.mxu0
    %1916 = vmatprep.subr.mxu0 0.0
    %v1917 = vand.u32 %v1720, 4294901760
    %v1918 = vsub.f32 %v1720, %v1917
    %1919 = vmatpush1.msra.mxu0 %v1918
    %1920 = vmatprep.subr.mxu0 0.0
    %v1921 = vand.u32 %v1721, 4294901760
    %v1922 = vsub.f32 %v1721, %v1921
    %1923 = vmatpush1.msra.mxu0 %v1922
    %1924 = vmatprep.subr.mxu0 0.0
    %v1925 = vand.u32 %v1722, 4294901760
    %v1926 = vsub.f32 %v1722, %v1925
    %1927 = vmatpush1.msra.mxu0 %v1926
    %1928 = vmatprep.subr.mxu0 0.0
    %v1929 = vand.u32 %v1723, 4294901760
    %v1930 = vsub.f32 %v1723, %v1929
    %1931 = vmatpush1.msra.mxu0 %v1930
    %1932 = vmatprep.subr.mxu0 0.0
    %1933 = vmatpush1.msra.mxu0 0.0
    %1934 = vmatprep.subr.mxu0 0.0
    %1935 = vmatpush1.msra.mxu0 0.0
    %1936 = vmatprep.subr.mxu0 0.0
    %1937 = vmatpush1.msra.mxu0 0.0
    %1938 = vmatprep.subr.mxu0 0.0
    %1939 = vmatpush1.msra.mxu0 0.0
    %1940 = vmatprep.subr.mxu0 0.0
    %1941 = vmatpush1.msra.mxu0 0.0
    %1942 = vmatprep.subr.mxu0 0.0
    %1943 = vmatpush1.msra.mxu0 0.0
    %1944 = vmatprep.subr.mxu0 0.0
    %1945 = vmatpush1.msra.mxu0 0.0
    %1946 = vmatprep.subr.mxu0 0.0
    %1947 = vmatpush1.msra.mxu0 0.0
    %1948 = vmatprep.subr.mxu0 0.0
    %1949 = vmatpush1.msra.mxu0 0.0
    %1950 = vmatprep.subr.mxu0 0.0
    %1951 = vmatpush1.msra.mxu0 0.0
    %1952 = vmatprep.subr.mxu0 0.0
    %1953 = vmatpush1.msra.mxu0 0.0
    %1954 = vmatprep.subr.mxu0 0.0
    %1955 = vmatpush1.msra.mxu0 0.0
    %1956 = vmatprep.subr.mxu0 0.0
    %1957 = vmatpush1.msra.mxu0 0.0
    %1958 = vmatprep.subr.mxu0 0.0
    %1959 = vmatpush1.msra.mxu0 0.0
    %1960 = vmatprep.subr.mxu0 0.0
    %1961 = vmatpush1.msra.mxu0 0.0
    %1962 = vmatprep.subr.mxu0 0.0
    %1963 = vmatpush1.msra.mxu0 0.0
    %1964 = vmatprep.subr.mxu0 0.0
    %1965 = vmatpush1.msra.mxu0 0.0
    %1966 = vmatprep.subr.mxu0 0.0
    %1967 = vmatpush1.msra.mxu0 0.0
    %1968 = vmatprep.subr.mxu0 0.0
    %1969 = vmatpush1.msra.mxu0 0.0
    %1970 = vmatprep.subr.mxu0 0.0
    %1971 = vmatpush1.msra.mxu0 0.0
    %1972 = vmatprep.subr.mxu0 0.0
    %1973 = vmatpush1.msra.mxu0 0.0
    %1974 = vmatprep.subr.mxu0 0.0
    %1975 = vmatpush1.msra.mxu0 0.0
    %1976 = vmatprep.subr.mxu0 0.0
    %1977 = vmatpush1.msra.mxu0 0.0
    %1978 = vmatprep.subr.mxu0 0.0
    %1979 = vmatpush1.msra.mxu0 0.0
    %1980 = vmatprep.subr.mxu0 0.0
    %1981 = vmatpush1.msra.mxu0 0.0
    %1982 = vmatprep.subr.mxu0 0.0
    %1983 = vmatpush1.msra.mxu0 0.0
    %1984 = vmatprep.subr.mxu0 0.0
    %1985 = vmatpush1.msra.mxu0 0.0
    %1986 = vmatprep.subr.mxu0 0.0
    %1987 = vmatpush1.msra.mxu0 0.0
    %1988 = vmatprep.mubr.f32.mxu0 0.0
    %v1989 = vand.u32 %v1725, 4294901760
    %v1990 = vsub.f32 %v1725, %v1989
    %1991 = vmatmul.mubr.f32.gmra.mrb[0].mxu0 %v1990
    %v1992 = vpop.f32.mrb[0].mxu0
    %v1993 = vadd.f32 %v1907, %v1992
    %v1994 = vpop.f32.mrb[0].mxu0
    %1995 = vmatprep.mubr.f32.mxu0 0.0
    %v1996 = vand.u32 %v1728, 4294901760
    %v1997 = vsub.f32 %v1728, %v1996
    %1998 = vmatmul.mubr.f32.gmra.mrb[0].mxu0 %v1997
    %v1999 = vpop.f32.mrb[0].mxu0
    %v2000 = vadd.f32 %v1913, %v1999
    %v2001 = vpop.f32.mrb[0].mxu0
    %2002 = vdwg.mxu0
    %2003 = vmatprep.subr.mxu0 0.0
    %v2004 = vand.u32 %v1720, 4294901760
    %2005 = vmatpush1.msra.mxu0 %v2004
    %2006 = vmatprep.subr.mxu0 0.0
    %v2007 = vand.u32 %v1721, 4294901760
    %2008 = vmatpush1.msra.mxu0 %v2007
    %2009 = vmatprep.subr.mxu0 0.0
    %v2010 = vand.u32 %v1722, 4294901760
    %2011 = vmatpush1.msra.mxu0 %v2010
    %2012 = vmatprep.subr.mxu0 0.0
    %v2013 = vand.u32 %v1723, 4294901760
    %2014 = vmatpush1.msra.mxu0 %v2013
    %2015 = vmatprep.subr.mxu0 0.0
    %2016 = vmatpush1.msra.mxu0 0.0
    %2017 = vmatprep.subr.mxu0 0.0
    %2018 = vmatpush1.msra.mxu0 0.0
    %2019 = vmatprep.subr.mxu0 0.0
    %2020 = vmatpush1.msra.mxu0 0.0
    %2021 = vmatprep.subr.mxu0 0.0
    %2022 = vmatpush1.msra.mxu0 0.0
    %2023 = vmatprep.subr.mxu0 0.0
    %2024 = vmatpush1.msra.mxu0 0.0
    %2025 = vmatprep.subr.mxu0 0.0
    %2026 = vmatpush1.msra.mxu0 0.0
    %2027 = vmatprep.subr.mxu0 0.0
    %2028 = vmatpush1.msra.mxu0 0.0
    %2029 = vmatprep.subr.mxu0 0.0
    %2030 = vmatpush1.msra.mxu0 0.0
    %2031 = vmatprep.subr.mxu0 0.0
    %2032 = vmatpush1.msra.mxu0 0.0
    %2033 = vmatprep.subr.mxu0 0.0
    %2034 = vmatpush1.msra.mxu0 0.0
    %2035 = vmatprep.subr.mxu0 0.0
    %2036 = vmatpush1.msra.mxu0 0.0
    %2037 = vmatprep.subr.mxu0 0.0
    %2038 = vmatpush1.msra.mxu0 0.0
    %2039 = vmatprep.subr.mxu0 0.0
    %2040 = vmatpush1.msra.mxu0 0.0
    %2041 = vmatprep.subr.mxu0 0.0
    %2042 = vmatpush1.msra.mxu0 0.0
    %2043 = vmatprep.subr.mxu0 0.0
    %2044 = vmatpush1.msra.mxu0 0.0
    %2045 = vmatprep.subr.mxu0 0.0
    %2046 = vmatpush1.msra.mxu0 0.0
    %2047 = vmatprep.subr.mxu0 0.0
    %2048 = vmatpush1.msra.mxu0 0.0
    %2049 = vmatprep.subr.mxu0 0.0
    %2050 = vmatpush1.msra.mxu0 0.0
    %2051 = vmatprep.subr.mxu0 0.0
    %2052 = vmatpush1.msra.mxu0 0.0
    %2053 = vmatprep.subr.mxu0 0.0
    %2054 = vmatpush1.msra.mxu0 0.0
    %2055 = vmatprep.subr.mxu0 0.0
    %2056 = vmatpush1.msra.mxu0 0.0
    %2057 = vmatprep.subr.mxu0 0.0
    %2058 = vmatpush1.msra.mxu0 0.0
    %2059 = vmatprep.subr.mxu0 0.0
    %2060 = vmatpush1.msra.mxu0 0.0
    %2061 = vmatprep.subr.mxu0 0.0
    %2062 = vmatpush1.msra.mxu0 0.0
    %2063 = vmatprep.subr.mxu0 0.0
    %2064 = vmatpush1.msra.mxu0 0.0
    %2065 = vmatprep.subr.mxu0 0.0
    %2066 = vmatpush1.msra.mxu0 0.0
    %2067 = vmatprep.subr.mxu0 0.0
    %2068 = vmatpush1.msra.mxu0 0.0
    %2069 = vmatprep.subr.mxu0 0.0
    %2070 = vmatpush1.msra.mxu0 0.0
    %2071 = vmatprep.mubr.f32.mxu0 0.0
    %v2072 = vand.u32 %v1725, 4294901760
    %v2073 = vsub.f32 %v1725, %v2072
    %v2074 = vand.u32 %v2073, 4294901760
    %2075 = vmatmul.mubr.f32.gmra.mrb[0].mxu0 %v2074
    %v2076 = vpop.f32.mrb[0].mxu0
    %v2077 = vadd.f32 %v1993, %v2076
    %v2078 = vpop.f32.mrb[0].mxu0
    %2079 = vmatprep.mubr.f32.mxu0 0.0
    %v2080 = vand.u32 %v1728, 4294901760
    %v2081 = vsub.f32 %v1728, %v2080
    %v2082 = vand.u32 %v2081, 4294901760
    %2083 = vmatmul.mubr.f32.gmra.mrb[0].mxu0 %v2082
    %v2084 = vpop.f32.mrb[0].mxu0
    %v2085 = vadd.f32 %v2000, %v2084
    %v2086 = vpop.f32.mrb[0].mxu0
    %2087 = vdwg.mxu0
    %2088 = vmatprep.subr.mxu0 0.0
    %v2089 = vand.u32 %v1720, 4294901760
    %v2090 = vsub.f32 %v1720, %v2089
    %v2091 = vand.u32 %v2090, 4294901760
    %2092 = vmatpush1.msra.mxu0 %v2091
    %2093 = vmatprep.subr.mxu0 0.0
    %v2094 = vand.u32 %v1721, 4294901760
    %v2095 = vsub.f32 %v1721, %v2094
    %v2096 = vand.u32 %v2095, 4294901760
    %2097 = vmatpush1.msra.mxu0 %v2096
    %2098 = vmatprep.subr.mxu0 0.0
    %v2099 = vand.u32 %v1722, 4294901760
    %v2100 = vsub.f32 %v1722, %v2099
    %v2101 = vand.u32 %v2100, 4294901760
    %2102 = vmatpush1.msra.mxu0 %v2101
    %2103 = vmatprep.subr.mxu0 0.0
    %v2104 = vand.u32 %v1723, 4294901760
    %v2105 = vsub.f32 %v1723, %v2104
    %v2106 = vand.u32 %v2105, 4294901760
    %2107 = vmatpush1.msra.mxu0 %v2106
    %2108 = vmatprep.subr.mxu0 0.0
    %2109 = vmatpush1.msra.mxu0 0.0
    %2110 = vmatprep.subr.mxu0 0.0
    %2111 = vmatpush1.msra.mxu0 0.0
    %2112 = vmatprep.subr.mxu0 0.0
    %2113 = vmatpush1.msra.mxu0 0.0
    %2114 = vmatprep.subr.mxu0 0.0
    %2115 = vmatpush1.msra.mxu0 0.0
    %2116 = vmatprep.subr.mxu0 0.0
    %2117 = vmatpush1.msra.mxu0 0.0
    %2118 = vmatprep.subr.mxu0 0.0
    %2119 = vmatpush1.msra.mxu0 0.0
    %2120 = vmatprep.subr.mxu0 0.0
    %2121 = vmatpush1.msra.mxu0 0.0
    %2122 = vmatprep.subr.mxu0 0.0
    %2123 = vmatpush1.msra.mxu0 0.0
    %2124 = vmatprep.subr.mxu0 0.0
    %2125 = vmatpush1.msra.mxu0 0.0
    %2126 = vmatprep.subr.mxu0 0.0
    %2127 = vmatpush1.msra.mxu0 0.0
    %2128 = vmatprep.subr.mxu0 0.0
    %2129 = vmatpush1.msra.mxu0 0.0
    %2130 = vmatprep.subr.mxu0 0.0
    %2131 = vmatpush1.msra.mxu0 0.0
    %2132 = vmatprep.subr.mxu0 0.0
    %2133 = vmatpush1.msra.mxu0 0.0
    %2134 = vmatprep.subr.mxu0 0.0
    %2135 = vmatpush1.msra.mxu0 0.0
    %2136 = vmatprep.subr.mxu0 0.0
    %2137 = vmatpush1.msra.mxu0 0.0
    %2138 = vmatprep.subr.mxu0 0.0
    %2139 = vmatpush1.msra.mxu0 0.0
    %2140 = vmatprep.subr.mxu0 0.0
    %2141 = vmatpush1.msra.mxu0 0.0
    %2142 = vmatprep.subr.mxu0 0.0
    %2143 = vmatpush1.msra.mxu0 0.0
    %2144 = vmatprep.subr.mxu0 0.0
    %2145 = vmatpush1.msra.mxu0 0.0
    %2146 = vmatprep.subr.mxu0 0.0
    %2147 = vmatpush1.msra.mxu0 0.0
    %2148 = vmatprep.subr.mxu0 0.0
    %2149 = vmatpush1.msra.mxu0 0.0
    %2150 = vmatprep.subr.mxu0 0.0
    %2151 = vmatpush1.msra.mxu0 0.0
    %2152 = vmatprep.subr.mxu0 0.0
    %2153 = vmatpush1.msra.mxu0 0.0
    %2154 = vmatprep.subr.mxu0 0.0
    %2155 = vmatpush1.msra.mxu0 0.0
    %2156 = vmatprep.subr.mxu0 0.0
    %2157 = vmatpush1.msra.mxu0 0.0
    %2158 = vmatprep.subr.mxu0 0.0
    %2159 = vmatpush1.msra.mxu0 0.0
    %2160 = vmatprep.subr.mxu0 0.0
    %2161 = vmatpush1.msra.mxu0 0.0
    %2162 = vmatprep.subr.mxu0 0.0
    %2163 = vmatpush1.msra.mxu0 0.0
    %2164 = vmatprep.mubr.f32.mxu0 0.0
    %v2165 = vand.u32 %v1725, 4294901760
    %2166 = vmatmul.mubr.f32.gmra.mrb[0].mxu0 %v2165
    %v2167 = vpop.f32.mrb[0].mxu0
    %v2168 = vadd.f32 %v2077, %v2167
    %v2169 = vpop.f32.mrb[0].mxu0
    %2170 = vmatprep.mubr.f32.mxu0 0.0
    %v2171 = vand.u32 %v1728, 4294901760
    %2172 = vmatmul.mubr.f32.gmra.mrb[0].mxu0 %v2171
    %v2173 = vpop.f32.mrb[0].mxu0
    %v2174 = vadd.f32 %v2085, %v2173
    %v2175 = vpop.f32.mrb[0].mxu0
    %2176 = vdwg.mxu0
    %2177 = vmatprep.subr.mxu0 0.0
    %v2178 = vand.u32 %v1720, 4294901760
    %2179 = vmatpush1.msra.mxu0 %v2178
    %2180 = vmatprep.subr.mxu0 0.0
    %v2181 = vand.u32 %v1721, 4294901760
    %2182 = vmatpush1.msra.mxu0 %v2181
    %2183 = vmatprep.subr.mxu0 0.0
    %v2184 = vand.u32 %v1722, 4294901760
    %2185 = vmatpush1.msra.mxu0 %v2184
    %2186 = vmatprep.subr.mxu0 0.0
    %v2187 = vand.u32 %v1723, 4294901760
    %2188 = vmatpush1.msra.mxu0 %v2187
    %2189 = vmatprep.subr.mxu0 0.0
    %2190 = vmatpush1.msra.mxu0 0.0
    %2191 = vmatprep.subr.mxu0 0.0
    %2192 = vmatpush1.msra.mxu0 0.0
    %2193 = vmatprep.subr.mxu0 0.0
    %2194 = vmatpush1.msra.mxu0 0.0
    %2195 = vmatprep.subr.mxu0 0.0
    %2196 = vmatpush1.msra.mxu0 0.0
    %2197 = vmatprep.subr.mxu0 0.0
    %2198 = vmatpush1.msra.mxu0 0.0
    %2199 = vmatprep.subr.mxu0 0.0
    %2200 = vmatpush1.msra.mxu0 0.0
    %2201 = vmatprep.subr.mxu0 0.0
    %2202 = vmatpush1.msra.mxu0 0.0
    %2203 = vmatprep.subr.mxu0 0.0
    %2204 = vmatpush1.msra.mxu0 0.0
    %2205 = vmatprep.subr.mxu0 0.0
    %2206 = vmatpush1.msra.mxu0 0.0
    %2207 = vmatprep.subr.mxu0 0.0
    %2208 = vmatpush1.msra.mxu0 0.0
    %2209 = vmatprep.subr.mxu0 0.0
    %2210 = vmatpush1.msra.mxu0 0.0
    %2211 = vmatprep.subr.mxu0 0.0
    %2212 = vmatpush1.msra.mxu0 0.0
    %2213 = vmatprep.subr.mxu0 0.0
    %2214 = vmatpush1.msra.mxu0 0.0
    %2215 = vmatprep.subr.mxu0 0.0
    %2216 = vmatpush1.msra.mxu0 0.0
    %2217 = vmatprep.subr.mxu0 0.0
    %2218 = vmatpush1.msra.mxu0 0.0
    %2219 = vmatprep.subr.mxu0 0.0
    %2220 = vmatpush1.msra.mxu0 0.0
    %2221 = vmatprep.subr.mxu0 0.0
    %2222 = vmatpush1.msra.mxu0 0.0
    %2223 = vmatprep.subr.mxu0 0.0
    %2224 = vmatpush1.msra.mxu0 0.0
    %2225 = vmatprep.subr.mxu0 0.0
    %2226 = vmatpush1.msra.mxu0 0.0
    %2227 = vmatprep.subr.mxu0 0.0
    %2228 = vmatpush1.msra.mxu0 0.0
    %2229 = vmatprep.subr.mxu0 0.0
    %2230 = vmatpush1.msra.mxu0 0.0
    %2231 = vmatprep.subr.mxu0 0.0
    %2232 = vmatpush1.msra.mxu0 0.0
    %2233 = vmatprep.subr.mxu0 0.0
    %2234 = vmatpush1.msra.mxu0 0.0
    %2235 = vmatprep.subr.mxu0 0.0
    %2236 = vmatpush1.msra.mxu0 0.0
    %2237 = vmatprep.subr.mxu0 0.0
    %2238 = vmatpush1.msra.mxu0 0.0
    %2239 = vmatprep.subr.mxu0 0.0
    %2240 = vmatpush1.msra.mxu0 0.0
    %2241 = vmatprep.subr.mxu0 0.0
    %2242 = vmatpush1.msra.mxu0 0.0
    %2243 = vmatprep.subr.mxu0 0.0
    %2244 = vmatpush1.msra.mxu0 0.0
    %2245 = vmatprep.mubr.f32.mxu0 0.0
    %v2246 = vand.u32 %v1725, 4294901760
    %2247 = vmatmul.mubr.f32.gmra.mrb[0].mxu0 %v2246
    %v2248 = vpop.f32.mrb[0].mxu0
    %v2249 = vadd.f32 %v2168, %v2248
    %v2250 = vpop.f32.mrb[0].mxu0
    %2251 = vmatprep.mubr.f32.mxu0 0.0
    %v2252 = vand.u32 %v1728, 4294901760
    %2253 = vmatmul.mubr.f32.gmra.mrb[0].mxu0 %v2252
    %v2254 = vpop.f32.mrb[0].mxu0
    %v2255 = vadd.f32 %v2174, %v2254
    %v2256 = vpop.f32.mrb[0].mxu0
    %2257 = vdwg.mxu0
    %2260 = vrot.lane.b32.xlu0 %v2249, 96
    %v2261 = vpop.permute.xlu0 %2260
    %2262 = vrot.lane.b32.xlu0 %v2255, 96
    %v2263 = vpop.permute.xlu0 %2262
    %vm2266 = vcmask 1048320
    %2267 = vst.msk [vmem:[#allocation5] sm:$0xff] %vm2266, %v2261
    %2268 = vst.msk [vmem:[#allocation5 + $0x8] sm:$0xff] %vm2266, %v2263
    // Predicated region
    $region14: #{tpu_custom_call.1} parent=1 // pred_check
      _
    $region15: #{tpu_custom_call.1} parent=1 // pred_check_branch
      %2270 = sbr.rel (0) target = $region17
    $region16: #{tpu_custom_call.1} parent=1 // pred_region
      %s2272 = ssub.s32 256, 256
      %2273 = vsyncadd [#allocation4], %s2272
      %s2274 = sshll.u32 [#allocation5], 4
      %s2275 = int_to_ptr.vmem [resolvable:$true] %s2274
      %2280 = dma.vmem_to_hbm [thread:$0]  %s2275, 256, %s2, [#allocation4], 128, 128, 8
    $region17: #{tpu_custom_call.1} parent=1 // pred_fallthru
      _
    // Predicated region
    $region18: #{tpu_custom_call.1} parent=1 // pred_check
      _
    $region19: #{tpu_custom_call.1} parent=1 // pred_check_branch
      %2282 = sbr.rel (0) target = $region21
    $region20: #{tpu_custom_call.1} parent=1 // pred_region
      %2283 = dma.done [#allocation4], 256
    $region21: #{tpu_custom_call.1} parent=1 // pred_fallthru
      _
    %2284 = vsyncpa [#allocation3], 1
    %2285 = vsyncpa [#allocation4], 1

// kernel: tpu_custom_call.1
$region0: #{tpu_custom_call.1}
  #allocation0 [shape = 'u32[]', space=smem, size = 0x4, offset = 0x4, fixed_abs, tag = 'smem constant byte address 0x4 - core index']
  #allocation1 [shape = 'u32[144,128]{1,0:T(1,128)}', space=vmem, size = 0x12000, scoped, tag = 'internal scratch']
  %s0 = inlined_call_operand.vmem [shape: s32[16,4], index: 0, kind: input, shape index: {}]
  %s1 = inlined_call_operand.hbm [shape: f32[4,32,32], index: 1, kind: input, shape index: {}]
  %s2 = inlined_call_operand.hbm [shape: f32[16,128], index: 2, kind: output, shape index: {}]
  %s3 = sld [smem:[#allocation0]]
  $region22: #{tpu_custom_call.1} parent=0
    _
  %s5 = ssub.s32 1, %s3
  %s6 = scalar_select 0, %s5, %s3
  $region1: #{tpu_custom_call.1} parent=0
    #allocation2 [shape = 'u8[65536]{0}', space=vmem, size = 0x10000, scoped, tag = 'input window, operand 1, single buffered']
    #allocation3 [shape = 's32[1]{0}', space=sflag, size = 0x4, scoped, tag = 'scoped memory for tpu_custom_call.1']
    #allocation4 [shape = 's32[1]{0}', space=sflag, size = 0x4, scoped, tag = 'scoped memory for tpu_custom_call.1']
    #allocation5 [shape = 'u8[8192]{0}', space=vmem, size = 0x2000, scoped, tag = 'output window, operand 0, single buffered']
    %7 = vsyncpa [#allocation3], 0
    %8 = vsyncpa [#allocation4], 0
    // Predicated region
    $region2: #{tpu_custom_call.1} parent=1 // pred_check
      _
    $region3: #{tpu_custom_call.1} parent=1 // pred_check_branch
      %10 = sbr.rel (0) target = $region5
    $region4: #{tpu_custom_call.1} parent=1 // pred_region
      _
    $region5: #{tpu_custom_call.1} parent=1 // pred_fallthru
      _
    // Predicated region
    $region6: #{tpu_custom_call.1} parent=1 // pred_check
      _
    $region7: #{tpu_custom_call.1} parent=1 // pred_check_branch
      %12 = sbr.rel (0) target = $region9
    $region8: #{tpu_custom_call.1} parent=1 // pred_region
      %s14 = ssub.s32 2048, 2048
      %15 = vsyncadd [#allocation3], %s14
      %s16 = sshll.u32 [#allocation2], 4
      %s17 = int_to_ptr.vmem [resolvable:$true] %s16
      %22 = dma.hbm_to_vmem [thread:$0]  %s1, 2048, %s17, [#allocation3], 128, 128, 8
    $region9: #{tpu_custom_call.1} parent=1 // pred_fallthru
      _
    // Predicated region
    $region10: #{tpu_custom_call.1} parent=1 // pred_check
      _
    $region11: #{tpu_custom_call.1} parent=1 // pred_check_branch
      %24 = sbr.rel (0) target = $region13
    $region12: #{tpu_custom_call.1} parent=1 // pred_region
      %25 = dma.done [#allocation3], 2048
    $region13: #{tpu_custom_call.1} parent=1 // pred_fallthru
      _
    %v26 = vld [vmem:[%s0] sm:$0xff]
    %v27 = vld [vmem:[%s0 + $0x8] sm:$0xff]
    %v28 = vlaneseq
    %v29 = vand.u32 %v28, 127
    %30 = vset.pattern.permute.xlu0 0
    %31 = vperm.xlu0 %30, %v26
    %v32 = vpop.permute.xlu0 %31
    %33 = vset.pattern.permute.xlu0 0
    %34 = vperm.xlu0 %33, %v27
    %v35 = vpop.permute.xlu0 %34
    %vm36 = vcmp.eq.s32.totalorder %v32, %v29
    %vm37 = vcmp.eq.s32.totalorder %v35, %v29
    %v38 = vsel %vm36, 1, 0
    %v39 = vsel %vm37, 1, 0
    %v40 = vcvt.s32.f32 %v38
    %v41 = vcvt.s32.f32 %v39
    %v42 = vld [vmem:[#allocation2] sm:$0xff]
    %v43 = vld [vmem:[#allocation2 + $0x8] sm:$0xff]
    %v44 = vld [vmem:[#allocation2 + $0x10] sm:$0xff]
    %v45 = vld [vmem:[#allocation2 + $0x18] sm:$0xff]
    %vm46 = vcmask 261120
    %v48 = vsel %vm46, %v40, 0
    %v51 = vsel %vm46, %v41, 0
    %53 = vmatprep.subr.mxu0 0.0
    %54 = vmatpush1.msra.mxu0 %v42
    %55 = vmatprep.subr.mxu0 0.0
    %56 = vmatpush1.msra.mxu0 %v43
    %57 = vmatprep.subr.mxu0 0.0
    %58 = vmatpush1.msra.mxu0 %v44
    %59 = vmatprep.subr.mxu0 0.0
    %60 = vmatpush1.msra.mxu0 %v45
    %61 = vmatprep.subr.mxu0 0.0
    %62 = vmatpush1.msra.mxu0 0.0
    %63 = vmatprep.subr.mxu0 0.0
    %64 = vmatpush1.msra.mxu0 0.0
    %65 = vmatprep.subr.mxu0 0.0
    %66 = vmatpush1.msra.mxu0 0.0
    %67 = vmatprep.subr.mxu0 0.0
    %68 = vmatpush1.msra.mxu0 0.0
    %69 = vmatprep.subr.mxu0 0.0
    %70 = vmatpush1.msra.mxu0 0.0
    %71 = vmatprep.subr.mxu0 0.0
    %72 = vmatpush1.msra.mxu0 0.0
    %73 = vmatprep.subr.mxu0 0.0
    %74 = vmatpush1.msra.mxu0 0.0
    %75 = vmatprep.subr.mxu0 0.0
    %76 = vmatpush1.msra.mxu0 0.0
    %77 = vmatprep.subr.mxu0 0.0
    %78 = vmatpush1.msra.mxu0 0.0
    %79 = vmatprep.subr.mxu0 0.0
    %80 = vmatpush1.msra.mxu0 0.0
    %81 = vmatprep.subr.mxu0 0.0
    %82 = vmatpush1.msra.mxu0 0.0
    %83 = vmatprep.subr.mxu0 0.0
    %84 = vmatpush1.msra.mxu0 0.0
    %85 = vmatprep.subr.mxu0 0.0
    %86 = vmatpush1.msra.mxu0 0.0
    %87 = vmatprep.subr.mxu0 0.0
    %88 = vmatpush1.msra.mxu0 0.0
    %89 = vmatprep.subr.mxu0 0.0
    %90 = vmatpush1.msra.mxu0 0.0
    %91 = vmatprep.subr.mxu0 0.0
    %92 = vmatpush1.msra.mxu0 0.0
    %93 = vmatprep.subr.mxu0 0.0
    %94 = vmatpush1.msra.mxu0 0.0
    %95 = vmatprep.subr.mxu0 0.0
    %96 = vmatpush1.msra.mxu0 0.0
    %97 = vmatprep.subr.mxu0 0.0
    %98 = vmatpush1.msra.mxu0 0.0
    %99 = vmatprep.subr.mxu0 0.0
    %100 = vmatpush1.msra.mxu0 0.0
    %101 = vmatprep.subr.mxu0 0.0
    %102 = vmatpush1.msra.mxu0 0.0
    %103 = vmatprep.subr.mxu0 0.0
    %104 = vmatpush1.msra.mxu0 0.0
    %105 = vmatprep.subr.mxu0 0.0
    %106 = vmatpush1.msra.mxu0 0.0
    %107 = vmatprep.subr.mxu0 0.0
    %108 = vmatpush1.msra.mxu0 0.0
    %109 = vmatprep.subr.mxu0 0.0
    %110 = vmatpush1.msra.mxu0 0.0
    %111 = vmatprep.subr.mxu0 0.0
    %112 = vmatpush1.msra.mxu0 0.0
    %113 = vmatprep.subr.mxu0 0.0
    %114 = vmatpush1.msra.mxu0 0.0
    %115 = vmatprep.subr.mxu0 0.0
    %116 = vmatpush1.msra.mxu0 0.0
    %117 = vmatprep.mubr.f32.mxu0 0.0
    %118 = vmatmul.mubr.f32.gmra.mrb[0].mxu0 %v48
    %v119 = vpop.f32.mrb[0].mxu0
    %v120 = vadd.f32 0.0, %v119
    %v121 = vpop.f32.mrb[0].mxu0
    %122 = vmatprep.mubr.f32.mxu0 0.0
    %123 = vmatmul.mubr.f32.gmra.mrb[0].mxu0 %v51
    %v124 = vpop.f32.mrb[0].mxu0
    %v125 = vadd.f32 0.0, %v124
    %v126 = vpop.f32.mrb[0].mxu0
    %127 = vdwg.mxu0
    %128 = vst.msk [vmem:[#allocation5] sm:$0xff] %vm46, %v120
    %129 = vst.msk [vmem:[#allocation5 + $0x8] sm:$0xff] %vm46, %v125
    %130 = vset.pattern.permute.xlu0 1
    %131 = vperm.xlu0 %130, %v26
    %v132 = vpop.permute.xlu0 %131
    %133 = vset.pattern.permute.xlu0 1
    %134 = vperm.xlu0 %133, %v27
    %v135 = vpop.permute.xlu0 %134
    %vm136 = vcmp.eq.s32.totalorder %v132, %v29
    %vm137 = vcmp.eq.s32.totalorder %v135, %v29
    %v138 = vsel %vm136, 1, 0
    %v139 = vsel %vm137, 1, 0
    %v140 = vcvt.s32.f32 %v138
    %v141 = vcvt.s32.f32 %v139
    %s142 = scalar_lea.vmem [#allocation2], 32
    %v143 = vld [vmem:[%s142] sm:$0xff]
    %v144 = vld [vmem:[%s142 + $0x8] sm:$0xff]
    %v145 = vld [vmem:[%s142 + $0x10] sm:$0xff]
    %v146 = vld [vmem:[%s142 + $0x18] sm:$0xff]
    %v148 = vsel %vm46, %v140, 0
    %v151 = vsel %vm46, %v141, 0
    %153 = vmatprep.subr.mxu0 0.0
    %154 = vmatpush1.msra.mxu0 %v143
    %155 = vmatprep.subr.mxu0 0.0
    %156 = vmatpush1.msra.mxu0 %v144
    %157 = vmatprep.subr.mxu0 0.0
    %158 = vmatpush1.msra.mxu0 %v145
    %159 = vmatprep.subr.mxu0 0.0
    %160 = vmatpush1.msra.mxu0 %v146
    %161 = vmatprep.subr.mxu0 0.0
    %162 = vmatpush1.msra.mxu0 0.0
    %163 = vmatprep.subr.mxu0 0.0
    %164 = vmatpush1.msra.mxu0 0.0
    %165 = vmatprep.subr.mxu0 0.0
    %166 = vmatpush1.msra.mxu0 0.0
    %167 = vmatprep.subr.mxu0 0.0
    %168 = vmatpush1.msra.mxu0 0.0
    %169 = vmatprep.subr.mxu0 0.0
    %170 = vmatpush1.msra.mxu0 0.0
    %171 = vmatprep.subr.mxu0 0.0
    %172 = vmatpush1.msra.mxu0 0.0
    %173 = vmatprep.subr.mxu0 0.0
    %174 = vmatpush1.msra.mxu0 0.0
    %175 = vmatprep.subr.mxu0 0.0
    %176 = vmatpush1.msra.mxu0 0.0
    %177 = vmatprep.subr.mxu0 0.0
    %178 = vmatpush1.msra.mxu0 0.0
    %179 = vmatprep.subr.mxu0 0.0
    %180 = vmatpush1.msra.mxu0 0.0
    %181 = vmatprep.subr.mxu0 0.0
    %182 = vmatpush1.msra.mxu0 0.0
    %183 = vmatprep.subr.mxu0 0.0
    %184 = vmatpush1.msra.mxu0 0.0
    %185 = vmatprep.subr.mxu0 0.0
    %186 = vmatpush1.msra.mxu0 0.0
    %187 = vmatprep.subr.mxu0 0.0
    %188 = vmatpush1.msra.mxu0 0.0
    %189 = vmatprep.subr.mxu0 0.0
    %190 = vmatpush1.msra.mxu0 0.0
    %191 = vmatprep.subr.mxu0 0.0
    %192 = vmatpush1.msra.mxu0 0.0
    %193 = vmatprep.subr.mxu0 0.0
    %194 = vmatpush1.msra.mxu0 0.0
    %195 = vmatprep.subr.mxu0 0.0
    %196 = vmatpush1.msra.mxu0 0.0
    %197 = vmatprep.subr.mxu0 0.0
    %198 = vmatpush1.msra.mxu0 0.0
    %199 = vmatprep.subr.mxu0 0.0
    %200 = vmatpush1.msra.mxu0 0.0
    %201 = vmatprep.subr.mxu0 0.0
    %202 = vmatpush1.msra.mxu0 0.0
    %203 = vmatprep.subr.mxu0 0.0
    %204 = vmatpush1.msra.mxu0 0.0
    %205 = vmatprep.subr.mxu0 0.0
    %206 = vmatpush1.msra.mxu0 0.0
    %207 = vmatprep.subr.mxu0 0.0
    %208 = vmatpush1.msra.mxu0 0.0
    %209 = vmatprep.subr.mxu0 0.0
    %210 = vmatpush1.msra.mxu0 0.0
    %211 = vmatprep.subr.mxu0 0.0
    %212 = vmatpush1.msra.mxu0 0.0
    %213 = vmatprep.subr.mxu0 0.0
    %214 = vmatpush1.msra.mxu0 0.0
    %215 = vmatprep.subr.mxu0 0.0
    %216 = vmatpush1.msra.mxu0 0.0
    %217 = vmatprep.mubr.f32.mxu0 0.0
    %218 = vmatmul.mubr.f32.gmra.mrb[0].mxu0 %v148
    %v219 = vpop.f32.mrb[0].mxu0
    %v220 = vadd.f32 0.0, %v219
    %v221 = vpop.f32.mrb[0].mxu0
    %222 = vmatprep.mubr.f32.mxu0 0.0
    %223 = vmatmul.mubr.f32.gmra.mrb[0].mxu0 %v151
    %v224 = vpop.f32.mrb[0].mxu0
    %v225 = vadd.f32 0.0, %v224
    %v226 = vpop.f32.mrb[0].mxu0
    %227 = vdwg.mxu0
    %230 = vrot.lane.b32.xlu0 %v220, 32
    %v231 = vpop.permute.xlu0 %230
    %232 = vrot.lane.b32.xlu0 %v225, 32
    %v233 = vpop.permute.xlu0 %232
    %vm236 = vcmask 523520
    %237 = vst.msk [vmem:[#allocation5] sm:$0xff] %vm236, %v231
    %238 = vst.msk [vmem:[#allocation5 + $0x8] sm:$0xff] %vm236, %v233
    %239 = vset.pattern.permute.xlu0 2
    %240 = vperm.xlu0 %239, %v26
    %v241 = vpop.permute.xlu0 %240
    %242 = vset.pattern.permute.xlu0 2
    %243 = vperm.xlu0 %242, %v27
    %v244 = vpop.permute.xlu0 %243
    %vm245 = vcmp.eq.s32.totalorder %v241, %v29
    %vm246 = vcmp.eq.s32.totalorder %v244, %v29
    %v247 = vsel %vm245, 1, 0
    %v248 = vsel %vm246, 1, 0
    %v249 = vcvt.s32.f32 %v247
    %v250 = vcvt.s32.f32 %v248
    %s251 = scalar_lea.vmem [#allocation2], 64
    %v252 = vld [vmem:[%s251] sm:$0xff]
    %v253 = vld [vmem:[%s251 + $0x8] sm:$0xff]
    %v254 = vld [vmem:[%s251 + $0x10] sm:$0xff]
    %v255 = vld [vmem:[%s251 + $0x18] sm:$0xff]
    %v257 = vsel %vm46, %v249, 0
    %v260 = vsel %vm46, %v250, 0
    %262 = vmatprep.subr.mxu0 0.0
    %263 = vmatpush1.msra.mxu0 %v252
    %264 = vmatprep.subr.mxu0 0.0
    %265 = vmatpush1.msra.mxu0 %v253
    %266 = vmatprep.subr.mxu0 0.0
    %267 = vmatpush1.msra.mxu0 %v254
    %268 = vmatprep.subr.mxu0 0.0
    %269 = vmatpush1.msra.mxu0 %v255
    %270 = vmatprep.subr.mxu0 0.0
    %271 = vmatpush1.msra.mxu0 0.0
    %272 = vmatprep.subr.mxu0 0.0
    %273 = vmatpush1.msra.mxu0 0.0
    %274 = vmatprep.subr.mxu0 0.0
    %275 = vmatpush1.msra.mxu0 0.0
    %276 = vmatprep.subr.mxu0 0.0
    %277 = vmatpush1.msra.mxu0 0.0
    %278 = vmatprep.subr.mxu0 0.0
    %279 = vmatpush1.msra.mxu0 0.0
    %280 = vmatprep.subr.mxu0 0.0
    %281 = vmatpush1.msra.mxu0 0.0
    %282 = vmatprep.subr.mxu0 0.0
    %283 = vmatpush1.msra.mxu0 0.0
    %284 = vmatprep.subr.mxu0 0.0
    %285 = vmatpush1.msra.mxu0 0.0
    %286 = vmatprep.subr.mxu0 0.0
    %287 = vmatpush1.msra.mxu0 0.0
    %288 = vmatprep.subr.mxu0 0.0
    %289 = vmatpush1.msra.mxu0 0.0
    %290 = vmatprep.subr.mxu0 0.0
    %291 = vmatpush1.msra.mxu0 0.0
    %292 = vmatprep.subr.mxu0 0.0
    %293 = vmatpush1.msra.mxu0 0.0
    %294 = vmatprep.subr.mxu0 0.0
    %295 = vmatpush1.msra.mxu0 0.0
    %296 = vmatprep.subr.mxu0 0.0
    %297 = vmatpush1.msra.mxu0 0.0
    %298 = vmatprep.subr.mxu0 0.0
    %299 = vmatpush1.msra.mxu0 0.0
    %300 = vmatprep.subr.mxu0 0.0
    %301 = vmatpush1.msra.mxu0 0.0
    %302 = vmatprep.subr.mxu0 0.0
    %303 = vmatpush1.msra.mxu0 0.0
    %304 = vmatprep.subr.mxu0 0.0
    %305 = vmatpush1.msra.mxu0 0.0
    %306 = vmatprep.subr.mxu0 0.0
    %307 = vmatpush1.msra.mxu0 0.0
    %308 = vmatprep.subr.mxu0 0.0
    %309 = vmatpush1.msra.mxu0 0.0
    %310 = vmatprep.subr.mxu0 0.0
    %311 = vmatpush1.msra.mxu0 0.0
    %312 = vmatprep.subr.mxu0 0.0
    %313 = vmatpush1.msra.mxu0 0.0
    %314 = vmatprep.subr.mxu0 0.0
    %315 = vmatpush1.msra.mxu0 0.0
    %316 = vmatprep.subr.mxu0 0.0
    %317 = vmatpush1.msra.mxu0 0.0
    %318 = vmatprep.subr.mxu0 0.0
    %319 = vmatpush1.msra.mxu0 0.0
    %320 = vmatprep.subr.mxu0 0.0
    %321 = vmatpush1.msra.mxu0 0.0
    %322 = vmatprep.subr.mxu0 0.0
    %323 = vmatpush1.msra.mxu0 0.0
    %324 = vmatprep.subr.mxu0 0.0
    %325 = vmatpush1.msra.mxu0 0.0
    %326 = vmatprep.mubr.f32.mxu0 0.0
    %327 = vmatmul.mubr.f32.gmra.mrb[0].mxu0 %v257
    %v328 = vpop.f32.mrb[0].mxu0
    %v329 = vadd.f32 0.0, %v328
    %v330 = vpop.f32.mrb[0].mxu0
    %331 = vmatprep.mubr.f32.mxu0 0.0
    %332 = vmatmul.mubr.f32.gmra.mrb[0].mxu0 %v260
    %v333 = vpop.f32.mrb[0].mxu0
    %v334 = vadd.f32 0.0, %v333
    %v335 = vpop.f32.mrb[0].mxu0
    %336 = vdwg.mxu0
    %339 = vrot.lane.b32.xlu0 %v329, 64
    %v340 = vpop.permute.xlu0 %339
    %341 = vrot.lane.b32.xlu0 %v334, 64
    %v342 = vpop.permute.xlu0 %341
    %vm345 = vcmask 785920
    %346 = vst.msk [vmem:[#allocation5] sm:$0xff] %vm345, %v340
    %347 = vst.msk [vmem:[#allocation5 + $0x8] sm:$0xff] %vm345, %v342
    %348 = vset.pattern.permute.xlu0 3
    %349 = vperm.xlu0 %348, %v26
    %v350 = vpop.permute.xlu0 %349
    %351 = vset.pattern.permute.xlu0 3
    %352 = vperm.xlu0 %351, %v27
    %v353 = vpop.permute.xlu0 %352
    %vm354 = vcmp.eq.s32.totalorder %v350, %v29
    %vm355 = vcmp.eq.s32.totalorder %v353, %v29
    %v356 = vsel %vm354, 1, 0
    %v357 = vsel %vm355, 1, 0
    %v358 = vcvt.s32.f32 %v356
    %v359 = vcvt.s32.f32 %v357
    %s360 = scalar_lea.vmem [#allocation2], 96
    %v361 = vld [vmem:[%s360] sm:$0xff]
    %v362 = vld [vmem:[%s360 + $0x8] sm:$0xff]
    %v363 = vld [vmem:[%s360 + $0x10] sm:$0xff]
    %v364 = vld [vmem:[%s360 + $0x18] sm:$0xff]
    %v366 = vsel %vm46, %v358, 0
    %v369 = vsel %vm46, %v359, 0
    %371 = vmatprep.subr.mxu0 0.0
    %372 = vmatpush1.msra.mxu0 %v361
    %373 = vmatprep.subr.mxu0 0.0
    %374 = vmatpush1.msra.mxu0 %v362
    %375 = vmatprep.subr.mxu0 0.0
    %376 = vmatpush1.msra.mxu0 %v363
    %377 = vmatprep.subr.mxu0 0.0
    %378 = vmatpush1.msra.mxu0 %v364
    %379 = vmatprep.subr.mxu0 0.0
    %380 = vmatpush1.msra.mxu0 0.0
    %381 = vmatprep.subr.mxu0 0.0
    %382 = vmatpush1.msra.mxu0 0.0
    %383 = vmatprep.subr.mxu0 0.0
    %384 = vmatpush1.msra.mxu0 0.0
    %385 = vmatprep.subr.mxu0 0.0
    %386 = vmatpush1.msra.mxu0 0.0
    %387 = vmatprep.subr.mxu0 0.0
    %388 = vmatpush1.msra.mxu0 0.0
    %389 = vmatprep.subr.mxu0 0.0
    %390 = vmatpush1.msra.mxu0 0.0
    %391 = vmatprep.subr.mxu0 0.0
    %392 = vmatpush1.msra.mxu0 0.0
    %393 = vmatprep.subr.mxu0 0.0
    %394 = vmatpush1.msra.mxu0 0.0
    %395 = vmatprep.subr.mxu0 0.0
    %396 = vmatpush1.msra.mxu0 0.0
    %397 = vmatprep.subr.mxu0 0.0
    %398 = vmatpush1.msra.mxu0 0.0
    %399 = vmatprep.subr.mxu0 0.0
    %400 = vmatpush1.msra.mxu0 0.0
    %401 = vmatprep.subr.mxu0 0.0
    %402 = vmatpush1.msra.mxu0 0.0
    %403 = vmatprep.subr.mxu0 0.0
    %404 = vmatpush1.msra.mxu0 0.0
    %405 = vmatprep.subr.mxu0 0.0
    %406 = vmatpush1.msra.mxu0 0.0
    %407 = vmatprep.subr.mxu0 0.0
    %408 = vmatpush1.msra.mxu0 0.0
    %409 = vmatprep.subr.mxu0 0.0
    %410 = vmatpush1.msra.mxu0 0.0
    %411 = vmatprep.subr.mxu0 0.0
    %412 = vmatpush1.msra.mxu0 0.0
    %413 = vmatprep.subr.mxu0 0.0
    %414 = vmatpush1.msra.mxu0 0.0
    %415 = vmatprep.subr.mxu0 0.0
    %416 = vmatpush1.msra.mxu0 0.0
    %417 = vmatprep.subr.mxu0 0.0
    %418 = vmatpush1.msra.mxu0 0.0
    %419 = vmatprep.subr.mxu0 0.0
    %420 = vmatpush1.msra.mxu0 0.0
    %421 = vmatprep.subr.mxu0 0.0
    %422 = vmatpush1.msra.mxu0 0.0
    %423 = vmatprep.subr.mxu0 0.0
    %424 = vmatpush1.msra.mxu0 0.0
    %425 = vmatprep.subr.mxu0 0.0
    %426 = vmatpush1.msra.mxu0 0.0
    %427 = vmatprep.subr.mxu0 0.0
    %428 = vmatpush1.msra.mxu0 0.0
    %429 = vmatprep.subr.mxu0 0.0
    %430 = vmatpush1.msra.mxu0 0.0
    %431 = vmatprep.subr.mxu0 0.0
    %432 = vmatpush1.msra.mxu0 0.0
    %433 = vmatprep.subr.mxu0 0.0
    %434 = vmatpush1.msra.mxu0 0.0
    %435 = vmatprep.mubr.f32.mxu0 0.0
    %436 = vmatmul.mubr.f32.gmra.mrb[0].mxu0 %v366
    %v437 = vpop.f32.mrb[0].mxu0
    %v438 = vadd.f32 0.0, %v437
    %v439 = vpop.f32.mrb[0].mxu0
    %440 = vmatprep.mubr.f32.mxu0 0.0
    %441 = vmatmul.mubr.f32.gmra.mrb[0].mxu0 %v369
    %v442 = vpop.f32.mrb[0].mxu0
    %v443 = vadd.f32 0.0, %v442
    %v444 = vpop.f32.mrb[0].mxu0
    %445 = vdwg.mxu0
    %448 = vrot.lane.b32.xlu0 %v438, 96
    %v449 = vpop.permute.xlu0 %448
    %450 = vrot.lane.b32.xlu0 %v443, 96
    %v451 = vpop.permute.xlu0 %450
    %vm454 = vcmask 1048320
    %455 = vst.msk [vmem:[#allocation5] sm:$0xff] %vm454, %v449
    %456 = vst.msk [vmem:[#allocation5 + $0x8] sm:$0xff] %vm454, %v451
    // Predicated region
    $region14: #{tpu_custom_call.1} parent=1 // pred_check
      _
    $region15: #{tpu_custom_call.1} parent=1 // pred_check_branch
      %458 = sbr.rel (0) target = $region17
    $region16: #{tpu_custom_call.1} parent=1 // pred_region
      %s460 = ssub.s32 256, 256
      %461 = vsyncadd [#allocation4], %s460
      %s462 = sshll.u32 [#allocation5], 4
      %s463 = int_to_ptr.vmem [resolvable:$true] %s462
      %468 = dma.vmem_to_hbm [thread:$0]  %s463, 256, %s2, [#allocation4], 128, 128, 8
    $region17: #{tpu_custom_call.1} parent=1 // pred_fallthru
      _
    // Predicated region
    $region18: #{tpu_custom_call.1} parent=1 // pred_check
      _
    $region19: #{tpu_custom_call.1} parent=1 // pred_check_branch
      %470 = sbr.rel (0) target = $region21
    $region20: #{tpu_custom_call.1} parent=1 // pred_region
      %471 = dma.done [#allocation4], 256
    $region21: #{tpu_custom_call.1} parent=1 // pred_fallthru
      _
    %472 = vsyncpa [#allocation3], 1
    %473 = vsyncpa [#allocation4], 1

// kernel: tpu_custom_call.1
$region0: #{tpu_custom_call.1}
  #allocation0 [shape = 'u32[]', space=smem, size = 0x4, offset = 0x4, fixed_abs, tag = 'smem constant byte address 0x4 - core index']
  #allocation1 [shape = 'u32[144,128]{1,0:T(1,128)}', space=vmem, size = 0x12000, scoped, tag = 'internal scratch']
  %s0 = inlined_call_operand.vmem [shape: s32[16,4], index: 0, kind: input, shape index: {}]
  %s1 = inlined_call_operand.hbm [shape: f32[4,32,32], index: 1, kind: input, shape index: {}]
  %s2 = inlined_call_operand.hbm [shape: f32[16,128], index: 2, kind: output, shape index: {}]
  %s3 = sld [smem:[#allocation0]]
  $region22: #{tpu_custom_call.1} parent=0
    _
  %s5 = ssub.s32 1, %s3
  %s6 = scalar_select 0, %s5, %s3
  $region1: #{tpu_custom_call.1} parent=0
    #allocation2 [shape = 'u8[65536]{0}', space=vmem, size = 0x10000, scoped, tag = 'input window, operand 1, single buffered']
    #allocation3 [shape = 's32[1]{0}', space=sflag, size = 0x4, scoped, tag = 'scoped memory for tpu_custom_call.1']
    #allocation4 [shape = 's32[1]{0}', space=sflag, size = 0x4, scoped, tag = 'scoped memory for tpu_custom_call.1']
    #allocation5 [shape = 'u8[8192]{0}', space=vmem, size = 0x2000, scoped, tag = 'output window, operand 0, single buffered']
    %7 = vsyncpa [#allocation3], 0
    %8 = vsyncpa [#allocation4], 0
    // Predicated region
    $region2: #{tpu_custom_call.1} parent=1 // pred_check
      _
    $region3: #{tpu_custom_call.1} parent=1 // pred_check_branch
      %10 = sbr.rel (0) target = $region5
    $region4: #{tpu_custom_call.1} parent=1 // pred_region
      _
    $region5: #{tpu_custom_call.1} parent=1 // pred_fallthru
      _
    // Predicated region
    $region6: #{tpu_custom_call.1} parent=1 // pred_check
      _
    $region7: #{tpu_custom_call.1} parent=1 // pred_check_branch
      %12 = sbr.rel (0) target = $region9
    $region8: #{tpu_custom_call.1} parent=1 // pred_region
      %s14 = ssub.s32 2048, 2048
      %15 = vsyncadd [#allocation3], %s14
      %s16 = sshll.u32 [#allocation2], 4
      %s17 = int_to_ptr.vmem [resolvable:$true] %s16
      %22 = dma.hbm_to_vmem [thread:$0]  %s1, 2048, %s17, [#allocation3], 128, 128, 8
    $region9: #{tpu_custom_call.1} parent=1 // pred_fallthru
      _
    // Predicated region
    $region10: #{tpu_custom_call.1} parent=1 // pred_check
      _
    $region11: #{tpu_custom_call.1} parent=1 // pred_check_branch
      %24 = sbr.rel (0) target = $region13
    $region12: #{tpu_custom_call.1} parent=1 // pred_region
      %25 = dma.done [#allocation3], 2048
    $region13: #{tpu_custom_call.1} parent=1 // pred_fallthru
      _
    %v26 = vld [vmem:[%s0] sm:$0xff]
    %v27 = vld [vmem:[%s0 + $0x8] sm:$0xff]
    %v28 = vlaneseq
    %v29 = vand.u32 %v28, 127
    %30 = vset.pattern.permute.xlu0 0
    %31 = vperm.xlu0 %30, %v26
    %v32 = vpop.permute.xlu0 %31
    %33 = vset.pattern.permute.xlu0 0
    %34 = vperm.xlu0 %33, %v27
    %v35 = vpop.permute.xlu0 %34
    %vm36 = vcmp.eq.s32.totalorder %v32, %v29
    %vm37 = vcmp.eq.s32.totalorder %v35, %v29
    %v38 = vsel %vm36, 1, 0
    %v39 = vsel %vm37, 1, 0
    %v40 = vcvt.s32.f32 %v38
    %v41 = vcvt.s32.f32 %v39
    %v42 = vld [vmem:[#allocation2] sm:$0xff]
    %v43 = vld [vmem:[#allocation2 + $0x8] sm:$0xff]
    %v44 = vld [vmem:[#allocation2 + $0x10] sm:$0xff]
    %v45 = vld [vmem:[#allocation2 + $0x18] sm:$0xff]
    %vm46 = vcmask 261120
    %v48 = vsel %vm46, %v40, 0
    %v51 = vsel %vm46, %v41, 0
    %53 = vmatprep.subr.mxu0 0.0
    %54 = vmatpush1.msra.mxu0 %v42
    %55 = vmatprep.subr.mxu0 0.0
    %56 = vmatpush1.msra.mxu0 %v43
    %57 = vmatprep.subr.mxu0 0.0
    %58 = vmatpush1.msra.mxu0 %v44
    %59 = vmatprep.subr.mxu0 0.0
    %60 = vmatpush1.msra.mxu0 %v45
    %61 = vmatprep.subr.mxu0 0.0
    %62 = vmatpush1.msra.mxu0 0.0
    %63 = vmatprep.subr.mxu0 0.0
    %64 = vmatpush1.msra.mxu0 0.0
    %65 = vmatprep.subr.mxu0 0.0
    %66 = vmatpush1.msra.mxu0 0.0
    %67 = vmatprep.subr.mxu0 0.0
    %68 = vmatpush1.msra.mxu0 0.0
    %69 = vmatprep.subr.mxu0 0.0
    %70 = vmatpush1.msra.mxu0 0.0
    %71 = vmatprep.subr.mxu0 0.0
    %72 = vmatpush1.msra.mxu0 0.0
    %73 = vmatprep.subr.mxu0 0.0
    %74 = vmatpush1.msra.mxu0 0.0
    %75 = vmatprep.subr.mxu0 0.0
    %76 = vmatpush1.msra.mxu0 0.0
    %77 = vmatprep.subr.mxu0 0.0
    %78 = vmatpush1.msra.mxu0 0.0
    %79 = vmatprep.subr.mxu0 0.0
    %80 = vmatpush1.msra.mxu0 0.0
    %81 = vmatprep.subr.mxu0 0.0
    %82 = vmatpush1.msra.mxu0 0.0
    %83 = vmatprep.subr.mxu0 0.0
    %84 = vmatpush1.msra.mxu0 0.0
    %85 = vmatprep.subr.mxu0 0.0
    %86 = vmatpush1.msra.mxu0 0.0
    %87 = vmatprep.subr.mxu0 0.0
    %88 = vmatpush1.msra.mxu0 0.0
    %89 = vmatprep.subr.mxu0 0.0
    %90 = vmatpush1.msra.mxu0 0.0
    %91 = vmatprep.subr.mxu0 0.0
    %92 = vmatpush1.msra.mxu0 0.0
    %93 = vmatprep.subr.mxu0 0.0
    %94 = vmatpush1.msra.mxu0 0.0
    %95 = vmatprep.subr.mxu0 0.0
    %96 = vmatpush1.msra.mxu0 0.0
    %97 = vmatprep.subr.mxu0 0.0
    %98 = vmatpush1.msra.mxu0 0.0
    %99 = vmatprep.subr.mxu0 0.0
    %100 = vmatpush1.msra.mxu0 0.0
    %101 = vmatprep.subr.mxu0 0.0
    %102 = vmatpush1.msra.mxu0 0.0
    %103 = vmatprep.subr.mxu0 0.0
    %104 = vmatpush1.msra.mxu0 0.0
    %105 = vmatprep.subr.mxu0 0.0
    %106 = vmatpush1.msra.mxu0 0.0
    %107 = vmatprep.subr.mxu0 0.0
    %108 = vmatpush1.msra.mxu0 0.0
    %109 = vmatprep.subr.mxu0 0.0
    %110 = vmatpush1.msra.mxu0 0.0
    %111 = vmatprep.subr.mxu0 0.0
    %112 = vmatpush1.msra.mxu0 0.0
    %113 = vmatprep.subr.mxu0 0.0
    %114 = vmatpush1.msra.mxu0 0.0
    %115 = vmatprep.subr.mxu0 0.0
    %116 = vmatpush1.msra.mxu0 0.0
    %117 = vmatprep.mubr.f32.mxu0 0.0
    %118 = vmatmul.mubr.f32.gmra.mrb[0].mxu0 %v48
    %v119 = vpop.f32.mrb[0].mxu0
    %v120 = vadd.f32 0.0, %v119
    %v121 = vpop.f32.mrb[0].mxu0
    %122 = vmatprep.mubr.f32.mxu0 0.0
    %123 = vmatmul.mubr.f32.gmra.mrb[0].mxu0 %v51
    %v124 = vpop.f32.mrb[0].mxu0
    %v125 = vadd.f32 0.0, %v124
    %v126 = vpop.f32.mrb[0].mxu0
    %127 = vdwg.mxu0
    %128 = vst.msk [vmem:[#allocation5] sm:$0xff] %vm46, %v120
    %129 = vst.msk [vmem:[#allocation5 + $0x8] sm:$0xff] %vm46, %v125
    %130 = vset.pattern.permute.xlu0 1
    %131 = vperm.xlu0 %130, %v26
    %v132 = vpop.permute.xlu0 %131
    %133 = vset.pattern.permute.xlu0 1
    %134 = vperm.xlu0 %133, %v27
    %v135 = vpop.permute.xlu0 %134
    %vm136 = vcmp.eq.s32.totalorder %v132, %v29
    %vm137 = vcmp.eq.s32.totalorder %v135, %v29
    %v138 = vsel %vm136, 1, 0
    %v139 = vsel %vm137, 1, 0
    %v140 = vcvt.s32.f32 %v138
    %v141 = vcvt.s32.f32 %v139
    %s142 = scalar_lea.vmem [#allocation2], 32
    %v143 = vld [vmem:[%s142] sm:$0xff]
    %v144 = vld [vmem:[%s142 + $0x8] sm:$0xff]
    %v145 = vld [vmem:[%s142 + $0x10] sm:$0xff]
    %v146 = vld [vmem:[%s142 + $0x18] sm:$0xff]
    %v148 = vsel %vm46, %v140, 0
    %v151 = vsel %vm46, %v141, 0
    %153 = vmatprep.subr.mxu0 0.0
    %154 = vmatpush1.msra.mxu0 %v143
    %155 = vmatprep.subr.mxu0 0.0
    %156 = vmatpush1.msra.mxu0 %v144
    %157 = vmatprep.subr.mxu0 0.0
    %158 = vmatpush1.msra.mxu0 %v145
    %159 = vmatprep.subr.mxu0 0.0
    %160 = vmatpush1.msra.mxu0 %v146
    %161 = vmatprep.subr.mxu0 0.0
    %162 = vmatpush1.msra.mxu0 0.0
    %163 = vmatprep.subr.mxu0 0.0
    %164 = vmatpush1.msra.mxu0 0.0
    %165 = vmatprep.subr.mxu0 0.0
    %166 = vmatpush1.msra.mxu0 0.0
    %167 = vmatprep.subr.mxu0 0.0
    %168 = vmatpush1.msra.mxu0 0.0
    %169 = vmatprep.subr.mxu0 0.0
    %170 = vmatpush1.msra.mxu0 0.0
    %171 = vmatprep.subr.mxu0 0.0
    %172 = vmatpush1.msra.mxu0 0.0
    %173 = vmatprep.subr.mxu0 0.0
    %174 = vmatpush1.msra.mxu0 0.0
    %175 = vmatprep.subr.mxu0 0.0
    %176 = vmatpush1.msra.mxu0 0.0
    %177 = vmatprep.subr.mxu0 0.0
    %178 = vmatpush1.msra.mxu0 0.0
    %179 = vmatprep.subr.mxu0 0.0
    %180 = vmatpush1.msra.mxu0 0.0
    %181 = vmatprep.subr.mxu0 0.0
    %182 = vmatpush1.msra.mxu0 0.0
    %183 = vmatprep.subr.mxu0 0.0
    %184 = vmatpush1.msra.mxu0 0.0
    %185 = vmatprep.subr.mxu0 0.0
    %186 = vmatpush1.msra.mxu0 0.0
    %187 = vmatprep.subr.mxu0 0.0
    %188 = vmatpush1.msra.mxu0 0.0
    %189 = vmatprep.subr.mxu0 0.0
    %190 = vmatpush1.msra.mxu0 0.0
    %191 = vmatprep.subr.mxu0 0.0
    %192 = vmatpush1.msra.mxu0 0.0
    %193 = vmatprep.subr.mxu0 0.0
    %194 = vmatpush1.msra.mxu0 0.0
    %195 = vmatprep.subr.mxu0 0.0
    %196 = vmatpush1.msra.mxu0 0.0
    %197 = vmatprep.subr.mxu0 0.0
    %198 = vmatpush1.msra.mxu0 0.0
    %199 = vmatprep.subr.mxu0 0.0
    %200 = vmatpush1.msra.mxu0 0.0
    %201 = vmatprep.subr.mxu0 0.0
    %202 = vmatpush1.msra.mxu0 0.0
    %203 = vmatprep.subr.mxu0 0.0
    %204 = vmatpush1.msra.mxu0 0.0
    %205 = vmatprep.subr.mxu0 0.0
    %206 = vmatpush1.msra.mxu0 0.0
    %207 = vmatprep.subr.mxu0 0.0
    %208 = vmatpush1.msra.mxu0 0.0
    %209 = vmatprep.subr.mxu0 0.0
    %210 = vmatpush1.msra.mxu0 0.0
    %211 = vmatprep.subr.mxu0 0.0
    %212 = vmatpush1.msra.mxu0 0.0
    %213 = vmatprep.subr.mxu0 0.0
    %214 = vmatpush1.msra.mxu0 0.0
    %215 = vmatprep.subr.mxu0 0.0
    %216 = vmatpush1.msra.mxu0 0.0
    %217 = vmatprep.mubr.f32.mxu0 0.0
    %218 = vmatmul.mubr.f32.gmra.mrb[0].mxu0 %v148
    %v219 = vpop.f32.mrb[0].mxu0
    %v220 = vadd.f32 0.0, %v219
    %v221 = vpop.f32.mrb[0].mxu0
    %222 = vmatprep.mubr.f32.mxu0 0.0
    %223 = vmatmul.mubr.f32.gmra.mrb[0].mxu0 %v151
    %v224 = vpop.f32.mrb[0].mxu0
    %v225 = vadd.f32 0.0, %v224
    %v226 = vpop.f32.mrb[0].mxu0
    %227 = vdwg.mxu0
    %230 = vrot.lane.b32.xlu0 %v220, 32
    %v231 = vpop.permute.xlu0 %230
    %232 = vrot.lane.b32.xlu0 %v225, 32
    %v233 = vpop.permute.xlu0 %232
    %vm236 = vcmask 523520
    %237 = vst.msk [vmem:[#allocation5] sm:$0xff] %vm236, %v231
    %238 = vst.msk [vmem:[#allocation5 + $0x8] sm:$0xff] %vm236, %v233
    %239 = vset.pattern.permute.xlu0 2
    %240 = vperm.xlu0 %239, %v26
    %v241 = vpop.permute.xlu0 %240
    %242 = vset.pattern.permute.xlu0 2
    %243 = vperm.xlu0 %242, %v27
    %v244 = vpop.permute.xlu0 %243
    %vm245 = vcmp.eq.s32.totalorder %v241, %v29
    %vm246 = vcmp.eq.s32.totalorder %v244, %v29
    %v247 = vsel %vm245, 1, 0
    %v248 = vsel %vm246, 1, 0
    %v249 = vcvt.s32.f32 %v247
    %v250 = vcvt.s32.f32 %v248
    %s251 = scalar_lea.vmem [#allocation2], 64
    %v252 = vld [vmem:[%s251] sm:$0xff]
    %v253 = vld [vmem:[%s251 + $0x8] sm:$0xff]
    %v254 = vld [vmem:[%s251 + $0x10] sm:$0xff]
    %v255 = vld [vmem:[%s251 + $0x18] sm:$0xff]
    %v257 = vsel %vm46, %v249, 0
    %v260 = vsel %vm46, %v250, 0
    %262 = vmatprep.subr.mxu0 0.0
    %263 = vmatpush1.msra.mxu0 %v252
    %264 = vmatprep.subr.mxu0 0.0
    %265 = vmatpush1.msra.mxu0 %v253
    %266 = vmatprep.subr.mxu0 0.0
    %267 = vmatpush1.msra.mxu0 %v254
    %268 = vmatprep.subr.mxu0 0.0
    %269 = vmatpush1.msra.mxu0 %v255
    %270 = vmatprep.subr.mxu0 0.0
    %271 = vmatpush1.msra.mxu0 0.0
    %272 = vmatprep.subr.mxu0 0.0
    %273 = vmatpush1.msra.mxu0 0.0
    %274 = vmatprep.subr.mxu0 0.0
    %275 = vmatpush1.msra.mxu0 0.0
    %276 = vmatprep.subr.mxu0 0.0
    %277 = vmatpush1.msra.mxu0 0.0
    %278 = vmatprep.subr.mxu0 0.0
    %279 = vmatpush1.msra.mxu0 0.0
    %280 = vmatprep.subr.mxu0 0.0
    %281 = vmatpush1.msra.mxu0 0.0
    %282 = vmatprep.subr.mxu0 0.0
    %283 = vmatpush1.msra.mxu0 0.0
    %284 = vmatprep.subr.mxu0 0.0
    %285 = vmatpush1.msra.mxu0 0.0
    %286 = vmatprep.subr.mxu0 0.0
    %287 = vmatpush1.msra.mxu0 0.0
    %288 = vmatprep.subr.mxu0 0.0
    %289 = vmatpush1.msra.mxu0 0.0
    %290 = vmatprep.subr.mxu0 0.0
    %291 = vmatpush1.msra.mxu0 0.0
    %292 = vmatprep.subr.mxu0 0.0
    %293 = vmatpush1.msra.mxu0 0.0
    %294 = vmatprep.subr.mxu0 0.0
    %295 = vmatpush1.msra.mxu0 0.0
    %296 = vmatprep.subr.mxu0 0.0
    %297 = vmatpush1.msra.mxu0 0.0
    %298 = vmatprep.subr.mxu0 0.0
    %299 = vmatpush1.msra.mxu0 0.0
    %300 = vmatprep.subr.mxu0 0.0
    %301 = vmatpush1.msra.mxu0 0.0
    %302 = vmatprep.subr.mxu0 0.0
    %303 = vmatpush1.msra.mxu0 0.0
    %304 = vmatprep.subr.mxu0 0.0
    %305 = vmatpush1.msra.mxu0 0.0
    %306 = vmatprep.subr.mxu0 0.0
    %307 = vmatpush1.msra.mxu0 0.0
    %308 = vmatprep.subr.mxu0 0.0
    %309 = vmatpush1.msra.mxu0 0.0
    %310 = vmatprep.subr.mxu0 0.0
    %311 = vmatpush1.msra.mxu0 0.0
    %312 = vmatprep.subr.mxu0 0.0
    %313 = vmatpush1.msra.mxu0 0.0
    %314 = vmatprep.subr.mxu0 0.0
    %315 = vmatpush1.msra.mxu0 0.0
    %316 = vmatprep.subr.mxu0 0.0
    %317 = vmatpush1.msra.mxu0 0.0
    %318 = vmatprep.subr.mxu0 0.0
    %319 = vmatpush1.msra.mxu0 0.0
    %320 = vmatprep.subr.mxu0 0.0
    %321 = vmatpush1.msra.mxu0 0.0
    %322 = vmatprep.subr.mxu0 0.0
    %323 = vmatpush1.msra.mxu0 0.0
    %324 = vmatprep.subr.mxu0 0.0
    %325 = vmatpush1.msra.mxu0 0.0
    %326 = vmatprep.mubr.f32.mxu0 0.0
    %327 = vmatmul.mubr.f32.gmra.mrb[0].mxu0 %v257
    %v328 = vpop.f32.mrb[0].mxu0
    %v329 = vadd.f32 0.0, %v328
    %v330 = vpop.f32.mrb[0].mxu0
    %331 = vmatprep.mubr.f32.mxu0 0.0
    %332 = vmatmul.mubr.f32.gmra.mrb[0].mxu0 %v260
    %v333 = vpop.f32.mrb[0].mxu0
    %v334 = vadd.f32 0.0, %v333
    %v335 = vpop.f32.mrb[0].mxu0
    %336 = vdwg.mxu0
    %339 = vrot.lane.b32.xlu0 %v329, 64
    %v340 = vpop.permute.xlu0 %339
    %341 = vrot.lane.b32.xlu0 %v334, 64
    %v342 = vpop.permute.xlu0 %341
    %vm345 = vcmask 785920
    %346 = vst.msk [vmem:[#allocation5] sm:$0xff] %vm345, %v340
    %347 = vst.msk [vmem:[#allocation5 + $0x8] sm:$0xff] %vm345, %v342
    %348 = vset.pattern.permute.xlu0 3
    %349 = vperm.xlu0 %348, %v26
    %v350 = vpop.permute.xlu0 %349
    %351 = vset.pattern.permute.xlu0 3
    %352 = vperm.xlu0 %351, %v27
    %v353 = vpop.permute.xlu0 %352
    %vm354 = vcmp.eq.s32.totalorder %v350, %v29
    %vm355 = vcmp.eq.s32.totalorder %v353, %v29
    %v356 = vsel %vm354, 1, 0
    %v357 = vsel %vm355, 1, 0
    %v358 = vcvt.s32.f32 %v356
    %v359 = vcvt.s32.f32 %v357
    %s360 = scalar_lea.vmem [#allocation2], 96
    %v361 = vld [vmem:[%s360] sm:$0xff]
    %v362 = vld [vmem:[%s360 + $0x8] sm:$0xff]
    %v363 = vld [vmem:[%s360 + $0x10] sm:$0xff]
    %v364 = vld [vmem:[%s360 + $0x18] sm:$0xff]
    %v366 = vsel %vm46, %v358, 0
    %v369 = vsel %vm46, %v359, 0
    %371 = vmatprep.subr.mxu0 0.0
    %372 = vmatpush1.msra.mxu0 %v361
    %373 = vmatprep.subr.mxu0 0.0
    %374 = vmatpush1.msra.mxu0 %v362
    %375 = vmatprep.subr.mxu0 0.0
    %376 = vmatpush1.msra.mxu0 %v363
    %377 = vmatprep.subr.mxu0 0.0
    %378 = vmatpush1.msra.mxu0 %v364
    %379 = vmatprep.subr.mxu0 0.0
    %380 = vmatpush1.msra.mxu0 0.0
    %381 = vmatprep.subr.mxu0 0.0
    %382 = vmatpush1.msra.mxu0 0.0
    %383 = vmatprep.subr.mxu0 0.0
    %384 = vmatpush1.msra.mxu0 0.0
    %385 = vmatprep.subr.mxu0 0.0
    %386 = vmatpush1.msra.mxu0 0.0
    %387 = vmatprep.subr.mxu0 0.0
    %388 = vmatpush1.msra.mxu0 0.0
    %389 = vmatprep.subr.mxu0 0.0
    %390 = vmatpush1.msra.mxu0 0.0
    %391 = vmatprep.subr.mxu0 0.0
    %392 = vmatpush1.msra.mxu0 0.0
    %393 = vmatprep.subr.mxu0 0.0
    %394 = vmatpush1.msra.mxu0 0.0
    %395 = vmatprep.subr.mxu0 0.0
    %396 = vmatpush1.msra.mxu0 0.0
    %397 = vmatprep.subr.mxu0 0.0
    %398 = vmatpush1.msra.mxu0 0.0
    %399 = vmatprep.subr.mxu0 0.0
    %400 = vmatpush1.msra.mxu0 0.0
    %401 = vmatprep.subr.mxu0 0.0
    %402 = vmatpush1.msra.mxu0 0.0
    %403 = vmatprep.subr.mxu0 0.0
    %404 = vmatpush1.msra.mxu0 0.0
    %405 = vmatprep.subr.mxu0 0.0
    %406 = vmatpush1.msra.mxu0 0.0
    %407 = vmatprep.subr.mxu0 0.0
    %408 = vmatpush1.msra.mxu0 0.0
    %409 = vmatprep.subr.mxu0 0.0
    %410 = vmatpush1.msra.mxu0 0.0
    %411 = vmatprep.subr.mxu0 0.0
    %412 = vmatpush1.msra.mxu0 0.0
    %413 = vmatprep.subr.mxu0 0.0
    %414 = vmatpush1.msra.mxu0 0.0
    %415 = vmatprep.subr.mxu0 0.0
    %416 = vmatpush1.msra.mxu0 0.0
    %417 = vmatprep.subr.mxu0 0.0
    %418 = vmatpush1.msra.mxu0 0.0
    %419 = vmatprep.subr.mxu0 0.0
    %420 = vmatpush1.msra.mxu0 0.0
    %421 = vmatprep.subr.mxu0 0.0
    %422 = vmatpush1.msra.mxu0 0.0
    %423 = vmatprep.subr.mxu0 0.0
    %424 = vmatpush1.msra.mxu0 0.0
    %425 = vmatprep.subr.mxu0 0.0
    %426 = vmatpush1.msra.mxu0 0.0
    %427 = vmatprep.subr.mxu0 0.0
    %428 = vmatpush1.msra.mxu0 0.0
    %429 = vmatprep.subr.mxu0 0.0
    %430 = vmatpush1.msra.mxu0 0.0
    %431 = vmatprep.subr.mxu0 0.0
    %432 = vmatpush1.msra.mxu0 0.0
    %433 = vmatprep.subr.mxu0 0.0
    %434 = vmatpush1.msra.mxu0 0.0
    %435 = vmatprep.mubr.f32.mxu0 0.0
    %436 = vmatmul.mubr.f32.gmra.mrb[0].mxu0 %v366
    %v437 = vpop.f32.mrb[0].mxu0
    %v438 = vadd.f32 0.0, %v437
    %v439 = vpop.f32.mrb[0].mxu0
    %440 = vmatprep.mubr.f32.mxu0 0.0
    %441 = vmatmul.mubr.f32.gmra.mrb[0].mxu0 %v369
    %v442 = vpop.f32.mrb[0].mxu0
    %v443 = vadd.f32 0.0, %v442
    %v444 = vpop.f32.mrb[0].mxu0
    %445 = vdwg.mxu0
    %448 = vrot.lane.b32.xlu0 %v438, 96
    %v449 = vpop.permute.xlu0 %448
    %450 = vrot.lane.b32.xlu0 %v443, 96
    %v451 = vpop.permute.xlu0 %450
    %vm454 = vcmask 1048320
    %455 = vst.msk [vmem:[#allocation5] sm:$0xff] %vm454, %v449
    %456 = vst.msk [vmem:[#allocation5 + $0x8] sm:$0xff] %vm454, %v451
    // Predicated region
    $region14: #{tpu_custom_call.1} parent=1 // pred_check
      _
    $region15: #{tpu_custom_call.1} parent=1 // pred_check_branch
      %458 = sbr.rel (0) target = $region17
    $region16: #{tpu_custom_call.1} parent=1 // pred_region
      %s460 = ssub.s32 256, 256
      %461 = vsyncadd [#allocation4], %s460
      %s462 = sshll.u32 [#allocation5], 4
      %s463 = int_to_ptr.vmem [resolvable:$true] %s462
      %468 = dma.vmem_to_hbm [thread:$0]  %s463, 256, %s2, [#allocation4], 128, 128, 8
    $region17: #{tpu_custom_call.1} parent=1 // pred_fallthru
      _
    // Predicated region
    $region18: #{tpu_custom_call.1} parent=1 // pred_check
      _
    $region19: #{tpu_custom_call.1} parent=1 // pred_check_branch
      %470 = sbr.rel (0) target = $region21
    $region20: #{tpu_custom_call.1} parent=1 // pred_region
      %471 = dma.done [#allocation4], 256
    $region21: #{tpu_custom_call.1} parent=1 // pred_fallthru
      _
    %472 = vsyncpa [#allocation3], 1
    %473 = vsyncpa [#allocation4], 1

</llo_original>
